<compile_context>
chip_gen: v7x
topology: tpu7x:2x2x1
jax: 0.10.0
libtpu: 0.0.40
codegen_flags: <defaults>
</compile_context>

<pallas_src>
import functools
import math

import jax
import jax.numpy as jnp
from jax.experimental import pallas as pl
from jax.experimental.pallas import tpu as pltpu

MAX_TB = 256  # max batch tile for the attention kernel


def _round_up(x, m):
    return ((x + m - 1) // m) * m


# --------------------------------------------------------------------------- #
# Pallas kernel: multi-head temporal attention (query = node||time, key/value =
# neigh||edge_time, key-padding mask) + out-proj + MergeLayer (2-layer MLP).
# Tiled over batch; all concats are realized as split/fused weights.
# --------------------------------------------------------------------------- #
def _attn_merge_kernel(nodef_ref, ntime_ref, neigh_ref, etime_ref, mask_ref,
                       wq_n_ref, wq_t_ref, bq_ref,
                       wkv_n_ref, wkv_t_ref, bkv_ref,
                       wo_ref, bo_ref,
                       w1a_ref, w1b_ref, b1_ref,
                       w2_ref, b2_ref,
                       out_ref, *, n_heads):
    nodef = nodef_ref[...]          # [TB, D]    bf16
    ntime = ntime_ref[...]          # [TB, D]    bf16
    neigh = neigh_ref[...]          # [TB, N, D] bf16
    etime = etime_ref[...]          # [TB, N, D] bf16
    maskf = mask_ref[...]           # [TB, N]    f32 (1.0 == padded neighbor)

    TB, N, D = neigh.shape
    E = 2 * D
    dh = E // n_heads

    # -- query projection: concat(node, time) @ wq via row-split weights.
    #    (1/sqrt(dh) scale already folded into wq/bq by the wrapper.)
    q = (jnp.dot(nodef, wq_n_ref[...], preferred_element_type=jnp.float32)
         + jnp.dot(ntime, wq_t_ref[...], preferred_element_type=jnp.float32)
         + bq_ref[...])                                      # [TB, E] f32

    # -- fused K|V projection (one lane-dense 2E-wide MXU result per input)
    neigh2 = neigh.reshape(TB * N, D)
    etime2 = etime.reshape(TB * N, D)
    kv = (jnp.dot(neigh2, wkv_n_ref[...], preferred_element_type=jnp.float32)
          + jnp.dot(etime2, wkv_t_ref[...], preferred_element_type=jnp.float32)
          + bkv_ref[...])                                    # [TB*N, 2E] f32
    kv = kv.reshape(TB, N, 2 * E)

    neg = maskf * (-1e9)            # additive key-padding mask

    # -- multi-head attention core. N is tiny (few neighbors) so scores/context
    #    are computed with VPU multiplies + reductions; kept in f32 (v5e-safe).
    attn = jnp.zeros((TB, E), jnp.float32)
    for h in range(n_heads):                                 # static unroll
        qh = q[:, h * dh:(h + 1) * dh]                       # [TB, dh]
        kh = kv[:, :, h * dh:(h + 1) * dh]                   # [TB, N, dh]
        vh = kv[:, :, E + h * dh:E + (h + 1) * dh]           # [TB, N, dh]
        s = jnp.sum(qh[:, None, :] * kh, axis=-1) + neg      # [TB, N]
        s = s - jnp.max(s, axis=-1, keepdims=True)
        p = jnp.exp(s)
        p = p * pl.reciprocal(jnp.sum(p, axis=-1, keepdims=True), approx=True)
        ctx = jnp.sum(p[:, :, None] * vh, axis=1)            # [TB, dh]
        # out-proj accumulation replaces the lane-axis concat over heads
        attn = attn + jnp.dot(ctx.astype(jnp.bfloat16),
                              wo_ref[h * dh:(h + 1) * dh, :],
                              preferred_element_type=jnp.float32)
    attn = attn + bo_ref[...]

    # rows whose neighbourhood is fully padded get a zero attention output
    invalid = jnp.sum(1.0 - maskf, axis=-1, keepdims=True) == 0.0
    attn = jnp.where(invalid, 0.0, attn)

    # -- MergeLayer: fc2(relu(fc1(concat(attn, node)))) with split w1 rows
    h1 = jnp.maximum(
        jnp.dot(attn.astype(jnp.bfloat16), w1a_ref[...],
                preferred_element_type=jnp.float32)
        + jnp.dot(nodef, w1b_ref[...], preferred_element_type=jnp.float32)
        + b1_ref[...], 0.0)
    out_ref[...] = (jnp.dot(h1.astype(jnp.bfloat16), w2_ref[...],
                            preferred_element_type=jnp.float32) + b2_ref[...])


def temporal_attention(node_feat, node_time_emb, neigh_emb, edge_time_emb, mask, lp):
    """One TemporalAttentionLayer forward via pallas_call."""
    B, N, D = neigh_emb.shape
    E = 2 * D
    n_heads = lp['n_heads']
    dh = E // n_heads
    scale = 1.0 / math.sqrt(dh)

    # ---- weight prep (tiny trace-time ops): fold scale, fuse K|V, split rows.
    wq = (lp['wq'] * scale).astype(jnp.bfloat16)
    wq_n, wq_t = wq[:D], wq[D:]                                       # [D, E] each
    bq = (lp['bq'] * scale).astype(jnp.float32)                       # [1, E]
    wkv = jnp.concatenate([lp['wk'], lp['wv']], axis=1).astype(jnp.bfloat16)  # [E, 2E]
    wkv_n, wkv_t = wkv[:D], wkv[D:]                                   # [D, 2E] each
    bkv = jnp.concatenate([lp['bk'], lp['bv']], axis=1).astype(jnp.float32)   # [1, 2E]
    wo = lp['wo'].astype(jnp.bfloat16)                                # [E, E]
    bo = lp['bo'].astype(jnp.float32)
    w1a = lp['w1'][:E].astype(jnp.bfloat16)                           # [E, Dout]
    w1b = lp['w1'][E:].astype(jnp.bfloat16)                           # [D, Dout]
    b1 = lp['b1'].astype(jnp.float32)
    w2 = lp['w2'].astype(jnp.bfloat16)                                # [Dout, Dout]
    b2 = lp['b2'].astype(jnp.float32)

    # ---- activations in bf16 (halves HBM/VMEM traffic); mask stays f32.
    nodef = node_feat.astype(jnp.bfloat16)
    ntime = node_time_emb.astype(jnp.bfloat16)
    neigh = neigh_emb.astype(jnp.bfloat16)
    etime = edge_time_emb.astype(jnp.bfloat16)
    maskf = mask.astype(jnp.float32)

    tb = min(MAX_TB, _round_up(B, 8))     # large tiles for real batches, no waste for tiny ones
    B_pad = _round_up(B, tb)
    if B_pad != B:
        pad = B_pad - B
        nodef = jnp.pad(nodef, ((0, pad), (0, 0)))
        ntime = jnp.pad(ntime, ((0, pad), (0, 0)))
        neigh = jnp.pad(neigh, ((0, pad), (0, 0), (0, 0)))
        etime = jnp.pad(etime, ((0, pad), (0, 0), (0, 0)))
        maskf = jnp.pad(maskf, ((0, pad), (0, 0)), constant_values=1.0)

    Dout = lp['w2'].shape[1]
    kernel = functools.partial(_attn_merge_kernel, n_heads=n_heads)

    weight_args = [wq_n, wq_t, bq, wkv_n, wkv_t, bkv, wo, bo, w1a, w1b, b1, w2, b2]
    weight_specs = [pl.BlockSpec(w.shape, lambda i: (0, 0)) for w in weight_args]

    out = pl.pallas_call(
        kernel,
        out_shape=jax.ShapeDtypeStruct((B_pad, Dout), jnp.float32),
        grid_spec=pltpu.PrefetchScalarGridSpec(
            num_scalar_prefetch=0,
            grid=(B_pad // tb,),
            in_specs=[pl.BlockSpec((tb, D), lambda i: (i, 0)),
                      pl.BlockSpec((tb, D), lambda i: (i, 0)),
                      pl.BlockSpec((tb, N, D), lambda i: (i, 0, 0)),
                      pl.BlockSpec((tb, N, D), lambda i: (i, 0, 0)),
                      pl.BlockSpec((tb, N), lambda i: (i, 0))] + weight_specs,
            out_specs=pl.BlockSpec((tb, Dout), lambda i: (i, 0)),
        ),
        compiler_params=pltpu.CompilerParams(dimension_semantics=("parallel",)),
    )(nodef, ntime, neigh, etime, maskf, *weight_args)
    return out[:B]


# --------------------------------------------------------------------------- #
# PTGCN glue (embedding lookups, neighbor gathers, recursion over layers)
# --------------------------------------------------------------------------- #
def time_encoder(t):
    # TODO(synk): PTGCN's exact time_encoder is not provided; use log2
    # bucketization of the (clipped) time delta into the 20 time-embedding slots.
    t = jnp.maximum(t, 0).astype(jnp.float32)
    return jnp.clip(jnp.floor(jnp.log2(t + 1.0)).astype(jnp.int32), 0, 19)


def compute_embedding(params, tables, n_neighbors, nodes, edges, timestamps,
                      n_layers, nodetype):
    node_time_emb = params['time_emb'][time_encoder(jnp.zeros_like(timestamps))]
    if nodetype == 'user':
        node_features = params['user_emb'][nodes]
    else:
        node_features = params['item_emb'][nodes]
    if n_layers == 0:
        return node_features

    n_neighbor = n_neighbors[n_layers - 1]
    tab = tables['user'] if nodetype == 'user' else tables['item']
    adj = tab['neig'][edges, -n_neighbor:]     # [B, n_neighbor]
    adge = tab['edge'][edges, -n_neighbor:]
    times = tab['time'][edges, -n_neighbor:]
    mask = tab['mask'][edges, -n_neighbor:]
    edge_deltas = timestamps[:, None] - times

    other = 'item' if nodetype == 'user' else 'user'
    neigh = compute_embedding(params, tables, n_neighbors,
                              adj.reshape(-1), adge.reshape(-1), times.reshape(-1),
                              n_layers - 1, other)
    neigh = neigh.reshape(nodes.shape[0], n_neighbor, -1)
    edge_time_emb = params['time_emb'][time_encoder(edge_deltas.reshape(-1))]
    edge_time_emb = edge_time_emb.reshape(nodes.shape[0], n_neighbor, -1)

    return temporal_attention(node_features, node_time_emb, neigh, edge_time_emb,
                              mask, params['attn'][n_layers - 1])


def ptgcn_forward(params, tables, n_neighbors, nodes, edges, timestamps,
                  n_layers, nodetype='user'):
    return compute_embedding(params, tables, n_neighbors, nodes, edges, timestamps,
                             n_layers, nodetype)


def init_params(key, num_users, num_items, D, n_layers, n_heads):
    keys = jax.random.split(key, 3 + n_layers)
    params = {
        'user_emb': 0.1 * jax.random.normal(keys[0], (num_users, D), jnp.float32),
        'item_emb': 0.1 * jax.random.normal(keys[1], (num_items, D), jnp.float32),
        'time_emb': 0.1 * jax.random.normal(keys[2], (20, D), jnp.float32),
        'attn': [],
    }
    E = 2 * D
    for l in range(n_layers):
        k = jax.random.split(keys[3 + l], 6)

        def lin(kk, fan_in, shape):
            return jax.random.normal(kk, shape, jnp.float32) / math.sqrt(fan_in)

        lp = {
            'wq': lin(k[0], E, (E, E)), 'bq': jnp.zeros((1, E), jnp.float32),
            'wk': lin(k[1], E, (E, E)), 'bk': jnp.zeros((1, E), jnp.float32),
            'wv': lin(k[2], E, (E, E)), 'bv': jnp.zeros((1, E), jnp.float32),
            'wo': lin(k[3], E, (E, E)), 'bo': jnp.zeros((1, E), jnp.float32),
            'w1': lin(k[4], E + D, (E + D, D)), 'b1': jnp.zeros((1, D), jnp.float32),
            'w2': lin(k[5], D, (D, D)), 'b2': jnp.zeros((1, D), jnp.float32),
            'n_heads': n_heads,
        }
        params['attn'].append(lp)
    return params


if __name__ == "__main__":
    key = jax.random.PRNGKey(0)
    num_users, num_items, num_edges = 30, 40, 60
    D = 32                   # embedding_dimension == n_node_features == n_time_features
    n_layers = 2
    n_neighbors = (4, 4)
    n_heads = 2
    B = 8
    MAX_NEIG = 50

    k_par, k_tab, k_in = jax.random.split(key, 3)
    params = init_params(k_par, num_users, num_items, D, n_layers, n_heads)

    tk = jax.random.split(k_tab, 8)
    tables = {
        'user': {  # a user's temporal neighbors are items
            'neig': jax.random.randint(tk[0], (num_edges, MAX_NEIG), 0, num_items),
            'edge': jax.random.randint(tk[1], (num_edges, MAX_NEIG), 0, num_edges),
            'time': jax.random.randint(tk[2], (num_edges, MAX_NEIG), 0, 1000),
            'mask': jax.random.bernoulli(tk[3], 0.2, (num_edges, MAX_NEIG)),  # True = padded
        },
        'item': {  # an item's temporal neighbors are users
            'neig': jax.random.randint(tk[4], (num_edges, MAX_NEIG), 0, num_users),
            'edge': jax.random.randint(tk[5], (num_edges, MAX_NEIG), 0, num_edges),
            'time': jax.random.randint(tk[6], (num_edges, MAX_NEIG), 0, 1000),
            'mask': jax.random.bernoulli(tk[7], 0.2, (num_edges, MAX_NEIG)),
        },
    }

    ik = jax.random.split(k_in, 3)
    nodes = jax.random.randint(ik[0], (B,), 0, num_users)
    edges = jax.random.randint(ik[1], (B,), 0, num_edges)
    timestamps = jax.random.randint(ik[2], (B,), 1, 1000)

    out = ptgcn_forward(params, tables, n_neighbors, nodes, edges, timestamps,
                        n_layers, nodetype='user')
    out = jax.block_until_ready(out)
    assert out.shape == (B, D), out.shape
    assert bool(jnp.all(jnp.isfinite(out)))
    print("KERNEL_OK")
</pallas_src>

<mosaic_0001>
module attributes {stable_mosaic.version = 11 : i64} {
  func.func @_attn_merge_kernel(%arg0: i32, %arg1: memref<32x32xbf16, #tpu.memory_space<vmem>>, %arg2: memref<32x32xbf16, #tpu.memory_space<vmem>>, %arg3: memref<32x4x32xbf16, #tpu.memory_space<vmem>>, %arg4: memref<32x4x32xbf16, #tpu.memory_space<vmem>>, %arg5: memref<32x4xf32, #tpu.memory_space<vmem>>, %arg6: memref<32x64xbf16, #tpu.memory_space<vmem>>, %arg7: memref<32x64xbf16, #tpu.memory_space<vmem>>, %arg8: memref<1x64xf32, #tpu.memory_space<vmem>>, %arg9: memref<32x128xbf16, #tpu.memory_space<vmem>>, %arg10: memref<32x128xbf16, #tpu.memory_space<vmem>>, %arg11: memref<1x128xf32, #tpu.memory_space<vmem>>, %arg12: memref<64x64xbf16, #tpu.memory_space<vmem>>, %arg13: memref<1x64xf32, #tpu.memory_space<vmem>>, %arg14: memref<64x32xbf16, #tpu.memory_space<vmem>>, %arg15: memref<32x32xbf16, #tpu.memory_space<vmem>>, %arg16: memref<1x32xf32, #tpu.memory_space<vmem>>, %arg17: memref<32x32xbf16, #tpu.memory_space<vmem>>, %arg18: memref<1x32xf32, #tpu.memory_space<vmem>>, %arg19: memref<32x32xf32, #tpu.memory_space<vmem>>) attributes {dimension_semantics = [#tpu.dimension_semantics<parallel>], iteration_bounds = array<i64: 1>, scalar_prefetch = 0 : i64, scratch_operands = 0 : i64, tpu.core_type = #tpu.core_type<tc>, window_params = [{transform_indices = @transform_0, window_bounds = array<i64: 32, 32>}, {transform_indices = @transform_1, window_bounds = array<i64: 32, 32>}, {transform_indices = @transform_2, window_bounds = array<i64: 32, 4, 32>}, {transform_indices = @transform_3, window_bounds = array<i64: 32, 4, 32>}, {transform_indices = @transform_4, window_bounds = array<i64: 32, 4>}, {pipeline_mode = #tpu.pipeline_mode<synchronous>, transform_indices = @transform_5, window_bounds = array<i64: 32, 64>}, {pipeline_mode = #tpu.pipeline_mode<synchronous>, transform_indices = @transform_6, window_bounds = array<i64: 32, 64>}, {pipeline_mode = #tpu.pipeline_mode<synchronous>, transform_indices = @transform_7, window_bounds = array<i64: 1, 64>}, {pipeline_mode = #tpu.pipeline_mode<synchronous>, transform_indices = @transform_8, window_bounds = array<i64: 32, 128>}, {pipeline_mode = #tpu.pipeline_mode<synchronous>, transform_indices = @transform_9, window_bounds = array<i64: 32, 128>}, {pipeline_mode = #tpu.pipeline_mode<synchronous>, transform_indices = @transform_10, window_bounds = array<i64: 1, 128>}, {pipeline_mode = #tpu.pipeline_mode<synchronous>, transform_indices = @transform_11, window_bounds = array<i64: 64, 64>}, {pipeline_mode = #tpu.pipeline_mode<synchronous>, transform_indices = @transform_12, window_bounds = array<i64: 1, 64>}, {pipeline_mode = #tpu.pipeline_mode<synchronous>, transform_indices = @transform_13, window_bounds = array<i64: 64, 32>}, {pipeline_mode = #tpu.pipeline_mode<synchronous>, transform_indices = @transform_14, window_bounds = array<i64: 32, 32>}, {pipeline_mode = #tpu.pipeline_mode<synchronous>, transform_indices = @transform_15, window_bounds = array<i64: 1, 32>}, {pipeline_mode = #tpu.pipeline_mode<synchronous>, transform_indices = @transform_16, window_bounds = array<i64: 32, 32>}, {pipeline_mode = #tpu.pipeline_mode<synchronous>, transform_indices = @transform_17, window_bounds = array<i64: 1, 32>}, {transform_indices = @transform_18, window_bounds = array<i64: 32, 32>}]} {
    %c0 = arith.constant 0 : index
    %c0_0 = arith.constant 0 : index
    %0 = vector.load %arg1[%c0, %c0_0] : memref<32x32xbf16, #tpu.memory_space<vmem>>, vector<32x32xbf16>
    %c0_1 = arith.constant 0 : index
    %c0_2 = arith.constant 0 : index
    %1 = vector.load %arg2[%c0_1, %c0_2] : memref<32x32xbf16, #tpu.memory_space<vmem>>, vector<32x32xbf16>
    %c0_3 = arith.constant 0 : index
    %c0_4 = arith.constant 0 : index
    %c0_5 = arith.constant 0 : index
    %2 = vector.load %arg3[%c0_3, %c0_4, %c0_5] : memref<32x4x32xbf16, #tpu.memory_space<vmem>>, vector<32x4x32xbf16>
    %c0_6 = arith.constant 0 : index
    %c0_7 = arith.constant 0 : index
    %c0_8 = arith.constant 0 : index
    %3 = vector.load %arg4[%c0_6, %c0_7, %c0_8] : memref<32x4x32xbf16, #tpu.memory_space<vmem>>, vector<32x4x32xbf16>
    %c0_9 = arith.constant 0 : index
    %c0_10 = arith.constant 0 : index
    %4 = vector.load %arg5[%c0_9, %c0_10] : memref<32x4xf32, #tpu.memory_space<vmem>>, vector<32x4xf32>
    %c0_11 = arith.constant 0 : index
    %c0_12 = arith.constant 0 : index
    %5 = vector.load %arg6[%c0_11, %c0_12] : memref<32x64xbf16, #tpu.memory_space<vmem>>, vector<32x64xbf16>
    %cst = arith.constant dense<0.000000e+00> : vector<32x64xf32>
    %6 = tpu.matmul %0, %5, %cst {dimension_numbers = #tpu.dot_dimension_numbers<[1], [0], [0], [1], [0, 0, 1, 1], [], []>} : vector<32x32xbf16>, vector<32x64xbf16>, vector<32x64xf32> -> vector<32x64xf32>
    %c0_13 = arith.constant 0 : index
    %c0_14 = arith.constant 0 : index
    %7 = vector.load %arg7[%c0_13, %c0_14] : memref<32x64xbf16, #tpu.memory_space<vmem>>, vector<32x64xbf16>
    %cst_15 = arith.constant dense<0.000000e+00> : vector<32x64xf32>
    %8 = tpu.matmul %1, %7, %cst_15 {dimension_numbers = #tpu.dot_dimension_numbers<[1], [0], [0], [1], [0, 0, 1, 1], [], []>} : vector<32x32xbf16>, vector<32x64xbf16>, vector<32x64xf32> -> vector<32x64xf32>
    %9 = arith.addf %6, %8 : vector<32x64xf32>
    %c0_16 = arith.constant 0 : index
    %c0_17 = arith.constant 0 : index
    %10 = vector.load %arg8[%c0_16, %c0_17] : memref<1x64xf32, #tpu.memory_space<vmem>>, vector<1x64xf32>
    %11 = vector.broadcast %10 : vector<1x64xf32> to vector<32x64xf32>
    %12 = arith.addf %9, %11 : vector<32x64xf32>
    %13 = vector.shape_cast %2 : vector<32x4x32xbf16> to vector<128x32xbf16>
    %14 = vector.shape_cast %3 : vector<32x4x32xbf16> to vector<128x32xbf16>
    %c0_18 = arith.constant 0 : index
    %c0_19 = arith.constant 0 : index
    %15 = vector.load %arg9[%c0_18, %c0_19] : memref<32x128xbf16, #tpu.memory_space<vmem>>, vector<32x128xbf16>
    %cst_20 = arith.constant dense<0.000000e+00> : vector<128x128xf32>
    %16 = tpu.matmul %13, %15, %cst_20 {dimension_numbers = #tpu.dot_dimension_numbers<[1], [0], [0], [1], [0, 0, 1, 1], [], []>} : vector<128x32xbf16>, vector<32x128xbf16>, vector<128x128xf32> -> vector<128x128xf32>
    %c0_21 = arith.constant 0 : index
    %c0_22 = arith.constant 0 : index
    %17 = vector.load %arg10[%c0_21, %c0_22] : memref<32x128xbf16, #tpu.memory_space<vmem>>, vector<32x128xbf16>
    %cst_23 = arith.constant dense<0.000000e+00> : vector<128x128xf32>
    %18 = tpu.matmul %14, %17, %cst_23 {dimension_numbers = #tpu.dot_dimension_numbers<[1], [0], [0], [1], [0, 0, 1, 1], [], []>} : vector<128x32xbf16>, vector<32x128xbf16>, vector<128x128xf32> -> vector<128x128xf32>
    %19 = arith.addf %16, %18 : vector<128x128xf32>
    %c0_24 = arith.constant 0 : index
    %c0_25 = arith.constant 0 : index
    %20 = vector.load %arg11[%c0_24, %c0_25] : memref<1x128xf32, #tpu.memory_space<vmem>>, vector<1x128xf32>
    %21 = vector.broadcast %20 : vector<1x128xf32> to vector<128x128xf32>
    %22 = arith.addf %19, %21 : vector<128x128xf32>
    %23 = vector.shape_cast %22 : vector<128x128xf32> to vector<32x4x128xf32>
    %cst_26 = arith.constant -1.000000e+09 : f32
    %24 = vector.broadcast %cst_26 : f32 to vector<32x4xf32>
    %25 = arith.mulf %4, %24 : vector<32x4xf32>
    %cst_27 = arith.constant 0.000000e+00 : f32
    %26 = vector.broadcast %cst_27 : f32 to vector<32x64xf32>
    %27 = vector.extract_strided_slice %12 {offsets = [0, 0], sizes = [32, 32], strides = [1, 1]} : vector<32x64xf32> to vector<32x32xf32>
    %28 = vector.extract_strided_slice %23 {offsets = [0, 0, 0], sizes = [32, 4, 32], strides = [1, 1, 1]} : vector<32x4x128xf32> to vector<32x4x32xf32>
    %29 = vector.extract_strided_slice %23 {offsets = [0, 0, 64], sizes = [32, 4, 32], strides = [1, 1, 1]} : vector<32x4x128xf32> to vector<32x4x32xf32>
    %30 = vector.shape_cast %27 : vector<32x32xf32> to vector<32x1x32xf32>
    %31 = vector.broadcast %30 : vector<32x1x32xf32> to vector<32x4x32xf32>
    %32 = arith.mulf %31, %28 : vector<32x4x32xf32>
    %cst_28 = arith.constant dense<0.000000e+00> : vector<32x4xf32>
    %33 = vector.multi_reduction <add>, %32, %cst_28 [2] : vector<32x4x32xf32> to vector<32x4xf32>
    %34 = arith.addf %33, %25 : vector<32x4xf32>
    %cst_29 = arith.constant dense<0xFF800000> : vector<32xf32>
    %35 = vector.multi_reduction <maximumf>, %34, %cst_29 [1] : vector<32x4xf32> to vector<32xf32>
    %36 = vector.shape_cast %35 : vector<32xf32> to vector<32x1xf32>
    %37 = vector.broadcast %36 : vector<32x1xf32> to vector<32x4xf32>
    %38 = arith.subf %34, %37 : vector<32x4xf32>
    %39 = math.exp %38 : vector<32x4xf32>
    %cst_30 = arith.constant dense<0.000000e+00> : vector<32xf32>
    %40 = vector.multi_reduction <add>, %39, %cst_30 [1] : vector<32x4xf32> to vector<32xf32>
    %41 = vector.shape_cast %40 : vector<32xf32> to vector<32x1xf32>
    %42 = tpu.reciprocal %41 {approx = true} : vector<32x1xf32> -> vector<32x1xf32>
    %43 = vector.broadcast %42 : vector<32x1xf32> to vector<32x4xf32>
    %44 = arith.mulf %39, %43 : vector<32x4xf32>
    %45 = vector.shape_cast %44 : vector<32x4xf32> to vector<32x4x1xf32>
    %46 = vector.broadcast %45 : vector<32x4x1xf32> to vector<32x4x32xf32>
    %47 = arith.mulf %46, %29 : vector<32x4x32xf32>
    %cst_31 = arith.constant dense<0.000000e+00> : vector<32x32xf32>
    %48 = vector.multi_reduction <add>, %47, %cst_31 [1] : vector<32x4x32xf32> to vector<32x32xf32>
    %49 = arith.truncf %48 : vector<32x32xf32> to vector<32x32xbf16>
    %c0_32 = arith.constant 0 : index
    %c0_33 = arith.constant 0 : index
    %50 = vector.load %arg12[%c0_32, %c0_33] : memref<64x64xbf16, #tpu.memory_space<vmem>>, vector<32x64xbf16>
    %cst_34 = arith.constant dense<0.000000e+00> : vector<32x64xf32>
    %51 = tpu.matmul %49, %50, %cst_34 {dimension_numbers = #tpu.dot_dimension_numbers<[1], [0], [0], [1], [0, 0, 1, 1], [], []>} : vector<32x32xbf16>, vector<32x64xbf16>, vector<32x64xf32> -> vector<32x64xf32>
    %52 = arith.addf %26, %51 : vector<32x64xf32>
    %53 = vector.extract_strided_slice %12 {offsets = [0, 32], sizes = [32, 32], strides = [1, 1]} : vector<32x64xf32> to vector<32x32xf32>
    %54 = vector.extract_strided_slice %23 {offsets = [0, 0, 32], sizes = [32, 4, 32], strides = [1, 1, 1]} : vector<32x4x128xf32> to vector<32x4x32xf32>
    %55 = vector.extract_strided_slice %23 {offsets = [0, 0, 96], sizes = [32, 4, 32], strides = [1, 1, 1]} : vector<32x4x128xf32> to vector<32x4x32xf32>
    %56 = vector.shape_cast %53 : vector<32x32xf32> to vector<32x1x32xf32>
    %57 = vector.broadcast %56 : vector<32x1x32xf32> to vector<32x4x32xf32>
    %58 = arith.mulf %57, %54 : vector<32x4x32xf32>
    %cst_35 = arith.constant dense<0.000000e+00> : vector<32x4xf32>
    %59 = vector.multi_reduction <add>, %58, %cst_35 [2] : vector<32x4x32xf32> to vector<32x4xf32>
    %60 = arith.addf %59, %25 : vector<32x4xf32>
    %cst_36 = arith.constant dense<0xFF800000> : vector<32xf32>
    %61 = vector.multi_reduction <maximumf>, %60, %cst_36 [1] : vector<32x4xf32> to vector<32xf32>
    %62 = vector.shape_cast %61 : vector<32xf32> to vector<32x1xf32>
    %63 = vector.broadcast %62 : vector<32x1xf32> to vector<32x4xf32>
    %64 = arith.subf %60, %63 : vector<32x4xf32>
    %65 = math.exp %64 : vector<32x4xf32>
    %cst_37 = arith.constant dense<0.000000e+00> : vector<32xf32>
    %66 = vector.multi_reduction <add>, %65, %cst_37 [1] : vector<32x4xf32> to vector<32xf32>
    %67 = vector.shape_cast %66 : vector<32xf32> to vector<32x1xf32>
    %68 = tpu.reciprocal %67 {approx = true} : vector<32x1xf32> -> vector<32x1xf32>
    %69 = vector.broadcast %68 : vector<32x1xf32> to vector<32x4xf32>
    %70 = arith.mulf %65, %69 : vector<32x4xf32>
    %71 = vector.shape_cast %70 : vector<32x4xf32> to vector<32x4x1xf32>
    %72 = vector.broadcast %71 : vector<32x4x1xf32> to vector<32x4x32xf32>
    %73 = arith.mulf %72, %55 : vector<32x4x32xf32>
    %cst_38 = arith.constant dense<0.000000e+00> : vector<32x32xf32>
    %74 = vector.multi_reduction <add>, %73, %cst_38 [1] : vector<32x4x32xf32> to vector<32x32xf32>
    %75 = arith.truncf %74 : vector<32x32xf32> to vector<32x32xbf16>
    %c32 = arith.constant 32 : index
    %c0_39 = arith.constant 0 : index
    %76 = vector.load %arg12[%c32, %c0_39] : memref<64x64xbf16, #tpu.memory_space<vmem>>, vector<32x64xbf16>
    %cst_40 = arith.constant dense<0.000000e+00> : vector<32x64xf32>
    %77 = tpu.matmul %75, %76, %cst_40 {dimension_numbers = #tpu.dot_dimension_numbers<[1], [0], [0], [1], [0, 0, 1, 1], [], []>} : vector<32x32xbf16>, vector<32x64xbf16>, vector<32x64xf32> -> vector<32x64xf32>
    %78 = arith.addf %52, %77 : vector<32x64xf32>
    %c0_41 = arith.constant 0 : index
    %c0_42 = arith.constant 0 : index
    %79 = vector.load %arg13[%c0_41, %c0_42] : memref<1x64xf32, #tpu.memory_space<vmem>>, vector<1x64xf32>
    %80 = vector.broadcast %79 : vector<1x64xf32> to vector<32x64xf32>
    %81 = arith.addf %78, %80 : vector<32x64xf32>
    %cst_43 = arith.constant 1.000000e+00 : f32
    %82 = vector.broadcast %cst_43 : f32 to vector<32x4xf32>
    %83 = arith.subf %82, %4 : vector<32x4xf32>
    %cst_44 = arith.constant dense<0.000000e+00> : vector<32xf32>
    %84 = vector.multi_reduction <add>, %83, %cst_44 [1] : vector<32x4xf32> to vector<32xf32>
    %85 = vector.shape_cast %84 : vector<32xf32> to vector<32x1xf32>
    %cst_45 = arith.constant 0.000000e+00 : f32
    %86 = vector.broadcast %cst_45 : f32 to vector<32x1xf32>
    %87 = arith.cmpf oeq, %85, %86 : vector<32x1xf32>
    %cst_46 = arith.constant 0.000000e+00 : f32
    %88 = vector.shape_cast %87 : vector<32x1xi1> to vector<32x1xi1>
    %89 = vector.broadcast %88 : vector<32x1xi1> to vector<32x64xi1>
    %90 = vector.broadcast %cst_46 : f32 to vector<32x64xf32>
    %91 = arith.select %89, %90, %81 : vector<32x64xi1>, vector<32x64xf32>
    %92 = arith.truncf %91 : vector<32x64xf32> to vector<32x64xbf16>
    %c0_47 = arith.constant 0 : index
    %c0_48 = arith.constant 0 : index
    %93 = vector.load %arg14[%c0_47, %c0_48] : memref<64x32xbf16, #tpu.memory_space<vmem>>, vector<64x32xbf16>
    %cst_49 = arith.constant dense<0.000000e+00> : vector<32x32xf32>
    %94 = tpu.matmul %92, %93, %cst_49 {dimension_numbers = #tpu.dot_dimension_numbers<[1], [0], [0], [1], [0, 0, 1, 1], [], []>} : vector<32x64xbf16>, vector<64x32xbf16>, vector<32x32xf32> -> vector<32x32xf32>
    %c0_50 = arith.constant 0 : index
    %c0_51 = arith.constant 0 : index
    %95 = vector.load %arg15[%c0_50, %c0_51] : memref<32x32xbf16, #tpu.memory_space<vmem>>, vector<32x32xbf16>
    %cst_52 = arith.constant dense<0.000000e+00> : vector<32x32xf32>
    %96 = tpu.matmul %0, %95, %cst_52 {dimension_numbers = #tpu.dot_dimension_numbers<[1], [0], [0], [1], [0, 0, 1, 1], [], []>} : vector<32x32xbf16>, vector<32x32xbf16>, vector<32x32xf32> -> vector<32x32xf32>
    %97 = arith.addf %94, %96 : vector<32x32xf32>
    %c0_53 = arith.constant 0 : index
    %c0_54 = arith.constant 0 : index
    %98 = vector.load %arg16[%c0_53, %c0_54] : memref<1x32xf32, #tpu.memory_space<vmem>>, vector<1x32xf32>
    %99 = vector.broadcast %98 : vector<1x32xf32> to vector<32x32xf32>
    %100 = arith.addf %97, %99 : vector<32x32xf32>
    %cst_55 = arith.constant 0.000000e+00 : f32
    %101 = vector.broadcast %cst_55 : f32 to vector<32x32xf32>
    %102 = arith.maximumf %100, %101 : vector<32x32xf32>
    %103 = arith.truncf %102 : vector<32x32xf32> to vector<32x32xbf16>
    %c0_56 = arith.constant 0 : index
    %c0_57 = arith.constant 0 : index
    %104 = vector.load %arg17[%c0_56, %c0_57] : memref<32x32xbf16, #tpu.memory_space<vmem>>, vector<32x32xbf16>
    %cst_58 = arith.constant dense<0.000000e+00> : vector<32x32xf32>
    %105 = tpu.matmul %103, %104, %cst_58 {dimension_numbers = #tpu.dot_dimension_numbers<[1], [0], [0], [1], [0, 0, 1, 1], [], []>} : vector<32x32xbf16>, vector<32x32xbf16>, vector<32x32xf32> -> vector<32x32xf32>
    %c0_59 = arith.constant 0 : index
    %c0_60 = arith.constant 0 : index
    %106 = vector.load %arg18[%c0_59, %c0_60] : memref<1x32xf32, #tpu.memory_space<vmem>>, vector<1x32xf32>
    %107 = vector.broadcast %106 : vector<1x32xf32> to vector<32x32xf32>
    %108 = arith.addf %105, %107 : vector<32x32xf32>
    %c0_61 = arith.constant 0 : index
    %c0_62 = arith.constant 0 : index
    %109 = vector.load %arg19[%c0_61, %c0_62] : memref<32x32xf32, #tpu.memory_space<vmem>>, vector<32x32xf32>
    tpu.vector_store %arg19[%c0_61, %c0_62], %108 {strides = array<i32>} : memref<32x32xf32, #tpu.memory_space<vmem>>, vector<32x32xf32>,
    return
  }
  func.func @transform_0(%arg0: i32) -> (i32, i32) {
    %c0_i32 = arith.constant 0 : i32
    %c0_i32_0 = arith.constant 0 : i32
    return %arg0, %c0_i32 : i32, i32
  }
  func.func @transform_1(%arg0: i32) -> (i32, i32) {
    %c0_i32 = arith.constant 0 : i32
    %c0_i32_0 = arith.constant 0 : i32
    return %arg0, %c0_i32 : i32, i32
  }
  func.func @transform_2(%arg0: i32) -> (i32, i32, i32) {
    %c0_i32 = arith.constant 0 : i32
    %c0_i32_0 = arith.constant 0 : i32
    %c0_i32_1 = arith.constant 0 : i32
    return %arg0, %c0_i32, %c0_i32_0 : i32, i32, i32
  }
  func.func @transform_3(%arg0: i32) -> (i32, i32, i32) {
    %c0_i32 = arith.constant 0 : i32
    %c0_i32_0 = arith.constant 0 : i32
    %c0_i32_1 = arith.constant 0 : i32
    return %arg0, %c0_i32, %c0_i32_0 : i32, i32, i32
  }
  func.func @transform_4(%arg0: i32) -> (i32, i32) {
    %c0_i32 = arith.constant 0 : i32
    %c0_i32_0 = arith.constant 0 : i32
    return %arg0, %c0_i32 : i32, i32
  }
  func.func @transform_5(%arg0: i32) -> (i32, i32) {
    %c0_i32 = arith.constant 0 : i32
    %c0_i32_0 = arith.constant 0 : i32
    %c0_i32_1 = arith.constant 0 : i32
    return %c0_i32, %c0_i32_0 : i32, i32
  }
  func.func @transform_6(%arg0: i32) -> (i32, i32) {
    %c0_i32 = arith.constant 0 : i32
    %c0_i32_0 = arith.constant 0 : i32
    %c0_i32_1 = arith.constant 0 : i32
    return %c0_i32, %c0_i32_0 : i32, i32
  }
  func.func @transform_7(%arg0: i32) -> (i32, i32) {
    %c0_i32 = arith.constant 0 : i32
    %c0_i32_0 = arith.constant 0 : i32
    %c0_i32_1 = arith.constant 0 : i32
    return %c0_i32, %c0_i32_0 : i32, i32
  }
  func.func @transform_8(%arg0: i32) -> (i32, i32) {
    %c0_i32 = arith.constant 0 : i32
    %c0_i32_0 = arith.constant 0 : i32
    %c0_i32_1 = arith.constant 0 : i32
    return %c0_i32, %c0_i32_0 : i32, i32
  }
  func.func @transform_9(%arg0: i32) -> (i32, i32) {
    %c0_i32 = arith.constant 0 : i32
    %c0_i32_0 = arith.constant 0 : i32
    %c0_i32_1 = arith.constant 0 : i32
    return %c0_i32, %c0_i32_0 : i32, i32
  }
  func.func @transform_10(%arg0: i32) -> (i32, i32) {
    %c0_i32 = arith.constant 0 : i32
    %c0_i32_0 = arith.constant 0 : i32
    %c0_i32_1 = arith.constant 0 : i32
    return %c0_i32, %c0_i32_0 : i32, i32
  }
  func.func @transform_11(%arg0: i32) -> (i32, i32) {
    %c0_i32 = arith.constant 0 : i32
    %c0_i32_0 = arith.constant 0 : i32
    %c0_i32_1 = arith.constant 0 : i32
    return %c0_i32, %c0_i32_0 : i32, i32
  }
  func.func @transform_12(%arg0: i32) -> (i32, i32) {
    %c0_i32 = arith.constant 0 : i32
    %c0_i32_0 = arith.constant 0 : i32
    %c0_i32_1 = arith.constant 0 : i32
    return %c0_i32, %c0_i32_0 : i32, i32
  }
  func.func @transform_13(%arg0: i32) -> (i32, i32) {
    %c0_i32 = arith.constant 0 : i32
    %c0_i32_0 = arith.constant 0 : i32
    %c0_i32_1 = arith.constant 0 : i32
    return %c0_i32, %c0_i32_0 : i32, i32
  }
  func.func @transform_14(%arg0: i32) -> (i32, i32) {
    %c0_i32 = arith.constant 0 : i32
    %c0_i32_0 = arith.constant 0 : i32
    %c0_i32_1 = arith.constant 0 : i32
    return %c0_i32, %c0_i32_0 : i32, i32
  }
  func.func @transform_15(%arg0: i32) -> (i32, i32) {
    %c0_i32 = arith.constant 0 : i32
    %c0_i32_0 = arith.constant 0 : i32
    %c0_i32_1 = arith.constant 0 : i32
    return %c0_i32, %c0_i32_0 : i32, i32
  }
  func.func @transform_16(%arg0: i32) -> (i32, i32) {
    %c0_i32 = arith.constant 0 : i32
    %c0_i32_0 = arith.constant 0 : i32
    %c0_i32_1 = arith.constant 0 : i32
    return %c0_i32, %c0_i32_0 : i32, i32
  }
  func.func @transform_17(%arg0: i32) -> (i32, i32) {
    %c0_i32 = arith.constant 0 : i32
    %c0_i32_0 = arith.constant 0 : i32
    %c0_i32_1 = arith.constant 0 : i32
    return %c0_i32, %c0_i32_0 : i32, i32
  }
  func.func @transform_18(%arg0: i32) -> (i32, i32) {
    %c0_i32 = arith.constant 0 : i32
    %c0_i32_0 = arith.constant 0 : i32
    return %arg0, %c0_i32 : i32, i32
  }
}

</mosaic_0001>

<llo_original>
// kernel: tpu_custom_call.1
$region0: #{tpu_custom_call.1}
  #allocation0 [shape = 'u32[]', space=smem, size = 0x4, offset = 0x4, fixed_abs, tag = 'smem constant byte address 0x4 - core index']
  #allocation1 [shape = 'u32[144,128]{1,0:T(1,128)}', space=vmem, size = 0x12000, scoped, tag = 'internal scratch']
  %s0 = inlined_call_operand.hbm [shape: bf16[32,32], index: 0, kind: input, shape index: {}]
  %s1 = inlined_call_operand.hbm [shape: bf16[32,32], index: 1, kind: input, shape index: {}]
  %s2 = inlined_call_operand.vmem [shape: bf16[32,4,32], index: 2, kind: input, shape index: {}]
  %s3 = inlined_call_operand.hbm [shape: bf16[32,4,32], index: 3, kind: input, shape index: {}]
  %s4 = inlined_call_operand.vmem [shape: f32[32,4], index: 4, kind: input, shape index: {}]
  %s5 = inlined_call_operand.hbm [shape: bf16[32,64], index: 5, kind: input, shape index: {}]
  %s6 = inlined_call_operand.hbm [shape: bf16[32,64], index: 6, kind: input, shape index: {}]
  %s7 = inlined_call_operand.hbm [shape: f32[1,64], index: 7, kind: input, shape index: {}]
  %s8 = inlined_call_operand.hbm [shape: bf16[32,128], index: 8, kind: input, shape index: {}]
  %s9 = inlined_call_operand.hbm [shape: bf16[32,128], index: 9, kind: input, shape index: {}]
  %s10 = inlined_call_operand.hbm [shape: f32[1,128], index: 10, kind: input, shape index: {}]
  %s11 = inlined_call_operand.vmem [shape: bf16[64,64], index: 11, kind: input, shape index: {}]
  %s12 = inlined_call_operand.hbm [shape: f32[1,64], index: 12, kind: input, shape index: {}]
  %s13 = inlined_call_operand.vmem [shape: bf16[64,32], index: 13, kind: input, shape index: {}]
  %s14 = inlined_call_operand.vmem [shape: bf16[32,32], index: 14, kind: input, shape index: {}]
  %s15 = inlined_call_operand.hbm [shape: f32[1,32], index: 15, kind: input, shape index: {}]
  %s16 = inlined_call_operand.vmem [shape: bf16[32,32], index: 16, kind: input, shape index: {}]
  %s17 = inlined_call_operand.vmem [shape: f32[1,32], index: 17, kind: input, shape index: {}]
  %s18 = inlined_call_operand.hbm [shape: f32[32,32], index: 18, kind: output, shape index: {}]
  %s19 = sld [smem:[#allocation0]]
  $region126: #{tpu_custom_call.1} parent=0
    _
  %s21 = ssub.s32 1, %s19
  %s22 = scalar_select 0, %s21, %s19
  $region1: #{tpu_custom_call.1} parent=0
    #allocation2 [shape = 'u8[8192]{0}', space=vmem, size = 0x2000, scoped, tag = 'input window, operand 0, single buffered']
    #allocation3 [shape = 's32[1]{0}', space=sflag, size = 0x4, scoped, tag = 'scoped memory for tpu_custom_call.1']
    #allocation4 [shape = 's32[1]{0}', space=sflag, size = 0x4, scoped, tag = 'scoped memory for tpu_custom_call.1']
    #allocation5 [shape = 'u8[8192]{0}', space=vmem, size = 0x2000, scoped, tag = 'input window, operand 1, single buffered']
    #allocation6 [shape = 's32[1]{0}', space=sflag, size = 0x4, scoped, tag = 'scoped memory for tpu_custom_call.1']
    #allocation7 [shape = 'u8[32768]{0}', space=vmem, size = 0x8000, scoped, tag = 'input window, operand 3, single buffered']
    #allocation8 [shape = 'u8[8192]{0}', space=vmem, size = 0x2000, scoped, tag = 'input window, operand 5, single buffered']
    #allocation9 [shape = 's32[1]{0}', space=sflag, size = 0x4, scoped, tag = 'scoped memory for tpu_custom_call.1']
    #allocation10 [shape = 'u8[8192]{0}', space=vmem, size = 0x2000, scoped, tag = 'input window, operand 6, single buffered']
    #allocation11 [shape = 'u8[512]{0}', space=vmem, size = 0x400, scoped, tag = 'input window, operand 7, single buffered']
    #allocation12 [shape = 's32[1]{0}', space=sflag, size = 0x4, scoped, tag = 'scoped memory for tpu_custom_call.1']
    #allocation13 [shape = 'u8[8192]{0}', space=vmem, size = 0x2000, scoped, tag = 'input window, operand 8, single buffered']
    #allocation14 [shape = 'u8[8192]{0}', space=vmem, size = 0x2000, scoped, tag = 'input window, operand 9, single buffered']
    #allocation15 [shape = 's32[1]{0}', space=sflag, size = 0x4, scoped, tag = 'scoped memory for tpu_custom_call.1']
    #allocation16 [shape = 'u8[512]{0}', space=vmem, size = 0x400, scoped, tag = 'input window, operand 10, single buffered']
    #allocation17 [shape = 'u8[512]{0}', space=vmem, size = 0x400, scoped, tag = 'input window, operand 12, single buffered']
    #allocation18 [shape = 's32[1]{0}', space=sflag, size = 0x4, scoped, tag = 'scoped memory for tpu_custom_call.1']
    #allocation19 [shape = 'u8[512]{0}', space=vmem, size = 0x400, scoped, tag = 'input window, operand 15, single buffered']
    #allocation20 [shape = 'u8[16384]{0}', space=vmem, size = 0x4000, scoped, tag = 'output window, operand 0, single buffered']
    %23 = vsyncpa [#allocation3], 0
    %24 = vsyncpa [#allocation6], 0
    %25 = vsyncpa [#allocation9], 0
    %26 = vsyncpa [#allocation12], 0
    %27 = vsyncpa [#allocation15], 0
    %28 = vsyncpa [#allocation18], 0
    %29 = vsyncpa [#allocation4], 0
    // Predicated region
    $region2: #{tpu_custom_call.1} parent=1 // pred_check
      _
    $region3: #{tpu_custom_call.1} parent=1 // pred_check_branch
      %31 = sbr.rel (0) target = $region5
    $region4: #{tpu_custom_call.1} parent=1 // pred_region
      %s33 = ssub.s32 256, 256
      %34 = vsyncadd [#allocation3], %s33
      %s35 = sshll.u32 [#allocation2], 4
      %s36 = int_to_ptr.vmem [resolvable:$true] %s35
      %41 = dma.hbm_to_vmem [thread:$0]  %s0, 256, %s36, [#allocation3], 64, 64, 4
    $region5: #{tpu_custom_call.1} parent=1 // pred_fallthru
      _
    // Predicated region
    $region6: #{tpu_custom_call.1} parent=1 // pred_check
      _
    $region7: #{tpu_custom_call.1} parent=1 // pred_check_branch
      %43 = sbr.rel (0) target = $region9
    $region8: #{tpu_custom_call.1} parent=1 // pred_region
      %s45 = ssub.s32 256, 256
      %46 = vsyncadd [#allocation6], %s45
      %s47 = sshll.u32 [#allocation5], 4
      %s48 = int_to_ptr.vmem [resolvable:$true] %s47
      %53 = dma.hbm_to_vmem [thread:$0]  %s1, 256, %s48, [#allocation6], 64, 64, 4
    $region9: #{tpu_custom_call.1} parent=1 // pred_fallthru
      _
    // Predicated region
    $region10: #{tpu_custom_call.1} parent=1 // pred_check
      _
    $region11: #{tpu_custom_call.1} parent=1 // pred_check_branch
      %55 = sbr.rel (0) target = $region13
    $region12: #{tpu_custom_call.1} parent=1 // pred_region
      _
    $region13: #{tpu_custom_call.1} parent=1 // pred_fallthru
      _
    // Predicated region
    $region14: #{tpu_custom_call.1} parent=1 // pred_check
      _
    $region15: #{tpu_custom_call.1} parent=1 // pred_check_branch
      %57 = sbr.rel (0) target = $region17
    $region16: #{tpu_custom_call.1} parent=1 // pred_region
      %s59 = ssub.s32 1024, 1024
      %60 = vsyncadd [#allocation6], %s59
      %s61 = sshll.u32 [#allocation7], 4
      %s62 = int_to_ptr.vmem [resolvable:$true] %s61
      %67 = dma.hbm_to_vmem [thread:$0]  %s3, 1024, %s62, [#allocation6], 32, 32, 2
    $region17: #{tpu_custom_call.1} parent=1 // pred_fallthru
      _
    // Predicated region
    $region18: #{tpu_custom_call.1} parent=1 // pred_check
      _
    $region19: #{tpu_custom_call.1} parent=1 // pred_check_branch
      %69 = sbr.rel (0) target = $region21
    $region20: #{tpu_custom_call.1} parent=1 // pred_region
      _
    $region21: #{tpu_custom_call.1} parent=1 // pred_fallthru
      _
    // Predicated region
    $region22: #{tpu_custom_call.1} parent=1 // pred_check
      _
    $region23: #{tpu_custom_call.1} parent=1 // pred_check_branch
      %71 = sbr.rel (0) target = $region25
    $region24: #{tpu_custom_call.1} parent=1 // pred_region
      %s73 = ssub.s32 256, 256
      %74 = vsyncadd [#allocation9], %s73
      %s75 = sshll.u32 [#allocation8], 4
      %s76 = int_to_ptr.vmem [resolvable:$true] %s75
      %81 = dma.hbm_to_vmem [thread:$0]  %s5, 256, %s76, [#allocation9], 64, 64, 4
    $region25: #{tpu_custom_call.1} parent=1 // pred_fallthru
      _
    // Predicated region
    $region26: #{tpu_custom_call.1} parent=1 // pred_check
      _
    $region27: #{tpu_custom_call.1} parent=1 // pred_check_branch
      %83 = sbr.rel (0) target = $region29
    $region28: #{tpu_custom_call.1} parent=1 // pred_region
      %s85 = ssub.s32 256, 256
      %86 = vsyncadd [#allocation9], %s85
      %s87 = sshll.u32 [#allocation10], 4
      %s88 = int_to_ptr.vmem [resolvable:$true] %s87
      %93 = dma.hbm_to_vmem [thread:$0]  %s6, 256, %s88, [#allocation9], 64, 64, 4
    $region29: #{tpu_custom_call.1} parent=1 // pred_fallthru
      _
    // Predicated region
    $region30: #{tpu_custom_call.1} parent=1 // pred_check
      _
    $region31: #{tpu_custom_call.1} parent=1 // pred_check_branch
      %95 = sbr.rel (0) target = $region33
    $region32: #{tpu_custom_call.1} parent=1 // pred_region
      %s97 = ssub.s32 16, 16
      %98 = vsyncadd [#allocation12], %s97
      %s100 = sshll.u32 [#allocation11], 4
      %s101 = int_to_ptr.vmem [resolvable:$true] %s100
      %103 = dma.hbm_to_vmem [thread:$0]  %s7, 16, %s101, [#allocation12]
    $region33: #{tpu_custom_call.1} parent=1 // pred_fallthru
      _
    // Predicated region
    $region34: #{tpu_custom_call.1} parent=1 // pred_check
      _
    $region35: #{tpu_custom_call.1} parent=1 // pred_check_branch
      %105 = sbr.rel (0) target = $region37
    $region36: #{tpu_custom_call.1} parent=1 // pred_region
      %s107 = ssub.s32 256, 256
      %108 = vsyncadd [#allocation12], %s107
      %s109 = sshll.u32 [#allocation13], 4
      %s110 = int_to_ptr.vmem [resolvable:$true] %s109
      %115 = dma.hbm_to_vmem [thread:$0]  %s8, 256, %s110, [#allocation12], 64, 64, 4
    $region37: #{tpu_custom_call.1} parent=1 // pred_fallthru
      _
    // Predicated region
    $region38: #{tpu_custom_call.1} parent=1 // pred_check
      _
    $region39: #{tpu_custom_call.1} parent=1 // pred_check_branch
      %117 = sbr.rel (0) target = $region41
    $region40: #{tpu_custom_call.1} parent=1 // pred_region
      %s119 = ssub.s32 256, 256
      %120 = vsyncadd [#allocation15], %s119
      %s121 = sshll.u32 [#allocation14], 4
      %s122 = int_to_ptr.vmem [resolvable:$true] %s121
      %127 = dma.hbm_to_vmem [thread:$0]  %s9, 256, %s122, [#allocation15], 64, 64, 4
    $region41: #{tpu_custom_call.1} parent=1 // pred_fallthru
      _
    // Predicated region
    $region42: #{tpu_custom_call.1} parent=1 // pred_check
      _
    $region43: #{tpu_custom_call.1} parent=1 // pred_check_branch
      %129 = sbr.rel (0) target = $region45
    $region44: #{tpu_custom_call.1} parent=1 // pred_region
      %s131 = ssub.s32 16, 16
      %132 = vsyncadd [#allocation15], %s131
      %s134 = sshll.u32 [#allocation16], 4
      %s135 = int_to_ptr.vmem [resolvable:$true] %s134
      %137 = dma.hbm_to_vmem [thread:$0]  %s10, 16, %s135, [#allocation15]
    $region45: #{tpu_custom_call.1} parent=1 // pred_fallthru
      _
    // Predicated region
    $region46: #{tpu_custom_call.1} parent=1 // pred_check
      _
    $region47: #{tpu_custom_call.1} parent=1 // pred_check_branch
      %139 = sbr.rel (0) target = $region49
    $region48: #{tpu_custom_call.1} parent=1 // pred_region
      _
    $region49: #{tpu_custom_call.1} parent=1 // pred_fallthru
      _
    // Predicated region
    $region50: #{tpu_custom_call.1} parent=1 // pred_check
      _
    $region51: #{tpu_custom_call.1} parent=1 // pred_check_branch
      %141 = sbr.rel (0) target = $region53
    $region52: #{tpu_custom_call.1} parent=1 // pred_region
      %s143 = ssub.s32 16, 16
      %144 = vsyncadd [#allocation18], %s143
      %s146 = sshll.u32 [#allocation17], 4
      %s147 = int_to_ptr.vmem [resolvable:$true] %s146
      %149 = dma.hbm_to_vmem [thread:$0]  %s12, 16, %s147, [#allocation18]
    $region53: #{tpu_custom_call.1} parent=1 // pred_fallthru
      _
    // Predicated region
    $region54: #{tpu_custom_call.1} parent=1 // pred_check
      _
    $region55: #{tpu_custom_call.1} parent=1 // pred_check_branch
      %151 = sbr.rel (0) target = $region57
    $region56: #{tpu_custom_call.1} parent=1 // pred_region
      _
    $region57: #{tpu_custom_call.1} parent=1 // pred_fallthru
      _
    // Predicated region
    $region58: #{tpu_custom_call.1} parent=1 // pred_check
      _
    $region59: #{tpu_custom_call.1} parent=1 // pred_check_branch
      %153 = sbr.rel (0) target = $region61
    $region60: #{tpu_custom_call.1} parent=1 // pred_region
      _
    $region61: #{tpu_custom_call.1} parent=1 // pred_fallthru
      _
    // Predicated region
    $region62: #{tpu_custom_call.1} parent=1 // pred_check
      _
    $region63: #{tpu_custom_call.1} parent=1 // pred_check_branch
      %155 = sbr.rel (0) target = $region65
    $region64: #{tpu_custom_call.1} parent=1 // pred_region
      %s157 = ssub.s32 16, 16
      %158 = vsyncadd [#allocation18], %s157
      %s160 = sshll.u32 [#allocation19], 4
      %s161 = int_to_ptr.vmem [resolvable:$true] %s160
      %163 = dma.hbm_to_vmem [thread:$0]  %s15, 16, %s161, [#allocation18]
    $region65: #{tpu_custom_call.1} parent=1 // pred_fallthru
      _
    // Predicated region
    $region66: #{tpu_custom_call.1} parent=1 // pred_check
      _
    $region67: #{tpu_custom_call.1} parent=1 // pred_check_branch
      %165 = sbr.rel (0) target = $region69
    $region68: #{tpu_custom_call.1} parent=1 // pred_region
      _
    $region69: #{tpu_custom_call.1} parent=1 // pred_fallthru
      _
    // Predicated region
    $region70: #{tpu_custom_call.1} parent=1 // pred_check
      _
    $region71: #{tpu_custom_call.1} parent=1 // pred_check_branch
      %167 = sbr.rel (0) target = $region73
    $region72: #{tpu_custom_call.1} parent=1 // pred_region
      _
    $region73: #{tpu_custom_call.1} parent=1 // pred_fallthru
      _
    // Predicated region
    $region74: #{tpu_custom_call.1} parent=1 // pred_check
      _
    $region75: #{tpu_custom_call.1} parent=1 // pred_check_branch
      %169 = sbr.rel (0) target = $region77
    $region76: #{tpu_custom_call.1} parent=1 // pred_region
      %170 = dma.done [#allocation3], 256
    $region77: #{tpu_custom_call.1} parent=1 // pred_fallthru
      _
    // Predicated region
    $region78: #{tpu_custom_call.1} parent=1 // pred_check
      _
    $region79: #{tpu_custom_call.1} parent=1 // pred_check_branch
      %172 = sbr.rel (0) target = $region81
    $region80: #{tpu_custom_call.1} parent=1 // pred_region
      %173 = dma.done [#allocation6], 256
    $region81: #{tpu_custom_call.1} parent=1 // pred_fallthru
      _
    // Predicated region
    $region82: #{tpu_custom_call.1} parent=1 // pred_check
      _
    $region83: #{tpu_custom_call.1} parent=1 // pred_check_branch
      %175 = sbr.rel (0) target = $region85
    $region84: #{tpu_custom_call.1} parent=1 // pred_region
      %176 = dma.done [#allocation6], 1024
    $region85: #{tpu_custom_call.1} parent=1 // pred_fallthru
      _
    // Predicated region
    $region86: #{tpu_custom_call.1} parent=1 // pred_check
      _
    $region87: #{tpu_custom_call.1} parent=1 // pred_check_branch
      %178 = sbr.rel (0) target = $region89
    $region88: #{tpu_custom_call.1} parent=1 // pred_region
      %179 = dma.done [#allocation9], 256
    $region89: #{tpu_custom_call.1} parent=1 // pred_fallthru
      _
    // Predicated region
    $region90: #{tpu_custom_call.1} parent=1 // pred_check
      _
    $region91: #{tpu_custom_call.1} parent=1 // pred_check_branch
      %181 = sbr.rel (0) target = $region93
    $region92: #{tpu_custom_call.1} parent=1 // pred_region
      %182 = dma.done [#allocation9], 256
    $region93: #{tpu_custom_call.1} parent=1 // pred_fallthru
      _
    // Predicated region
    $region94: #{tpu_custom_call.1} parent=1 // pred_check
      _
    $region95: #{tpu_custom_call.1} parent=1 // pred_check_branch
      %184 = sbr.rel (0) target = $region97
    $region96: #{tpu_custom_call.1} parent=1 // pred_region
      %185 = dma.done [#allocation12], 16
    $region97: #{tpu_custom_call.1} parent=1 // pred_fallthru
      _
    // Predicated region
    $region98: #{tpu_custom_call.1} parent=1 // pred_check
      _
    $region99: #{tpu_custom_call.1} parent=1 // pred_check_branch
      %187 = sbr.rel (0) target = $region101
    $region100: #{tpu_custom_call.1} parent=1 // pred_region
      %188 = dma.done [#allocation12], 256
    $region101: #{tpu_custom_call.1} parent=1 // pred_fallthru
      _
    // Predicated region
    $region102: #{tpu_custom_call.1} parent=1 // pred_check
      _
    $region103: #{tpu_custom_call.1} parent=1 // pred_check_branch
      %190 = sbr.rel (0) target = $region105
    $region104: #{tpu_custom_call.1} parent=1 // pred_region
      %191 = dma.done [#allocation15], 256
    $region105: #{tpu_custom_call.1} parent=1 // pred_fallthru
      _
    // Predicated region
    $region106: #{tpu_custom_call.1} parent=1 // pred_check
      _
    $region107: #{tpu_custom_call.1} parent=1 // pred_check_branch
      %193 = sbr.rel (0) target = $region109
    $region108: #{tpu_custom_call.1} parent=1 // pred_region
      %194 = dma.done [#allocation15], 16
    $region109: #{tpu_custom_call.1} parent=1 // pred_fallthru
      _
    // Predicated region
    $region110: #{tpu_custom_call.1} parent=1 // pred_check
      _
    $region111: #{tpu_custom_call.1} parent=1 // pred_check_branch
      %196 = sbr.rel (0) target = $region113
    $region112: #{tpu_custom_call.1} parent=1 // pred_region
      %197 = dma.done [#allocation18], 16
    $region113: #{tpu_custom_call.1} parent=1 // pred_fallthru
      _
    // Predicated region
    $region114: #{tpu_custom_call.1} parent=1 // pred_check
      _
    $region115: #{tpu_custom_call.1} parent=1 // pred_check_branch
      %199 = sbr.rel (0) target = $region117
    $region116: #{tpu_custom_call.1} parent=1 // pred_region
      %200 = dma.done [#allocation18], 16
    $region117: #{tpu_custom_call.1} parent=1 // pred_fallthru
      _
    %v202 = vld [vmem:[#allocation2] sm:$0xf]
    %v203 = vld [vmem:[#allocation2 + $0x4] sm:$0xf]
    %v204 = vld [vmem:[#allocation2 + $0x8] sm:$0xf]
    %v205 = vld [vmem:[#allocation2 + $0xc] sm:$0xf]
    %v206 = vld [vmem:[#allocation5] sm:$0xf]
    %v207 = vld [vmem:[#allocation5 + $0x4] sm:$0xf]
    %v208 = vld [vmem:[#allocation5 + $0x8] sm:$0xf]
    %v209 = vld [vmem:[#allocation5 + $0xc] sm:$0xf]
    %v210 = vld [vmem:[%s2] sm:$0x3]
    %v211 = vld [vmem:[%s2 + $0x2] sm:$0x3]
    %v212 = vld [vmem:[%s2 + $0x4] sm:$0x3]
    %v213 = vld [vmem:[%s2 + $0x6] sm:$0x3]
    %v214 = vld [vmem:[%s2 + $0x8] sm:$0x3]
    %v215 = vld [vmem:[%s2 + $0xa] sm:$0x3]
    %v216 = vld [vmem:[%s2 + $0xc] sm:$0x3]
    %v217 = vld [vmem:[%s2 + $0xe] sm:$0x3]
    %v218 = vld [vmem:[%s2 + $0x10] sm:$0x3]
    %v219 = vld [vmem:[%s2 + $0x12] sm:$0x3]
    %v220 = vld [vmem:[%s2 + $0x14] sm:$0x3]
    %v221 = vld [vmem:[%s2 + $0x16] sm:$0x3]
    %v222 = vld [vmem:[%s2 + $0x18] sm:$0x3]
    %v223 = vld [vmem:[%s2 + $0x1a] sm:$0x3]
    %v224 = vld [vmem:[%s2 + $0x1c] sm:$0x3]
    %v225 = vld [vmem:[%s2 + $0x1e] sm:$0x3]
    %v226 = vld [vmem:[%s2 + $0x20] sm:$0x3]
    %v227 = vld [vmem:[%s2 + $0x22] sm:$0x3]
    %v228 = vld [vmem:[%s2 + $0x24] sm:$0x3]
    %v229 = vld [vmem:[%s2 + $0x26] sm:$0x3]
    %v230 = vld [vmem:[%s2 + $0x28] sm:$0x3]
    %v231 = vld [vmem:[%s2 + $0x2a] sm:$0x3]
    %v232 = vld [vmem:[%s2 + $0x2c] sm:$0x3]
    %v233 = vld [vmem:[%s2 + $0x2e] sm:$0x3]
    %v234 = vld [vmem:[%s2 + $0x30] sm:$0x3]
    %v235 = vld [vmem:[%s2 + $0x32] sm:$0x3]
    %v236 = vld [vmem:[%s2 + $0x34] sm:$0x3]
    %v237 = vld [vmem:[%s2 + $0x36] sm:$0x3]
    %v238 = vld [vmem:[%s2 + $0x38] sm:$0x3]
    %v239 = vld [vmem:[%s2 + $0x3a] sm:$0x3]
    %v240 = vld [vmem:[%s2 + $0x3c] sm:$0x3]
    %v241 = vld [vmem:[%s2 + $0x3e] sm:$0x3]
    %v242 = vld [vmem:[#allocation7] sm:$0x3]
    %v243 = vld [vmem:[#allocation7 + $0x2] sm:$0x3]
    %v244 = vld [vmem:[#allocation7 + $0x4] sm:$0x3]
    %v245 = vld [vmem:[#allocation7 + $0x6] sm:$0x3]
    %v246 = vld [vmem:[#allocation7 + $0x8] sm:$0x3]
    %v247 = vld [vmem:[#allocation7 + $0xa] sm:$0x3]
    %v248 = vld [vmem:[#allocation7 + $0xc] sm:$0x3]
    %v249 = vld [vmem:[#allocation7 + $0xe] sm:$0x3]
    %v250 = vld [vmem:[#allocation7 + $0x10] sm:$0x3]
    %v251 = vld [vmem:[#allocation7 + $0x12] sm:$0x3]
    %v252 = vld [vmem:[#allocation7 + $0x14] sm:$0x3]
    %v253 = vld [vmem:[#allocation7 + $0x16] sm:$0x3]
    %v254 = vld [vmem:[#allocation7 + $0x18] sm:$0x3]
    %v255 = vld [vmem:[#allocation7 + $0x1a] sm:$0x3]
    %v256 = vld [vmem:[#allocation7 + $0x1c] sm:$0x3]
    %v257 = vld [vmem:[#allocation7 + $0x1e] sm:$0x3]
    %v258 = vld [vmem:[#allocation7 + $0x20] sm:$0x3]
    %v259 = vld [vmem:[#allocation7 + $0x22] sm:$0x3]
    %v260 = vld [vmem:[#allocation7 + $0x24] sm:$0x3]
    %v261 = vld [vmem:[#allocation7 + $0x26] sm:$0x3]
    %v262 = vld [vmem:[#allocation7 + $0x28] sm:$0x3]
    %v263 = vld [vmem:[#allocation7 + $0x2a] sm:$0x3]
    %v264 = vld [vmem:[#allocation7 + $0x2c] sm:$0x3]
    %v265 = vld [vmem:[#allocation7 + $0x2e] sm:$0x3]
    %v266 = vld [vmem:[#allocation7 + $0x30] sm:$0x3]
    %v267 = vld [vmem:[#allocation7 + $0x32] sm:$0x3]
    %v268 = vld [vmem:[#allocation7 + $0x34] sm:$0x3]
    %v269 = vld [vmem:[#allocation7 + $0x36] sm:$0x3]
    %v270 = vld [vmem:[#allocation7 + $0x38] sm:$0x3]
    %v271 = vld [vmem:[#allocation7 + $0x3a] sm:$0x3]
    %v272 = vld [vmem:[#allocation7 + $0x3c] sm:$0x3]
    %v273 = vld [vmem:[#allocation7 + $0x3e] sm:$0x3]
    %v274 = vld [vmem:[%s4] sm:$0xff]
    %v275 = vld [vmem:[%s4 + $0x8] sm:$0xff]
    %v276 = vld [vmem:[%s4 + $0x10] sm:$0xff]
    %v277 = vld [vmem:[%s4 + $0x18] sm:$0xff]
    %v278 = vld [vmem:[#allocation8] sm:$0xf]
    %v279 = vld [vmem:[#allocation8 + $0x4] sm:$0xf]
    %v280 = vld [vmem:[#allocation8 + $0x8] sm:$0xf]
    %v281 = vld [vmem:[#allocation8 + $0xc] sm:$0xf]
    %v282 = vld [vmem:[#allocation10] sm:$0xf]
    %v283 = vld [vmem:[#allocation10 + $0x4] sm:$0xf]
    %v284 = vld [vmem:[#allocation10 + $0x8] sm:$0xf]
    %v285 = vld [vmem:[#allocation10 + $0xc] sm:$0xf]
    %v290 = vunpack.c.l.b16 %v206
    %v291 = vunpack.c.l.b16 %v207
    %v292 = vunpack.c.l.b16 %v208
    %v293 = vunpack.c.l.b16 %v209
    %v294 = vpack.c.b16 %v291, %v290
    %v295 = vpack.c.b16 %v293, %v292
    %v300 = vunpack.c.l.b16 %v282
    %v301 = vunpack.c.l.b16 %v283
    %v302 = vunpack.c.l.b16 %v284
    %v303 = vunpack.c.l.b16 %v285
    %v304 = vpack.c.b16 %v301, %v300
    %v305 = vpack.c.b16 %v303, %v302
    %vm308 = vcmask 261120
    %v310 = vsel %vm308, %v294, 0
    %v313 = vsel %vm308, %v295, 0
    %315 = vmatprep.subr.bf16.mxu0 0
    %316 = vmatpush1.bf16.msra.mxu0 %v304
    %317 = vmatprep.subr.bf16.mxu0 0
    %318 = vmatpush1.bf16.msra.mxu0 %v305
    %319 = vmatprep.subr.bf16.mxu0 0
    %320 = vmatpush1.bf16.msra.mxu0 0
    %321 = vmatprep.subr.bf16.mxu0 0
    %322 = vmatpush1.bf16.msra.mxu0 0
    %323 = vmatprep.subr.bf16.mxu0 0
    %324 = vmatpush1.bf16.msra.mxu0 0
    %325 = vmatprep.subr.bf16.mxu0 0
    %326 = vmatpush1.bf16.msra.mxu0 0
    %327 = vmatprep.subr.bf16.mxu0 0
    %328 = vmatpush1.bf16.msra.mxu0 0
    %329 = vmatprep.subr.bf16.mxu0 0
    %330 = vmatpush1.bf16.msra.mxu0 0
    %331 = vmatprep.subr.bf16.mxu0 0
    %332 = vmatpush1.bf16.msra.mxu0 0
    %333 = vmatprep.subr.bf16.mxu0 0
    %334 = vmatpush1.bf16.msra.mxu0 0
    %335 = vmatprep.subr.bf16.mxu0 0
    %336 = vmatpush1.bf16.msra.mxu0 0
    %337 = vmatprep.subr.bf16.mxu0 0
    %338 = vmatpush1.bf16.msra.mxu0 0
    %339 = vmatprep.subr.bf16.mxu0 0
    %340 = vmatpush1.bf16.msra.mxu0 0
    %341 = vmatprep.subr.bf16.mxu0 0
    %342 = vmatpush1.bf16.msra.mxu0 0
    %343 = vmatprep.subr.bf16.mxu0 0
    %344 = vmatpush1.bf16.msra.mxu0 0
    %345 = vmatprep.subr.bf16.mxu0 0
    %346 = vmatpush1.bf16.msra.mxu0 0
    %347 = vmatprep.mubr.bf16.mxu0 0
    %348 = vmatmul.mubr.bf16.gmra.mrb[0].mxu0 %v310
    %v349 = vpop.f32.mrb[0].mxu0
    %v350 = vadd.f32 0.0, %v349
    %v351 = vpop.f32.mrb[0].mxu0
    %v352 = vpop.f32.mrb[0].mxu0
    %v353 = vadd.f32 0.0, %v352
    %v354 = vpop.f32.mrb[0].mxu0
    %355 = vmatprep.mubr.bf16.mxu0 0
    %356 = vmatmul.mubr.bf16.gmra.mrb[0].mxu0 %v313
    %v357 = vpop.f32.mrb[0].mxu0
    %v358 = vadd.f32 0.0, %v357
    %v359 = vpop.f32.mrb[0].mxu0
    %v360 = vpop.f32.mrb[0].mxu0
    %v361 = vadd.f32 0.0, %v360
    %v362 = vpop.f32.mrb[0].mxu0
    %363 = vdwg.mxu0
    %v368 = vunpack.c.l.b16 %v202
    %v369 = vunpack.c.l.b16 %v203
    %v370 = vunpack.c.l.b16 %v204
    %v371 = vunpack.c.l.b16 %v205
    %v372 = vpack.c.b16 %v369, %v368
    %v373 = vpack.c.b16 %v371, %v370
    %v378 = vunpack.c.l.b16 %v278
    %v379 = vunpack.c.l.b16 %v279
    %v380 = vunpack.c.l.b16 %v280
    %v381 = vunpack.c.l.b16 %v281
    %v382 = vpack.c.b16 %v379, %v378
    %v383 = vpack.c.b16 %v381, %v380
    %v387 = vsel %vm308, %v372, 0
    %v390 = vsel %vm308, %v373, 0
    %392 = vmatprep.subr.bf16.mxu0 0
    %393 = vmatpush1.bf16.msra.mxu0 %v382
    %394 = vmatprep.subr.bf16.mxu0 0
    %395 = vmatpush1.bf16.msra.mxu0 %v383
    %396 = vmatprep.subr.bf16.mxu0 0
    %397 = vmatpush1.bf16.msra.mxu0 0
    %398 = vmatprep.subr.bf16.mxu0 0
    %399 = vmatpush1.bf16.msra.mxu0 0
    %400 = vmatprep.subr.bf16.mxu0 0
    %401 = vmatpush1.bf16.msra.mxu0 0
    %402 = vmatprep.subr.bf16.mxu0 0
    %403 = vmatpush1.bf16.msra.mxu0 0
    %404 = vmatprep.subr.bf16.mxu0 0
    %405 = vmatpush1.bf16.msra.mxu0 0
    %406 = vmatprep.subr.bf16.mxu0 0
    %407 = vmatpush1.bf16.msra.mxu0 0
    %408 = vmatprep.subr.bf16.mxu0 0
    %409 = vmatpush1.bf16.msra.mxu0 0
    %410 = vmatprep.subr.bf16.mxu0 0
    %411 = vmatpush1.bf16.msra.mxu0 0
    %412 = vmatprep.subr.bf16.mxu0 0
    %413 = vmatpush1.bf16.msra.mxu0 0
    %414 = vmatprep.subr.bf16.mxu0 0
    %415 = vmatpush1.bf16.msra.mxu0 0
    %416 = vmatprep.subr.bf16.mxu0 0
    %417 = vmatpush1.bf16.msra.mxu0 0
    %418 = vmatprep.subr.bf16.mxu0 0
    %419 = vmatpush1.bf16.msra.mxu0 0
    %420 = vmatprep.subr.bf16.mxu0 0
    %421 = vmatpush1.bf16.msra.mxu0 0
    %422 = vmatprep.subr.bf16.mxu0 0
    %423 = vmatpush1.bf16.msra.mxu0 0
    %424 = vmatprep.mubr.bf16.mxu0 0
    %425 = vmatmul.mubr.bf16.gmra.mrb[0].mxu0 %v387
    %v426 = vpop.f32.mrb[0].mxu0
    %v427 = vadd.f32 %v350, %v426
    %v428 = vpop.f32.mrb[0].mxu0
    %v429 = vpop.f32.mrb[0].mxu0
    %v430 = vadd.f32 %v353, %v429
    %v431 = vpop.f32.mrb[0].mxu0
    %432 = vmatprep.mubr.bf16.mxu0 0
    %433 = vmatmul.mubr.bf16.gmra.mrb[0].mxu0 %v390
    %v434 = vpop.f32.mrb[0].mxu0
    %v435 = vadd.f32 %v358, %v434
    %v436 = vpop.f32.mrb[0].mxu0
    %v437 = vpop.f32.mrb[0].mxu0
    %v438 = vadd.f32 %v361, %v437
    %v439 = vpop.f32.mrb[0].mxu0
    %440 = vdwg.mxu0
    %v441 = vld [vmem:[#allocation11] sm:$0x1]
    %v443 = vlaneseq
    %v444 = vshrl.u32 %v443, 7
    %v445 = vsub.s32 0, %v444
    %v446 = vrot.slane %v441, %v445
    %v448 = vadd.f32 %v427, %v446
    %v449 = vadd.f32 %v430, %v446
    %v450 = vadd.f32 %v435, %v446
    %v451 = vadd.f32 %v438, %v446
    %v452 = vld [vmem:[#allocation13] sm:$0xf]
    %v453 = vld [vmem:[#allocation13 + $0x4] sm:$0xf]
    %v454 = vld [vmem:[#allocation13 + $0x8] sm:$0xf]
    %v455 = vld [vmem:[#allocation13 + $0xc] sm:$0xf]
    %v456 = vld [vmem:[#allocation14] sm:$0xf]
    %v457 = vld [vmem:[#allocation14 + $0x4] sm:$0xf]
    %v458 = vld [vmem:[#allocation14 + $0x8] sm:$0xf]
    %v459 = vld [vmem:[#allocation14 + $0xc] sm:$0xf]
    %v492 = vcombine.low %v242, %v243
    %v493 = vcombine.low %v244, %v245
    %v495 = vunpack.c.l.s4 1983009808
    %v496 = vunpack.c.0.s8 %v495
    %v497 = vlaneseq
    %v498 = vshrl.u32 %v497, 7
    %v499 = vsub.s32 %v496, %v498
    %v500 = vrot.slane %v492, %v499
    %v502 = vunpack.c.l.s4 1983009808
    %v503 = vunpack.c.0.s8 %v502
    %v504 = vlaneseq
    %v505 = vshrl.u32 %v504, 7
    %v506 = vsub.s32 %v503, %v505
    %v507 = vrot.slane %v493, %v506
    %v508 = vcombine.low %v500, %v507
    %v509 = vcombine.low %v246, %v247
    %v510 = vcombine.low %v248, %v249
    %v512 = vunpack.c.l.s4 1983009808
    %v513 = vunpack.c.0.s8 %v512
    %v514 = vlaneseq
    %v515 = vshrl.u32 %v514, 7
    %v516 = vsub.s32 %v513, %v515
    %v517 = vrot.slane %v509, %v516
    %v519 = vunpack.c.l.s4 1983009808
    %v520 = vunpack.c.0.s8 %v519
    %v521 = vlaneseq
    %v522 = vshrl.u32 %v521, 7
    %v523 = vsub.s32 %v520, %v522
    %v524 = vrot.slane %v510, %v523
    %v525 = vcombine.low %v517, %v524
    %v526 = vcombine.low %v250, %v251
    %v527 = vcombine.low %v252, %v253
    %v529 = vunpack.c.l.s4 1983009808
    %v530 = vunpack.c.0.s8 %v529
    %v531 = vlaneseq
    %v532 = vshrl.u32 %v531, 7
    %v533 = vsub.s32 %v530, %v532
    %v534 = vrot.slane %v526, %v533
    %v536 = vunpack.c.l.s4 1983009808
    %v537 = vunpack.c.0.s8 %v536
    %v538 = vlaneseq
    %v539 = vshrl.u32 %v538, 7
    %v540 = vsub.s32 %v537, %v539
    %v541 = vrot.slane %v527, %v540
    %v542 = vcombine.low %v534, %v541
    %v543 = vcombine.low %v254, %v255
    %v544 = vcombine.low %v256, %v257
    %v546 = vunpack.c.l.s4 1983009808
    %v547 = vunpack.c.0.s8 %v546
    %v548 = vlaneseq
    %v549 = vshrl.u32 %v548, 7
    %v550 = vsub.s32 %v547, %v549
    %v551 = vrot.slane %v543, %v550
    %v553 = vunpack.c.l.s4 1983009808
    %v554 = vunpack.c.0.s8 %v553
    %v555 = vlaneseq
    %v556 = vshrl.u32 %v555, 7
    %v557 = vsub.s32 %v554, %v556
    %v558 = vrot.slane %v544, %v557
    %v559 = vcombine.low %v551, %v558
    %v560 = vcombine.low %v258, %v259
    %v561 = vcombine.low %v260, %v261
    %v563 = vunpack.c.l.s4 1983009808
    %v564 = vunpack.c.0.s8 %v563
    %v565 = vlaneseq
    %v566 = vshrl.u32 %v565, 7
    %v567 = vsub.s32 %v564, %v566
    %v568 = vrot.slane %v560, %v567
    %v570 = vunpack.c.l.s4 1983009808
    %v571 = vunpack.c.0.s8 %v570
    %v572 = vlaneseq
    %v573 = vshrl.u32 %v572, 7
    %v574 = vsub.s32 %v571, %v573
    %v575 = vrot.slane %v561, %v574
    %v576 = vcombine.low %v568, %v575
    %v577 = vcombine.low %v262, %v263
    %v578 = vcombine.low %v264, %v265
    %v580 = vunpack.c.l.s4 1983009808
    %v581 = vunpack.c.0.s8 %v580
    %v582 = vlaneseq
    %v583 = vshrl.u32 %v582, 7
    %v584 = vsub.s32 %v581, %v583
    %v585 = vrot.slane %v577, %v584
    %v587 = vunpack.c.l.s4 1983009808
    %v588 = vunpack.c.0.s8 %v587
    %v589 = vlaneseq
    %v590 = vshrl.u32 %v589, 7
    %v591 = vsub.s32 %v588, %v590
    %v592 = vrot.slane %v578, %v591
    %v593 = vcombine.low %v585, %v592
    %v594 = vcombine.low %v266, %v267
    %v595 = vcombine.low %v268, %v269
    %v597 = vunpack.c.l.s4 1983009808
    %v598 = vunpack.c.0.s8 %v597
    %v599 = vlaneseq
    %v600 = vshrl.u32 %v599, 7
    %v601 = vsub.s32 %v598, %v600
    %v602 = vrot.slane %v594, %v601
    %v604 = vunpack.c.l.s4 1983009808
    %v605 = vunpack.c.0.s8 %v604
    %v606 = vlaneseq
    %v607 = vshrl.u32 %v606, 7
    %v608 = vsub.s32 %v605, %v607
    %v609 = vrot.slane %v595, %v608
    %v610 = vcombine.low %v602, %v609
    %v611 = vcombine.low %v270, %v271
    %v612 = vcombine.low %v272, %v273
    %v614 = vunpack.c.l.s4 1983009808
    %v615 = vunpack.c.0.s8 %v614
    %v616 = vlaneseq
    %v617 = vshrl.u32 %v616, 7
    %v618 = vsub.s32 %v615, %v617
    %v619 = vrot.slane %v611, %v618
    %v621 = vunpack.c.l.s4 1983009808
    %v622 = vunpack.c.0.s8 %v621
    %v623 = vlaneseq
    %v624 = vshrl.u32 %v623, 7
    %v625 = vsub.s32 %v622, %v624
    %v626 = vrot.slane %v612, %v625
    %v627 = vcombine.low %v619, %v626
    %v632 = vunpack.c.l.b16 %v456
    %v633 = vunpack.c.l.b16 %v457
    %v634 = vunpack.c.l.b16 %v458
    %v635 = vunpack.c.l.b16 %v459
    %v636 = vpack.c.b16 %v633, %v632
    %v637 = vpack.c.b16 %v635, %v634
    %v641 = vsel %vm308, %v508, 0
    %v644 = vsel %vm308, %v525, 0
    %v647 = vsel %vm308, %v542, 0
    %v650 = vsel %vm308, %v559, 0
    %v653 = vsel %vm308, %v576, 0
    %v656 = vsel %vm308, %v593, 0
    %v659 = vsel %vm308, %v610, 0
    %v662 = vsel %vm308, %v627, 0
    %664 = vmatprep.subr.bf16.mxu0 0
    %665 = vmatpush1.bf16.msra.mxu0 %v636
    %666 = vmatprep.subr.bf16.mxu0 0
    %667 = vmatpush1.bf16.msra.mxu0 %v637
    %668 = vmatprep.subr.bf16.mxu0 0
    %669 = vmatpush1.bf16.msra.mxu0 0
    %670 = vmatprep.subr.bf16.mxu0 0
    %671 = vmatpush1.bf16.msra.mxu0 0
    %672 = vmatprep.subr.bf16.mxu0 0
    %673 = vmatpush1.bf16.msra.mxu0 0
    %674 = vmatprep.subr.bf16.mxu0 0
    %675 = vmatpush1.bf16.msra.mxu0 0
    %676 = vmatprep.subr.bf16.mxu0 0
    %677 = vmatpush1.bf16.msra.mxu0 0
    %678 = vmatprep.subr.bf16.mxu0 0
    %679 = vmatpush1.bf16.msra.mxu0 0
    %680 = vmatprep.subr.bf16.mxu0 0
    %681 = vmatpush1.bf16.msra.mxu0 0
    %682 = vmatprep.subr.bf16.mxu0 0
    %683 = vmatpush1.bf16.msra.mxu0 0
    %684 = vmatprep.subr.bf16.mxu0 0
    %685 = vmatpush1.bf16.msra.mxu0 0
    %686 = vmatprep.subr.bf16.mxu0 0
    %687 = vmatpush1.bf16.msra.mxu0 0
    %688 = vmatprep.subr.bf16.mxu0 0
    %689 = vmatpush1.bf16.msra.mxu0 0
    %690 = vmatprep.subr.bf16.mxu0 0
    %691 = vmatpush1.bf16.msra.mxu0 0
    %692 = vmatprep.subr.bf16.mxu0 0
    %693 = vmatpush1.bf16.msra.mxu0 0
    %694 = vmatprep.subr.bf16.mxu0 0
    %695 = vmatpush1.bf16.msra.mxu0 0
    %696 = vmatprep.mubr.bf16.mxu0 0
    %697 = vmatmul.mubr.bf16.gmra.mrb[0].mxu0 %v641
    %v698 = vpop.f32.mrb[0].mxu0
    %v699 = vadd.f32 0.0, %v698
    %v700 = vpop.f32.mrb[0].mxu0
    %v701 = vpop.f32.mrb[0].mxu0
    %v702 = vadd.f32 0.0, %v701
    %v703 = vpop.f32.mrb[0].mxu0
    %704 = vmatprep.mubr.bf16.mxu0 0
    %705 = vmatmul.mubr.bf16.gmra.mrb[0].mxu0 %v644
    %v706 = vpop.f32.mrb[0].mxu0
    %v707 = vadd.f32 0.0, %v706
    %v708 = vpop.f32.mrb[0].mxu0
    %v709 = vpop.f32.mrb[0].mxu0
    %v710 = vadd.f32 0.0, %v709
    %v711 = vpop.f32.mrb[0].mxu0
    %712 = vmatprep.mubr.bf16.mxu0 0
    %713 = vmatmul.mubr.bf16.gmra.mrb[0].mxu0 %v647
    %v714 = vpop.f32.mrb[0].mxu0
    %v715 = vadd.f32 0.0, %v714
    %v716 = vpop.f32.mrb[0].mxu0
    %v717 = vpop.f32.mrb[0].mxu0
    %v718 = vadd.f32 0.0, %v717
    %v719 = vpop.f32.mrb[0].mxu0
    %720 = vmatprep.mubr.bf16.mxu0 0
    %721 = vmatmul.mubr.bf16.gmra.mrb[0].mxu0 %v650
    %v722 = vpop.f32.mrb[0].mxu0
    %v723 = vadd.f32 0.0, %v722
    %v724 = vpop.f32.mrb[0].mxu0
    %v725 = vpop.f32.mrb[0].mxu0
    %v726 = vadd.f32 0.0, %v725
    %v727 = vpop.f32.mrb[0].mxu0
    %728 = vmatprep.mubr.bf16.mxu0 0
    %729 = vmatmul.mubr.bf16.gmra.mrb[0].mxu0 %v653
    %v730 = vpop.f32.mrb[0].mxu0
    %v731 = vadd.f32 0.0, %v730
    %v732 = vpop.f32.mrb[0].mxu0
    %v733 = vpop.f32.mrb[0].mxu0
    %v734 = vadd.f32 0.0, %v733
    %v735 = vpop.f32.mrb[0].mxu0
    %736 = vmatprep.mubr.bf16.mxu0 0
    %737 = vmatmul.mubr.bf16.gmra.mrb[0].mxu0 %v656
    %v738 = vpop.f32.mrb[0].mxu0
    %v739 = vadd.f32 0.0, %v738
    %v740 = vpop.f32.mrb[0].mxu0
    %v741 = vpop.f32.mrb[0].mxu0
    %v742 = vadd.f32 0.0, %v741
    %v743 = vpop.f32.mrb[0].mxu0
    %744 = vmatprep.mubr.bf16.mxu0 0
    %745 = vmatmul.mubr.bf16.gmra.mrb[0].mxu0 %v659
    %v746 = vpop.f32.mrb[0].mxu0
    %v747 = vadd.f32 0.0, %v746
    %v748 = vpop.f32.mrb[0].mxu0
    %v749 = vpop.f32.mrb[0].mxu0
    %v750 = vadd.f32 0.0, %v749
    %v751 = vpop.f32.mrb[0].mxu0
    %752 = vmatprep.mubr.bf16.mxu0 0
    %753 = vmatmul.mubr.bf16.gmra.mrb[0].mxu0 %v662
    %v754 = vpop.f32.mrb[0].mxu0
    %v755 = vadd.f32 0.0, %v754
    %v756 = vpop.f32.mrb[0].mxu0
    %v757 = vpop.f32.mrb[0].mxu0
    %v758 = vadd.f32 0.0, %v757
    %v759 = vpop.f32.mrb[0].mxu0
    %760 = vdwg.mxu0
    %v793 = vcombine.low %v210, %v211
    %v794 = vcombine.low %v212, %v213
    %v796 = vunpack.c.l.s4 1983009808
    %v797 = vunpack.c.0.s8 %v796
    %v798 = vlaneseq
    %v799 = vshrl.u32 %v798, 7
    %v800 = vsub.s32 %v797, %v799
    %v801 = vrot.slane %v793, %v800
    %v803 = vunpack.c.l.s4 1983009808
    %v804 = vunpack.c.0.s8 %v803
    %v805 = vlaneseq
    %v806 = vshrl.u32 %v805, 7
    %v807 = vsub.s32 %v804, %v806
    %v808 = vrot.slane %v794, %v807
    %v809 = vcombine.low %v801, %v808
    %v810 = vcombine.low %v214, %v215
    %v811 = vcombine.low %v216, %v217
    %v813 = vunpack.c.l.s4 1983009808
    %v814 = vunpack.c.0.s8 %v813
    %v815 = vlaneseq
    %v816 = vshrl.u32 %v815, 7
    %v817 = vsub.s32 %v814, %v816
    %v818 = vrot.slane %v810, %v817
    %v820 = vunpack.c.l.s4 1983009808
    %v821 = vunpack.c.0.s8 %v820
    %v822 = vlaneseq
    %v823 = vshrl.u32 %v822, 7
    %v824 = vsub.s32 %v821, %v823
    %v825 = vrot.slane %v811, %v824
    %v826 = vcombine.low %v818, %v825
    %v827 = vcombine.low %v218, %v219
    %v828 = vcombine.low %v220, %v221
    %v830 = vunpack.c.l.s4 1983009808
    %v831 = vunpack.c.0.s8 %v830
    %v832 = vlaneseq
    %v833 = vshrl.u32 %v832, 7
    %v834 = vsub.s32 %v831, %v833
    %v835 = vrot.slane %v827, %v834
    %v837 = vunpack.c.l.s4 1983009808
    %v838 = vunpack.c.0.s8 %v837
    %v839 = vlaneseq
    %v840 = vshrl.u32 %v839, 7
    %v841 = vsub.s32 %v838, %v840
    %v842 = vrot.slane %v828, %v841
    %v843 = vcombine.low %v835, %v842
    %v844 = vcombine.low %v222, %v223
    %v845 = vcombine.low %v224, %v225
    %v847 = vunpack.c.l.s4 1983009808
    %v848 = vunpack.c.0.s8 %v847
    %v849 = vlaneseq
    %v850 = vshrl.u32 %v849, 7
    %v851 = vsub.s32 %v848, %v850
    %v852 = vrot.slane %v844, %v851
    %v854 = vunpack.c.l.s4 1983009808
    %v855 = vunpack.c.0.s8 %v854
    %v856 = vlaneseq
    %v857 = vshrl.u32 %v856, 7
    %v858 = vsub.s32 %v855, %v857
    %v859 = vrot.slane %v845, %v858
    %v860 = vcombine.low %v852, %v859
    %v861 = vcombine.low %v226, %v227
    %v862 = vcombine.low %v228, %v229
    %v864 = vunpack.c.l.s4 1983009808
    %v865 = vunpack.c.0.s8 %v864
    %v866 = vlaneseq
    %v867 = vshrl.u32 %v866, 7
    %v868 = vsub.s32 %v865, %v867
    %v869 = vrot.slane %v861, %v868
    %v871 = vunpack.c.l.s4 1983009808
    %v872 = vunpack.c.0.s8 %v871
    %v873 = vlaneseq
    %v874 = vshrl.u32 %v873, 7
    %v875 = vsub.s32 %v872, %v874
    %v876 = vrot.slane %v862, %v875
    %v877 = vcombine.low %v869, %v876
    %v878 = vcombine.low %v230, %v231
    %v879 = vcombine.low %v232, %v233
    %v881 = vunpack.c.l.s4 1983009808
    %v882 = vunpack.c.0.s8 %v881
    %v883 = vlaneseq
    %v884 = vshrl.u32 %v883, 7
    %v885 = vsub.s32 %v882, %v884
    %v886 = vrot.slane %v878, %v885
    %v888 = vunpack.c.l.s4 1983009808
    %v889 = vunpack.c.0.s8 %v888
    %v890 = vlaneseq
    %v891 = vshrl.u32 %v890, 7
    %v892 = vsub.s32 %v889, %v891
    %v893 = vrot.slane %v879, %v892
    %v894 = vcombine.low %v886, %v893
    %v895 = vcombine.low %v234, %v235
    %v896 = vcombine.low %v236, %v237
    %v898 = vunpack.c.l.s4 1983009808
    %v899 = vunpack.c.0.s8 %v898
    %v900 = vlaneseq
    %v901 = vshrl.u32 %v900, 7
    %v902 = vsub.s32 %v899, %v901
    %v903 = vrot.slane %v895, %v902
    %v905 = vunpack.c.l.s4 1983009808
    %v906 = vunpack.c.0.s8 %v905
    %v907 = vlaneseq
    %v908 = vshrl.u32 %v907, 7
    %v909 = vsub.s32 %v906, %v908
    %v910 = vrot.slane %v896, %v909
    %v911 = vcombine.low %v903, %v910
    %v912 = vcombine.low %v238, %v239
    %v913 = vcombine.low %v240, %v241
    %v915 = vunpack.c.l.s4 1983009808
    %v916 = vunpack.c.0.s8 %v915
    %v917 = vlaneseq
    %v918 = vshrl.u32 %v917, 7
    %v919 = vsub.s32 %v916, %v918
    %v920 = vrot.slane %v912, %v919
    %v922 = vunpack.c.l.s4 1983009808
    %v923 = vunpack.c.0.s8 %v922
    %v924 = vlaneseq
    %v925 = vshrl.u32 %v924, 7
    %v926 = vsub.s32 %v923, %v925
    %v927 = vrot.slane %v913, %v926
    %v928 = vcombine.low %v920, %v927
    %v933 = vunpack.c.l.b16 %v452
    %v934 = vunpack.c.l.b16 %v453
    %v935 = vunpack.c.l.b16 %v454
    %v936 = vunpack.c.l.b16 %v455
    %v937 = vpack.c.b16 %v934, %v933
    %v938 = vpack.c.b16 %v936, %v935
    %v942 = vsel %vm308, %v809, 0
    %v945 = vsel %vm308, %v826, 0
    %v948 = vsel %vm308, %v843, 0
    %v951 = vsel %vm308, %v860, 0
    %v954 = vsel %vm308, %v877, 0
    %v957 = vsel %vm308, %v894, 0
    %v960 = vsel %vm308, %v911, 0
    %v963 = vsel %vm308, %v928, 0
    %965 = vmatprep.subr.bf16.mxu0 0
    %966 = vmatpush1.bf16.msra.mxu0 %v937
    %967 = vmatprep.subr.bf16.mxu0 0
    %968 = vmatpush1.bf16.msra.mxu0 %v938
    %969 = vmatprep.subr.bf16.mxu0 0
    %970 = vmatpush1.bf16.msra.mxu0 0
    %971 = vmatprep.subr.bf16.mxu0 0
    %972 = vmatpush1.bf16.msra.mxu0 0
    %973 = vmatprep.subr.bf16.mxu0 0
    %974 = vmatpush1.bf16.msra.mxu0 0
    %975 = vmatprep.subr.bf16.mxu0 0
    %976 = vmatpush1.bf16.msra.mxu0 0
    %977 = vmatprep.subr.bf16.mxu0 0
    %978 = vmatpush1.bf16.msra.mxu0 0
    %979 = vmatprep.subr.bf16.mxu0 0
    %980 = vmatpush1.bf16.msra.mxu0 0
    %981 = vmatprep.subr.bf16.mxu0 0
    %982 = vmatpush1.bf16.msra.mxu0 0
    %983 = vmatprep.subr.bf16.mxu0 0
    %984 = vmatpush1.bf16.msra.mxu0 0
    %985 = vmatprep.subr.bf16.mxu0 0
    %986 = vmatpush1.bf16.msra.mxu0 0
    %987 = vmatprep.subr.bf16.mxu0 0
    %988 = vmatpush1.bf16.msra.mxu0 0
    %989 = vmatprep.subr.bf16.mxu0 0
    %990 = vmatpush1.bf16.msra.mxu0 0
    %991 = vmatprep.subr.bf16.mxu0 0
    %992 = vmatpush1.bf16.msra.mxu0 0
    %993 = vmatprep.subr.bf16.mxu0 0
    %994 = vmatpush1.bf16.msra.mxu0 0
    %995 = vmatprep.subr.bf16.mxu0 0
    %996 = vmatpush1.bf16.msra.mxu0 0
    %997 = vmatprep.mubr.bf16.mxu0 0
    %998 = vmatmul.mubr.bf16.gmra.mrb[0].mxu0 %v942
    %v999 = vpop.f32.mrb[0].mxu0
    %v1000 = vadd.f32 %v699, %v999
    %v1001 = vpop.f32.mrb[0].mxu0
    %v1002 = vpop.f32.mrb[0].mxu0
    %v1003 = vadd.f32 %v702, %v1002
    %v1004 = vpop.f32.mrb[0].mxu0
    %1005 = vmatprep.mubr.bf16.mxu0 0
    %1006 = vmatmul.mubr.bf16.gmra.mrb[0].mxu0 %v945
    %v1007 = vpop.f32.mrb[0].mxu0
    %v1008 = vadd.f32 %v707, %v1007
    %v1009 = vpop.f32.mrb[0].mxu0
    %v1010 = vpop.f32.mrb[0].mxu0
    %v1011 = vadd.f32 %v710, %v1010
    %v1012 = vpop.f32.mrb[0].mxu0
    %1013 = vmatprep.mubr.bf16.mxu0 0
    %1014 = vmatmul.mubr.bf16.gmra.mrb[0].mxu0 %v948
    %v1015 = vpop.f32.mrb[0].mxu0
    %v1016 = vadd.f32 %v715, %v1015
    %v1017 = vpop.f32.mrb[0].mxu0
    %v1018 = vpop.f32.mrb[0].mxu0
    %v1019 = vadd.f32 %v718, %v1018
    %v1020 = vpop.f32.mrb[0].mxu0
    %1021 = vmatprep.mubr.bf16.mxu0 0
    %1022 = vmatmul.mubr.bf16.gmra.mrb[0].mxu0 %v951
    %v1023 = vpop.f32.mrb[0].mxu0
    %v1024 = vadd.f32 %v723, %v1023
    %v1025 = vpop.f32.mrb[0].mxu0
    %v1026 = vpop.f32.mrb[0].mxu0
    %v1027 = vadd.f32 %v726, %v1026
    %v1028 = vpop.f32.mrb[0].mxu0
    %1029 = vmatprep.mubr.bf16.mxu0 0
    %1030 = vmatmul.mubr.bf16.gmra.mrb[0].mxu0 %v954
    %v1031 = vpop.f32.mrb[0].mxu0
    %v1032 = vadd.f32 %v731, %v1031
    %v1033 = vpop.f32.mrb[0].mxu0
    %v1034 = vpop.f32.mrb[0].mxu0
    %v1035 = vadd.f32 %v734, %v1034
    %v1036 = vpop.f32.mrb[0].mxu0
    %1037 = vmatprep.mubr.bf16.mxu0 0
    %1038 = vmatmul.mubr.bf16.gmra.mrb[0].mxu0 %v957
    %v1039 = vpop.f32.mrb[0].mxu0
    %v1040 = vadd.f32 %v739, %v1039
    %v1041 = vpop.f32.mrb[0].mxu0
    %v1042 = vpop.f32.mrb[0].mxu0
    %v1043 = vadd.f32 %v742, %v1042
    %v1044 = vpop.f32.mrb[0].mxu0
    %1045 = vmatprep.mubr.bf16.mxu0 0
    %1046 = vmatmul.mubr.bf16.gmra.mrb[0].mxu0 %v960
    %v1047 = vpop.f32.mrb[0].mxu0
    %v1048 = vadd.f32 %v747, %v1047
    %v1049 = vpop.f32.mrb[0].mxu0
    %v1050 = vpop.f32.mrb[0].mxu0
    %v1051 = vadd.f32 %v750, %v1050
    %v1052 = vpop.f32.mrb[0].mxu0
    %1053 = vmatprep.mubr.bf16.mxu0 0
    %1054 = vmatmul.mubr.bf16.gmra.mrb[0].mxu0 %v963
    %v1055 = vpop.f32.mrb[0].mxu0
    %v1056 = vadd.f32 %v755, %v1055
    %v1057 = vpop.f32.mrb[0].mxu0
    %v1058 = vpop.f32.mrb[0].mxu0
    %v1059 = vadd.f32 %v758, %v1058
    %v1060 = vpop.f32.mrb[0].mxu0
    %1061 = vdwg.mxu0
    %v1062 = vld [vmem:[#allocation16] sm:$0x1]
    %v1064 = vlaneseq
    %v1065 = vshrl.u32 %v1064, 7
    %v1066 = vsub.s32 0, %v1065
    %v1067 = vrot.slane %v1062, %v1066
    %v1069 = vadd.f32 %v1000, %v1067
    %v1070 = vadd.f32 %v1003, %v1067
    %v1071 = vadd.f32 %v1008, %v1067
    %v1072 = vadd.f32 %v1011, %v1067
    %v1073 = vadd.f32 %v1016, %v1067
    %v1074 = vadd.f32 %v1019, %v1067
    %v1075 = vadd.f32 %v1024, %v1067
    %v1076 = vadd.f32 %v1027, %v1067
    %v1077 = vadd.f32 %v1032, %v1067
    %v1078 = vadd.f32 %v1035, %v1067
    %v1079 = vadd.f32 %v1040, %v1067
    %v1080 = vadd.f32 %v1043, %v1067
    %v1081 = vadd.f32 %v1048, %v1067
    %v1082 = vadd.f32 %v1051, %v1067
    %v1083 = vadd.f32 %v1056, %v1067
    %v1084 = vadd.f32 %v1059, %v1067
    %v1101 = vcombine.high %v1069, %v1069
    %v1102 = vcombine.high %v1070, %v1070
    %v1103 = vcombine.high %v1071, %v1071
    %v1104 = vcombine.high %v1072, %v1072
    %v1105 = vcombine.high %v1073, %v1073
    %v1106 = vcombine.high %v1074, %v1074
    %v1107 = vcombine.high %v1075, %v1075
    %v1108 = vcombine.high %v1076, %v1076
    %v1109 = vcombine.high %v1077, %v1077
    %v1110 = vcombine.high %v1078, %v1078
    %v1111 = vcombine.high %v1079, %v1079
    %v1112 = vcombine.high %v1080, %v1080
    %v1113 = vcombine.high %v1081, %v1081
    %v1114 = vcombine.high %v1082, %v1082
    %v1115 = vcombine.high %v1083, %v1083
    %v1116 = vcombine.high %v1084, %v1084
    %v1133 = vmul.f32 %v274, -1e+09
    %v1134 = vmul.f32 %v275, -1e+09
    %v1135 = vmul.f32 %v276, -1e+09
    %v1136 = vmul.f32 %v277, -1e+09
    %v1141 = vcombine.high %v448, %v448
    %v1143 = vunpack.c.l.s4 1966171168
    %v1144 = vunpack.c.0.s8 %v1143
    %v1145 = vlaneseq
    %v1146 = vshrl.u32 %v1145, 7
    %v1147 = vsub.s32 %v1144, %v1146
    %v1148 = vrot.slane %v448, %v1147
    %v1150 = vunpack.c.l.s4 1966171168
    %v1151 = vunpack.c.0.s8 %v1150
    %v1152 = vlaneseq
    %v1153 = vshrl.u32 %v1152, 7
    %v1154 = vsub.s32 %v1151, %v1153
    %v1155 = vrot.slane %v1141, %v1154
    %v1156 = vcombine.high %v1148, %v1148
    %v1157 = vcombine.high %v1155, %v1155
    %v1159 = vunpack.c.l.s4 1966171168
    %v1160 = vunpack.c.0.s8 %v1159
    %v1161 = vlaneseq
    %v1162 = vshrl.u32 %v1161, 7
    %v1163 = vsub.s32 %v1160, %v1162
    %v1164 = vrot.slane %v1148, %v1163
    %v1166 = vunpack.c.l.s4 1966171168
    %v1167 = vunpack.c.0.s8 %v1166
    %v1168 = vlaneseq
    %v1169 = vshrl.u32 %v1168, 7
    %v1170 = vsub.s32 %v1167, %v1169
    %v1171 = vrot.slane %v1155, %v1170
    %v1173 = vunpack.c.l.s4 1966171168
    %v1174 = vunpack.c.0.s8 %v1173
    %v1175 = vlaneseq
    %v1176 = vshrl.u32 %v1175, 7
    %v1177 = vsub.s32 %v1174, %v1176
    %v1178 = vrot.slane %v1156, %v1177
    %v1180 = vunpack.c.l.s4 1966171168
    %v1181 = vunpack.c.0.s8 %v1180
    %v1182 = vlaneseq
    %v1183 = vshrl.u32 %v1182, 7
    %v1184 = vsub.s32 %v1181, %v1183
    %v1185 = vrot.slane %v1157, %v1184
    %v1186 = vcombine.high %v1164, %v1164
    %v1187 = vcombine.high %v1171, %v1171
    %v1188 = vcombine.high %v1178, %v1178
    %v1189 = vcombine.high %v1185, %v1185
    %v1190 = vcombine.high %v449, %v449
    %v1192 = vunpack.c.l.s4 1966171168
    %v1193 = vunpack.c.0.s8 %v1192
    %v1194 = vlaneseq
    %v1195 = vshrl.u32 %v1194, 7
    %v1196 = vsub.s32 %v1193, %v1195
    %v1197 = vrot.slane %v449, %v1196
    %v1199 = vunpack.c.l.s4 1966171168
    %v1200 = vunpack.c.0.s8 %v1199
    %v1201 = vlaneseq
    %v1202 = vshrl.u32 %v1201, 7
    %v1203 = vsub.s32 %v1200, %v1202
    %v1204 = vrot.slane %v1190, %v1203
    %v1205 = vcombine.high %v1197, %v1197
    %v1206 = vcombine.high %v1204, %v1204
    %v1208 = vunpack.c.l.s4 1966171168
    %v1209 = vunpack.c.0.s8 %v1208
    %v1210 = vlaneseq
    %v1211 = vshrl.u32 %v1210, 7
    %v1212 = vsub.s32 %v1209, %v1211
    %v1213 = vrot.slane %v1197, %v1212
    %v1215 = vunpack.c.l.s4 1966171168
    %v1216 = vunpack.c.0.s8 %v1215
    %v1217 = vlaneseq
    %v1218 = vshrl.u32 %v1217, 7
    %v1219 = vsub.s32 %v1216, %v1218
    %v1220 = vrot.slane %v1204, %v1219
    %v1222 = vunpack.c.l.s4 1966171168
    %v1223 = vunpack.c.0.s8 %v1222
    %v1224 = vlaneseq
    %v1225 = vshrl.u32 %v1224, 7
    %v1226 = vsub.s32 %v1223, %v1225
    %v1227 = vrot.slane %v1205, %v1226
    %v1229 = vunpack.c.l.s4 1966171168
    %v1230 = vunpack.c.0.s8 %v1229
    %v1231 = vlaneseq
    %v1232 = vshrl.u32 %v1231, 7
    %v1233 = vsub.s32 %v1230, %v1232
    %v1234 = vrot.slane %v1206, %v1233
    %v1235 = vcombine.high %v1213, %v1213
    %v1236 = vcombine.high %v1220, %v1220
    %v1237 = vcombine.high %v1227, %v1227
    %v1238 = vcombine.high %v1234, %v1234
    %v1239 = vcombine.high %v450, %v450
    %v1241 = vunpack.c.l.s4 1966171168
    %v1242 = vunpack.c.0.s8 %v1241
    %v1243 = vlaneseq
    %v1244 = vshrl.u32 %v1243, 7
    %v1245 = vsub.s32 %v1242, %v1244
    %v1246 = vrot.slane %v450, %v1245
    %v1248 = vunpack.c.l.s4 1966171168
    %v1249 = vunpack.c.0.s8 %v1248
    %v1250 = vlaneseq
    %v1251 = vshrl.u32 %v1250, 7
    %v1252 = vsub.s32 %v1249, %v1251
    %v1253 = vrot.slane %v1239, %v1252
    %v1254 = vcombine.high %v1246, %v1246
    %v1255 = vcombine.high %v1253, %v1253
    %v1257 = vunpack.c.l.s4 1966171168
    %v1258 = vunpack.c.0.s8 %v1257
    %v1259 = vlaneseq
    %v1260 = vshrl.u32 %v1259, 7
    %v1261 = vsub.s32 %v1258, %v1260
    %v1262 = vrot.slane %v1246, %v1261
    %v1264 = vunpack.c.l.s4 1966171168
    %v1265 = vunpack.c.0.s8 %v1264
    %v1266 = vlaneseq
    %v1267 = vshrl.u32 %v1266, 7
    %v1268 = vsub.s32 %v1265, %v1267
    %v1269 = vrot.slane %v1253, %v1268
    %v1271 = vunpack.c.l.s4 1966171168
    %v1272 = vunpack.c.0.s8 %v1271
    %v1273 = vlaneseq
    %v1274 = vshrl.u32 %v1273, 7
    %v1275 = vsub.s32 %v1272, %v1274
    %v1276 = vrot.slane %v1254, %v1275
    %v1278 = vunpack.c.l.s4 1966171168
    %v1279 = vunpack.c.0.s8 %v1278
    %v1280 = vlaneseq
    %v1281 = vshrl.u32 %v1280, 7
    %v1282 = vsub.s32 %v1279, %v1281
    %v1283 = vrot.slane %v1255, %v1282
    %v1284 = vcombine.high %v1262, %v1262
    %v1285 = vcombine.high %v1269, %v1269
    %v1286 = vcombine.high %v1276, %v1276
    %v1287 = vcombine.high %v1283, %v1283
    %v1288 = vcombine.high %v451, %v451
    %v1290 = vunpack.c.l.s4 1966171168
    %v1291 = vunpack.c.0.s8 %v1290
    %v1292 = vlaneseq
    %v1293 = vshrl.u32 %v1292, 7
    %v1294 = vsub.s32 %v1291, %v1293
    %v1295 = vrot.slane %v451, %v1294
    %v1297 = vunpack.c.l.s4 1966171168
    %v1298 = vunpack.c.0.s8 %v1297
    %v1299 = vlaneseq
    %v1300 = vshrl.u32 %v1299, 7
    %v1301 = vsub.s32 %v1298, %v1300
    %v1302 = vrot.slane %v1288, %v1301
    %v1303 = vcombine.high %v1295, %v1295
    %v1304 = vcombine.high %v1302, %v1302
    %v1306 = vunpack.c.l.s4 1966171168
    %v1307 = vunpack.c.0.s8 %v1306
    %v1308 = vlaneseq
    %v1309 = vshrl.u32 %v1308, 7
    %v1310 = vsub.s32 %v1307, %v1309
    %v1311 = vrot.slane %v1295, %v1310
    %v1313 = vunpack.c.l.s4 1966171168
    %v1314 = vunpack.c.0.s8 %v1313
    %v1315 = vlaneseq
    %v1316 = vshrl.u32 %v1315, 7
    %v1317 = vsub.s32 %v1314, %v1316
    %v1318 = vrot.slane %v1302, %v1317
    %v1320 = vunpack.c.l.s4 1966171168
    %v1321 = vunpack.c.0.s8 %v1320
    %v1322 = vlaneseq
    %v1323 = vshrl.u32 %v1322, 7
    %v1324 = vsub.s32 %v1321, %v1323
    %v1325 = vrot.slane %v1303, %v1324
    %v1327 = vunpack.c.l.s4 1966171168
    %v1328 = vunpack.c.0.s8 %v1327
    %v1329 = vlaneseq
    %v1330 = vshrl.u32 %v1329, 7
    %v1331 = vsub.s32 %v1328, %v1330
    %v1332 = vrot.slane %v1304, %v1331
    %v1333 = vcombine.high %v1311, %v1311
    %v1334 = vcombine.high %v1318, %v1318
    %v1335 = vcombine.high %v1325, %v1325
    %v1336 = vcombine.high %v1332, %v1332
    %v1337 = vlaneseq
    %v1338 = vshrl.u32 %v1337, 7
    %v1339 = vsub.s32 0, %v1338
    %v1340 = vrot.slane %v1164, %v1339
    %v1341 = vlaneseq
    %v1342 = vshrl.u32 %v1341, 7
    %v1343 = vsub.s32 0, %v1342
    %v1344 = vrot.slane %v1178, %v1343
    %v1345 = vlaneseq
    %v1346 = vshrl.u32 %v1345, 7
    %v1347 = vsub.s32 0, %v1346
    %v1348 = vrot.slane %v1186, %v1347
    %v1349 = vlaneseq
    %v1350 = vshrl.u32 %v1349, 7
    %v1351 = vsub.s32 0, %v1350
    %v1352 = vrot.slane %v1188, %v1351
    %v1353 = vlaneseq
    %v1354 = vshrl.u32 %v1353, 7
    %v1355 = vsub.s32 0, %v1354
    %v1356 = vrot.slane %v1171, %v1355
    %v1357 = vlaneseq
    %v1358 = vshrl.u32 %v1357, 7
    %v1359 = vsub.s32 0, %v1358
    %v1360 = vrot.slane %v1185, %v1359
    %v1361 = vlaneseq
    %v1362 = vshrl.u32 %v1361, 7
    %v1363 = vsub.s32 0, %v1362
    %v1364 = vrot.slane %v1187, %v1363
    %v1365 = vlaneseq
    %v1366 = vshrl.u32 %v1365, 7
    %v1367 = vsub.s32 0, %v1366
    %v1368 = vrot.slane %v1189, %v1367
    %v1369 = vlaneseq
    %v1370 = vshrl.u32 %v1369, 7
    %v1371 = vsub.s32 0, %v1370
    %v1372 = vrot.slane %v1213, %v1371
    %v1373 = vlaneseq
    %v1374 = vshrl.u32 %v1373, 7
    %v1375 = vsub.s32 0, %v1374
    %v1376 = vrot.slane %v1227, %v1375
    %v1377 = vlaneseq
    %v1378 = vshrl.u32 %v1377, 7
    %v1379 = vsub.s32 0, %v1378
    %v1380 = vrot.slane %v1235, %v1379
    %v1381 = vlaneseq
    %v1382 = vshrl.u32 %v1381, 7
    %v1383 = vsub.s32 0, %v1382
    %v1384 = vrot.slane %v1237, %v1383
    %v1385 = vlaneseq
    %v1386 = vshrl.u32 %v1385, 7
    %v1387 = vsub.s32 0, %v1386
    %v1388 = vrot.slane %v1220, %v1387
    %v1389 = vlaneseq
    %v1390 = vshrl.u32 %v1389, 7
    %v1391 = vsub.s32 0, %v1390
    %v1392 = vrot.slane %v1234, %v1391
    %v1393 = vlaneseq
    %v1394 = vshrl.u32 %v1393, 7
    %v1395 = vsub.s32 0, %v1394
    %v1396 = vrot.slane %v1236, %v1395
    %v1397 = vlaneseq
    %v1398 = vshrl.u32 %v1397, 7
    %v1399 = vsub.s32 0, %v1398
    %v1400 = vrot.slane %v1238, %v1399
    %v1401 = vlaneseq
    %v1402 = vshrl.u32 %v1401, 7
    %v1403 = vsub.s32 0, %v1402
    %v1404 = vrot.slane %v1262, %v1403
    %v1405 = vlaneseq
    %v1406 = vshrl.u32 %v1405, 7
    %v1407 = vsub.s32 0, %v1406
    %v1408 = vrot.slane %v1276, %v1407
    %v1409 = vlaneseq
    %v1410 = vshrl.u32 %v1409, 7
    %v1411 = vsub.s32 0, %v1410
    %v1412 = vrot.slane %v1284, %v1411
    %v1413 = vlaneseq
    %v1414 = vshrl.u32 %v1413, 7
    %v1415 = vsub.s32 0, %v1414
    %v1416 = vrot.slane %v1286, %v1415
    %v1417 = vlaneseq
    %v1418 = vshrl.u32 %v1417, 7
    %v1419 = vsub.s32 0, %v1418
    %v1420 = vrot.slane %v1269, %v1419
    %v1421 = vlaneseq
    %v1422 = vshrl.u32 %v1421, 7
    %v1423 = vsub.s32 0, %v1422
    %v1424 = vrot.slane %v1283, %v1423
    %v1425 = vlaneseq
    %v1426 = vshrl.u32 %v1425, 7
    %v1427 = vsub.s32 0, %v1426
    %v1428 = vrot.slane %v1285, %v1427
    %v1429 = vlaneseq
    %v1430 = vshrl.u32 %v1429, 7
    %v1431 = vsub.s32 0, %v1430
    %v1432 = vrot.slane %v1287, %v1431
    %v1433 = vlaneseq
    %v1434 = vshrl.u32 %v1433, 7
    %v1435 = vsub.s32 0, %v1434
    %v1436 = vrot.slane %v1311, %v1435
    %v1437 = vlaneseq
    %v1438 = vshrl.u32 %v1437, 7
    %v1439 = vsub.s32 0, %v1438
    %v1440 = vrot.slane %v1325, %v1439
    %v1441 = vlaneseq
    %v1442 = vshrl.u32 %v1441, 7
    %v1443 = vsub.s32 0, %v1442
    %v1444 = vrot.slane %v1333, %v1443
    %v1445 = vlaneseq
    %v1446 = vshrl.u32 %v1445, 7
    %v1447 = vsub.s32 0, %v1446
    %v1448 = vrot.slane %v1335, %v1447
    %v1449 = vlaneseq
    %v1450 = vshrl.u32 %v1449, 7
    %v1451 = vsub.s32 0, %v1450
    %v1452 = vrot.slane %v1318, %v1451
    %v1453 = vlaneseq
    %v1454 = vshrl.u32 %v1453, 7
    %v1455 = vsub.s32 0, %v1454
    %v1456 = vrot.slane %v1332, %v1455
    %v1457 = vlaneseq
    %v1458 = vshrl.u32 %v1457, 7
    %v1459 = vsub.s32 0, %v1458
    %v1460 = vrot.slane %v1334, %v1459
    %v1461 = vlaneseq
    %v1462 = vshrl.u32 %v1461, 7
    %v1463 = vsub.s32 0, %v1462
    %v1464 = vrot.slane %v1336, %v1463
    %v1497 = vmul.f32 %v1340, %v1069
    %v1498 = vmul.f32 %v1344, %v1101
    %v1499 = vmul.f32 %v1348, %v1070
    %v1500 = vmul.f32 %v1352, %v1102
    %v1501 = vmul.f32 %v1356, %v1071
    %v1502 = vmul.f32 %v1360, %v1103
    %v1503 = vmul.f32 %v1364, %v1072
    %v1504 = vmul.f32 %v1368, %v1104
    %v1505 = vmul.f32 %v1372, %v1073
    %v1506 = vmul.f32 %v1376, %v1105
    %v1507 = vmul.f32 %v1380, %v1074
    %v1508 = vmul.f32 %v1384, %v1106
    %v1509 = vmul.f32 %v1388, %v1075
    %v1510 = vmul.f32 %v1392, %v1107
    %v1511 = vmul.f32 %v1396, %v1076
    %v1512 = vmul.f32 %v1400, %v1108
    %v1513 = vmul.f32 %v1404, %v1077
    %v1514 = vmul.f32 %v1408, %v1109
    %v1515 = vmul.f32 %v1412, %v1078
    %v1516 = vmul.f32 %v1416, %v1110
    %v1517 = vmul.f32 %v1420, %v1079
    %v1518 = vmul.f32 %v1424, %v1111
    %v1519 = vmul.f32 %v1428, %v1080
    %v1520 = vmul.f32 %v1432, %v1112
    %v1521 = vmul.f32 %v1436, %v1081
    %v1522 = vmul.f32 %v1440, %v1113
    %v1523 = vmul.f32 %v1444, %v1082
    %v1524 = vmul.f32 %v1448, %v1114
    %v1525 = vmul.f32 %v1452, %v1083
    %v1526 = vmul.f32 %v1456, %v1115
    %v1527 = vmul.f32 %v1460, %v1084
    %v1528 = vmul.f32 %v1464, %v1116
    %vm1529 = vcmask 257024
    %v1530 = vsel %vm1529, %v1497, 0.0
    %1531 = vadd.xlane.f32.xlu0 %v1530
    %v1532 = vpop.xlane.xlu0 %1531
    %v1533 = vsel %vm1529, %v1498, 0.0
    %1534 = vadd.xlane.f32.xlu0 %v1533
    %v1535 = vpop.xlane.xlu0 %1534
    %v1536 = vsel %vm1529, %v1499, 0.0
    %1537 = vadd.xlane.f32.xlu0 %v1536
    %v1538 = vpop.xlane.xlu0 %1537
    %v1539 = vsel %vm1529, %v1500, 0.0
    %1540 = vadd.xlane.f32.xlu0 %v1539
    %v1541 = vpop.xlane.xlu0 %1540
    %v1542 = vsel %vm1529, %v1501, 0.0
    %1543 = vadd.xlane.f32.xlu0 %v1542
    %v1544 = vpop.xlane.xlu0 %1543
    %v1545 = vsel %vm1529, %v1502, 0.0
    %1546 = vadd.xlane.f32.xlu0 %v1545
    %v1547 = vpop.xlane.xlu0 %1546
    %v1548 = vsel %vm1529, %v1503, 0.0
    %1549 = vadd.xlane.f32.xlu0 %v1548
    %v1550 = vpop.xlane.xlu0 %1549
    %v1551 = vsel %vm1529, %v1504, 0.0
    %1552 = vadd.xlane.f32.xlu0 %v1551
    %v1553 = vpop.xlane.xlu0 %1552
    %v1554 = vsel %vm1529, %v1505, 0.0
    %1555 = vadd.xlane.f32.xlu0 %v1554
    %v1556 = vpop.xlane.xlu0 %1555
    %v1557 = vsel %vm1529, %v1506, 0.0
    %1558 = vadd.xlane.f32.xlu0 %v1557
    %v1559 = vpop.xlane.xlu0 %1558
    %v1560 = vsel %vm1529, %v1507, 0.0
    %1561 = vadd.xlane.f32.xlu0 %v1560
    %v1562 = vpop.xlane.xlu0 %1561
    %v1563 = vsel %vm1529, %v1508, 0.0
    %1564 = vadd.xlane.f32.xlu0 %v1563
    %v1565 = vpop.xlane.xlu0 %1564
    %v1566 = vsel %vm1529, %v1509, 0.0
    %1567 = vadd.xlane.f32.xlu0 %v1566
    %v1568 = vpop.xlane.xlu0 %1567
    %v1569 = vsel %vm1529, %v1510, 0.0
    %1570 = vadd.xlane.f32.xlu0 %v1569
    %v1571 = vpop.xlane.xlu0 %1570
    %v1572 = vsel %vm1529, %v1511, 0.0
    %1573 = vadd.xlane.f32.xlu0 %v1572
    %v1574 = vpop.xlane.xlu0 %1573
    %v1575 = vsel %vm1529, %v1512, 0.0
    %1576 = vadd.xlane.f32.xlu0 %v1575
    %v1577 = vpop.xlane.xlu0 %1576
    %v1578 = vsel %vm1529, %v1513, 0.0
    %1579 = vadd.xlane.f32.xlu0 %v1578
    %v1580 = vpop.xlane.xlu0 %1579
    %v1581 = vsel %vm1529, %v1514, 0.0
    %1582 = vadd.xlane.f32.xlu0 %v1581
    %v1583 = vpop.xlane.xlu0 %1582
    %v1584 = vsel %vm1529, %v1515, 0.0
    %1585 = vadd.xlane.f32.xlu0 %v1584
    %v1586 = vpop.xlane.xlu0 %1585
    %v1587 = vsel %vm1529, %v1516, 0.0
    %1588 = vadd.xlane.f32.xlu0 %v1587
    %v1589 = vpop.xlane.xlu0 %1588
    %v1590 = vsel %vm1529, %v1517, 0.0
    %1591 = vadd.xlane.f32.xlu0 %v1590
    %v1592 = vpop.xlane.xlu0 %1591
    %v1593 = vsel %vm1529, %v1518, 0.0
    %1594 = vadd.xlane.f32.xlu0 %v1593
    %v1595 = vpop.xlane.xlu0 %1594
    %v1596 = vsel %vm1529, %v1519, 0.0
    %1597 = vadd.xlane.f32.xlu0 %v1596
    %v1598 = vpop.xlane.xlu0 %1597
    %v1599 = vsel %vm1529, %v1520, 0.0
    %1600 = vadd.xlane.f32.xlu0 %v1599
    %v1601 = vpop.xlane.xlu0 %1600
    %v1602 = vsel %vm1529, %v1521, 0.0
    %1603 = vadd.xlane.f32.xlu0 %v1602
    %v1604 = vpop.xlane.xlu0 %1603
    %v1605 = vsel %vm1529, %v1522, 0.0
    %1606 = vadd.xlane.f32.xlu0 %v1605
    %v1607 = vpop.xlane.xlu0 %1606
    %v1608 = vsel %vm1529, %v1523, 0.0
    %1609 = vadd.xlane.f32.xlu0 %v1608
    %v1610 = vpop.xlane.xlu0 %1609
    %v1611 = vsel %vm1529, %v1524, 0.0
    %1612 = vadd.xlane.f32.xlu0 %v1611
    %v1613 = vpop.xlane.xlu0 %1612
    %v1614 = vsel %vm1529, %v1525, 0.0
    %1615 = vadd.xlane.f32.xlu0 %v1614
    %v1616 = vpop.xlane.xlu0 %1615
    %v1617 = vsel %vm1529, %v1526, 0.0
    %1618 = vadd.xlane.f32.xlu0 %v1617
    %v1619 = vpop.xlane.xlu0 %1618
    %v1620 = vsel %vm1529, %v1527, 0.0
    %1621 = vadd.xlane.f32.xlu0 %v1620
    %v1622 = vpop.xlane.xlu0 %1621
    %v1623 = vsel %vm1529, %v1528, 0.0
    %1624 = vadd.xlane.f32.xlu0 %v1623
    %v1625 = vpop.xlane.xlu0 %1624
    %v1630 = vlaneseq
    %v1631 = vshrl.u32 %v1630, 7
    %v1632 = vsub.s32 0, %v1631
    %v1633 = vrot.slane %v1133, %v1632
    %1635 = vbcast.lane.b32.xlu0 %v1633, 256
    %v1636 = vpop.permute.xlu0 %1635
    %v1637 = vlaneseq
    %v1638 = vshrl.u32 %v1637, 7
    %v1639 = vsub.s32 1, %v1638
    %v1640 = vrot.slane %v1133, %v1639
    %1642 = vbcast.lane.b32.xlu0 %v1640, 256
    %v1643 = vpop.permute.xlu0 %1642
    %v1644 = vlaneseq
    %v1645 = vshrl.u32 %v1644, 7
    %v1646 = vsub.s32 2, %v1645
    %v1647 = vrot.slane %v1133, %v1646
    %1649 = vbcast.lane.b32.xlu0 %v1647, 256
    %v1650 = vpop.permute.xlu0 %1649
    %v1651 = vlaneseq
    %v1652 = vshrl.u32 %v1651, 7
    %v1653 = vsub.s32 3, %v1652
    %v1654 = vrot.slane %v1133, %v1653
    %1656 = vbcast.lane.b32.xlu0 %v1654, 256
    %v1657 = vpop.permute.xlu0 %1656
    %v1658 = vlaneseq
    %v1659 = vshrl.u32 %v1658, 7
    %v1660 = vsub.s32 4, %v1659
    %v1661 = vrot.slane %v1133, %v1660
    %1663 = vbcast.lane.b32.xlu0 %v1661, 256
    %v1664 = vpop.permute.xlu0 %1663
    %v1665 = vlaneseq
    %v1666 = vshrl.u32 %v1665, 7
    %v1667 = vsub.s32 5, %v1666
    %v1668 = vrot.slane %v1133, %v1667
    %1670 = vbcast.lane.b32.xlu0 %v1668, 256
    %v1671 = vpop.permute.xlu0 %1670
    %v1672 = vlaneseq
    %v1673 = vshrl.u32 %v1672, 7
    %v1674 = vsub.s32 6, %v1673
    %v1675 = vrot.slane %v1133, %v1674
    %1677 = vbcast.lane.b32.xlu0 %v1675, 256
    %v1678 = vpop.permute.xlu0 %1677
    %v1679 = vlaneseq
    %v1680 = vshrl.u32 %v1679, 7
    %v1681 = vsub.s32 7, %v1680
    %v1682 = vrot.slane %v1133, %v1681
    %1684 = vbcast.lane.b32.xlu0 %v1682, 256
    %v1685 = vpop.permute.xlu0 %1684
    %v1686 = vlaneseq
    %v1687 = vshrl.u32 %v1686, 7
    %v1688 = vsub.s32 0, %v1687
    %v1689 = vrot.slane %v1134, %v1688
    %1691 = vbcast.lane.b32.xlu0 %v1689, 256
    %v1692 = vpop.permute.xlu0 %1691
    %v1693 = vlaneseq
    %v1694 = vshrl.u32 %v1693, 7
    %v1695 = vsub.s32 1, %v1694
    %v1696 = vrot.slane %v1134, %v1695
    %1698 = vbcast.lane.b32.xlu0 %v1696, 256
    %v1699 = vpop.permute.xlu0 %1698
    %v1700 = vlaneseq
    %v1701 = vshrl.u32 %v1700, 7
    %v1702 = vsub.s32 2, %v1701
    %v1703 = vrot.slane %v1134, %v1702
    %1705 = vbcast.lane.b32.xlu0 %v1703, 256
    %v1706 = vpop.permute.xlu0 %1705
    %v1707 = vlaneseq
    %v1708 = vshrl.u32 %v1707, 7
    %v1709 = vsub.s32 3, %v1708
    %v1710 = vrot.slane %v1134, %v1709
    %1712 = vbcast.lane.b32.xlu0 %v1710, 256
    %v1713 = vpop.permute.xlu0 %1712
    %v1714 = vlaneseq
    %v1715 = vshrl.u32 %v1714, 7
    %v1716 = vsub.s32 4, %v1715
    %v1717 = vrot.slane %v1134, %v1716
    %1719 = vbcast.lane.b32.xlu0 %v1717, 256
    %v1720 = vpop.permute.xlu0 %1719
    %v1721 = vlaneseq
    %v1722 = vshrl.u32 %v1721, 7
    %v1723 = vsub.s32 5, %v1722
    %v1724 = vrot.slane %v1134, %v1723
    %1726 = vbcast.lane.b32.xlu0 %v1724, 256
    %v1727 = vpop.permute.xlu0 %1726
    %v1728 = vlaneseq
    %v1729 = vshrl.u32 %v1728, 7
    %v1730 = vsub.s32 6, %v1729
    %v1731 = vrot.slane %v1134, %v1730
    %1733 = vbcast.lane.b32.xlu0 %v1731, 256
    %v1734 = vpop.permute.xlu0 %1733
    %v1735 = vlaneseq
    %v1736 = vshrl.u32 %v1735, 7
    %v1737 = vsub.s32 7, %v1736
    %v1738 = vrot.slane %v1134, %v1737
    %1740 = vbcast.lane.b32.xlu0 %v1738, 256
    %v1741 = vpop.permute.xlu0 %1740
    %v1742 = vlaneseq
    %v1743 = vshrl.u32 %v1742, 7
    %v1744 = vsub.s32 0, %v1743
    %v1745 = vrot.slane %v1135, %v1744
    %1747 = vbcast.lane.b32.xlu0 %v1745, 256
    %v1748 = vpop.permute.xlu0 %1747
    %v1749 = vlaneseq
    %v1750 = vshrl.u32 %v1749, 7
    %v1751 = vsub.s32 1, %v1750
    %v1752 = vrot.slane %v1135, %v1751
    %1754 = vbcast.lane.b32.xlu0 %v1752, 256
    %v1755 = vpop.permute.xlu0 %1754
    %v1756 = vlaneseq
    %v1757 = vshrl.u32 %v1756, 7
    %v1758 = vsub.s32 2, %v1757
    %v1759 = vrot.slane %v1135, %v1758
    %1761 = vbcast.lane.b32.xlu0 %v1759, 256
    %v1762 = vpop.permute.xlu0 %1761
    %v1763 = vlaneseq
    %v1764 = vshrl.u32 %v1763, 7
    %v1765 = vsub.s32 3, %v1764
    %v1766 = vrot.slane %v1135, %v1765
    %1768 = vbcast.lane.b32.xlu0 %v1766, 256
    %v1769 = vpop.permute.xlu0 %1768
    %v1770 = vlaneseq
    %v1771 = vshrl.u32 %v1770, 7
    %v1772 = vsub.s32 4, %v1771
    %v1773 = vrot.slane %v1135, %v1772
    %1775 = vbcast.lane.b32.xlu0 %v1773, 256
    %v1776 = vpop.permute.xlu0 %1775
    %v1777 = vlaneseq
    %v1778 = vshrl.u32 %v1777, 7
    %v1779 = vsub.s32 5, %v1778
    %v1780 = vrot.slane %v1135, %v1779
    %1782 = vbcast.lane.b32.xlu0 %v1780, 256
    %v1783 = vpop.permute.xlu0 %1782
    %v1784 = vlaneseq
    %v1785 = vshrl.u32 %v1784, 7
    %v1786 = vsub.s32 6, %v1785
    %v1787 = vrot.slane %v1135, %v1786
    %1789 = vbcast.lane.b32.xlu0 %v1787, 256
    %v1790 = vpop.permute.xlu0 %1789
    %v1791 = vlaneseq
    %v1792 = vshrl.u32 %v1791, 7
    %v1793 = vsub.s32 7, %v1792
    %v1794 = vrot.slane %v1135, %v1793
    %1796 = vbcast.lane.b32.xlu0 %v1794, 256
    %v1797 = vpop.permute.xlu0 %1796
    %v1798 = vlaneseq
    %v1799 = vshrl.u32 %v1798, 7
    %v1800 = vsub.s32 0, %v1799
    %v1801 = vrot.slane %v1136, %v1800
    %1803 = vbcast.lane.b32.xlu0 %v1801, 256
    %v1804 = vpop.permute.xlu0 %1803
    %v1805 = vlaneseq
    %v1806 = vshrl.u32 %v1805, 7
    %v1807 = vsub.s32 1, %v1806
    %v1808 = vrot.slane %v1136, %v1807
    %1810 = vbcast.lane.b32.xlu0 %v1808, 256
    %v1811 = vpop.permute.xlu0 %1810
    %v1812 = vlaneseq
    %v1813 = vshrl.u32 %v1812, 7
    %v1814 = vsub.s32 2, %v1813
    %v1815 = vrot.slane %v1136, %v1814
    %1817 = vbcast.lane.b32.xlu0 %v1815, 256
    %v1818 = vpop.permute.xlu0 %1817
    %v1819 = vlaneseq
    %v1820 = vshrl.u32 %v1819, 7
    %v1821 = vsub.s32 3, %v1820
    %v1822 = vrot.slane %v1136, %v1821
    %1824 = vbcast.lane.b32.xlu0 %v1822, 256
    %v1825 = vpop.permute.xlu0 %1824
    %v1826 = vlaneseq
    %v1827 = vshrl.u32 %v1826, 7
    %v1828 = vsub.s32 4, %v1827
    %v1829 = vrot.slane %v1136, %v1828
    %1831 = vbcast.lane.b32.xlu0 %v1829, 256
    %v1832 = vpop.permute.xlu0 %1831
    %v1833 = vlaneseq
    %v1834 = vshrl.u32 %v1833, 7
    %v1835 = vsub.s32 5, %v1834
    %v1836 = vrot.slane %v1136, %v1835
    %1838 = vbcast.lane.b32.xlu0 %v1836, 256
    %v1839 = vpop.permute.xlu0 %1838
    %v1840 = vlaneseq
    %v1841 = vshrl.u32 %v1840, 7
    %v1842 = vsub.s32 6, %v1841
    %v1843 = vrot.slane %v1136, %v1842
    %1845 = vbcast.lane.b32.xlu0 %v1843, 256
    %v1846 = vpop.permute.xlu0 %1845
    %v1847 = vlaneseq
    %v1848 = vshrl.u32 %v1847, 7
    %v1849 = vsub.s32 7, %v1848
    %v1850 = vrot.slane %v1136, %v1849
    %1852 = vbcast.lane.b32.xlu0 %v1850, 256
    %v1853 = vpop.permute.xlu0 %1852
    %v1886 = vadd.f32 %v1532, %v1636
    %v1887 = vadd.f32 %v1535, %v1643
    %v1888 = vadd.f32 %v1538, %v1650
    %v1889 = vadd.f32 %v1541, %v1657
    %v1890 = vadd.f32 %v1544, %v1664
    %v1891 = vadd.f32 %v1547, %v1671
    %v1892 = vadd.f32 %v1550, %v1678
    %v1893 = vadd.f32 %v1553, %v1685
    %v1894 = vadd.f32 %v1556, %v1692
    %v1895 = vadd.f32 %v1559, %v1699
    %v1896 = vadd.f32 %v1562, %v1706
    %v1897 = vadd.f32 %v1565, %v1713
    %v1898 = vadd.f32 %v1568, %v1720
    %v1899 = vadd.f32 %v1571, %v1727
    %v1900 = vadd.f32 %v1574, %v1734
    %v1901 = vadd.f32 %v1577, %v1741
    %v1902 = vadd.f32 %v1580, %v1748
    %v1903 = vadd.f32 %v1583, %v1755
    %v1904 = vadd.f32 %v1586, %v1762
    %v1905 = vadd.f32 %v1589, %v1769
    %v1906 = vadd.f32 %v1592, %v1776
    %v1907 = vadd.f32 %v1595, %v1783
    %v1908 = vadd.f32 %v1598, %v1790
    %v1909 = vadd.f32 %v1601, %v1797
    %v1910 = vadd.f32 %v1604, %v1804
    %v1911 = vadd.f32 %v1607, %v1811
    %v1912 = vadd.f32 %v1610, %v1818
    %v1913 = vadd.f32 %v1613, %v1825
    %v1914 = vadd.f32 %v1616, %v1832
    %v1915 = vadd.f32 %v1619, %v1839
    %v1916 = vadd.f32 %v1622, %v1846
    %v1917 = vadd.f32 %v1625, %v1853
    %1950 = vset.pattern.permute.xlu0 0
    %1951 = vperm.xlu0 %1950, %v1886
    %v1952 = vpop.permute.xlu0 %1951
    %1953 = vset.pattern.permute.xlu0 0
    %1954 = vperm.xlu0 %1953, %v1887
    %v1955 = vpop.permute.xlu0 %1954
    %1956 = vset.pattern.permute.xlu0 0
    %1957 = vperm.xlu0 %1956, %v1888
    %v1958 = vpop.permute.xlu0 %1957
    %1959 = vset.pattern.permute.xlu0 0
    %1960 = vperm.xlu0 %1959, %v1889
    %v1961 = vpop.permute.xlu0 %1960
    %1962 = vset.pattern.permute.xlu0 0
    %1963 = vperm.xlu0 %1962, %v1890
    %v1964 = vpop.permute.xlu0 %1963
    %1965 = vset.pattern.permute.xlu0 0
    %1966 = vperm.xlu0 %1965, %v1891
    %v1967 = vpop.permute.xlu0 %1966
    %1968 = vset.pattern.permute.xlu0 0
    %1969 = vperm.xlu0 %1968, %v1892
    %v1970 = vpop.permute.xlu0 %1969
    %1971 = vset.pattern.permute.xlu0 0
    %1972 = vperm.xlu0 %1971, %v1893
    %v1973 = vpop.permute.xlu0 %1972
    %1974 = vset.pattern.permute.xlu0 0
    %1975 = vperm.xlu0 %1974, %v1894
    %v1976 = vpop.permute.xlu0 %1975
    %1977 = vset.pattern.permute.xlu0 0
    %1978 = vperm.xlu0 %1977, %v1895
    %v1979 = vpop.permute.xlu0 %1978
    %1980 = vset.pattern.permute.xlu0 0
    %1981 = vperm.xlu0 %1980, %v1896
    %v1982 = vpop.permute.xlu0 %1981
    %1983 = vset.pattern.permute.xlu0 0
    %1984 = vperm.xlu0 %1983, %v1897
    %v1985 = vpop.permute.xlu0 %1984
    %1986 = vset.pattern.permute.xlu0 0
    %1987 = vperm.xlu0 %1986, %v1898
    %v1988 = vpop.permute.xlu0 %1987
    %1989 = vset.pattern.permute.xlu0 0
    %1990 = vperm.xlu0 %1989, %v1899
    %v1991 = vpop.permute.xlu0 %1990
    %1992 = vset.pattern.permute.xlu0 0
    %1993 = vperm.xlu0 %1992, %v1900
    %v1994 = vpop.permute.xlu0 %1993
    %1995 = vset.pattern.permute.xlu0 0
    %1996 = vperm.xlu0 %1995, %v1901
    %v1997 = vpop.permute.xlu0 %1996
    %1998 = vset.pattern.permute.xlu0 0
    %1999 = vperm.xlu0 %1998, %v1902
    %v2000 = vpop.permute.xlu0 %1999
    %2001 = vset.pattern.permute.xlu0 0
    %2002 = vperm.xlu0 %2001, %v1903
    %v2003 = vpop.permute.xlu0 %2002
    %2004 = vset.pattern.permute.xlu0 0
    %2005 = vperm.xlu0 %2004, %v1904
    %v2006 = vpop.permute.xlu0 %2005
    %2007 = vset.pattern.permute.xlu0 0
    %2008 = vperm.xlu0 %2007, %v1905
    %v2009 = vpop.permute.xlu0 %2008
    %2010 = vset.pattern.permute.xlu0 0
    %2011 = vperm.xlu0 %2010, %v1906
    %v2012 = vpop.permute.xlu0 %2011
    %2013 = vset.pattern.permute.xlu0 0
    %2014 = vperm.xlu0 %2013, %v1907
    %v2015 = vpop.permute.xlu0 %2014
    %2016 = vset.pattern.permute.xlu0 0
    %2017 = vperm.xlu0 %2016, %v1908
    %v2018 = vpop.permute.xlu0 %2017
    %2019 = vset.pattern.permute.xlu0 0
    %2020 = vperm.xlu0 %2019, %v1909
    %v2021 = vpop.permute.xlu0 %2020
    %2022 = vset.pattern.permute.xlu0 0
    %2023 = vperm.xlu0 %2022, %v1910
    %v2024 = vpop.permute.xlu0 %2023
    %2025 = vset.pattern.permute.xlu0 0
    %2026 = vperm.xlu0 %2025, %v1911
    %v2027 = vpop.permute.xlu0 %2026
    %2028 = vset.pattern.permute.xlu0 0
    %2029 = vperm.xlu0 %2028, %v1912
    %v2030 = vpop.permute.xlu0 %2029
    %2031 = vset.pattern.permute.xlu0 0
    %2032 = vperm.xlu0 %2031, %v1913
    %v2033 = vpop.permute.xlu0 %2032
    %2034 = vset.pattern.permute.xlu0 0
    %2035 = vperm.xlu0 %2034, %v1914
    %v2036 = vpop.permute.xlu0 %2035
    %2037 = vset.pattern.permute.xlu0 0
    %2038 = vperm.xlu0 %2037, %v1915
    %v2039 = vpop.permute.xlu0 %2038
    %2040 = vset.pattern.permute.xlu0 0
    %2041 = vperm.xlu0 %2040, %v1916
    %v2042 = vpop.permute.xlu0 %2041
    %2043 = vset.pattern.permute.xlu0 0
    %2044 = vperm.xlu0 %2043, %v1917
    %v2045 = vpop.permute.xlu0 %2044
    %v2046 = vlaneseq
    %v2047 = vand.u32 %v2046, 127
    %v2048 = vlaneseq
    %v2049 = vshrl.u32 %v2048, 7
    %v2050 = vsub.s32 %v2047, %v2049
    %v2051 = vrot.slane %v1952, %v2050
    %v2052 = vlaneseq
    %v2053 = vshrl.u32 %v2052, 7
    %v2054 = vsub.s32 %v2047, %v2053
    %v2055 = vrot.slane %v1955, %v2054
    %v2056 = vlaneseq
    %v2057 = vshrl.u32 %v2056, 7
    %v2058 = vsub.s32 %v2047, %v2057
    %v2059 = vrot.slane %v1958, %v2058
    %v2060 = vlaneseq
    %v2061 = vshrl.u32 %v2060, 7
    %v2062 = vsub.s32 %v2047, %v2061
    %v2063 = vrot.slane %v1961, %v2062
    %v2064 = vlaneseq
    %v2065 = vshrl.u32 %v2064, 7
    %v2066 = vsub.s32 %v2047, %v2065
    %v2067 = vrot.slane %v1964, %v2066
    %v2068 = vlaneseq
    %v2069 = vshrl.u32 %v2068, 7
    %v2070 = vsub.s32 %v2047, %v2069
    %v2071 = vrot.slane %v1967, %v2070
    %v2072 = vlaneseq
    %v2073 = vshrl.u32 %v2072, 7
    %v2074 = vsub.s32 %v2047, %v2073
    %v2075 = vrot.slane %v1970, %v2074
    %v2076 = vlaneseq
    %v2077 = vshrl.u32 %v2076, 7
    %v2078 = vsub.s32 %v2047, %v2077
    %v2079 = vrot.slane %v1973, %v2078
    %v2080 = vlaneseq
    %v2081 = vshrl.u32 %v2080, 7
    %v2082 = vsub.s32 %v2047, %v2081
    %v2083 = vrot.slane %v1976, %v2082
    %v2084 = vlaneseq
    %v2085 = vshrl.u32 %v2084, 7
    %v2086 = vsub.s32 %v2047, %v2085
    %v2087 = vrot.slane %v1979, %v2086
    %v2088 = vlaneseq
    %v2089 = vshrl.u32 %v2088, 7
    %v2090 = vsub.s32 %v2047, %v2089
    %v2091 = vrot.slane %v1982, %v2090
    %v2092 = vlaneseq
    %v2093 = vshrl.u32 %v2092, 7
    %v2094 = vsub.s32 %v2047, %v2093
    %v2095 = vrot.slane %v1985, %v2094
    %v2096 = vlaneseq
    %v2097 = vshrl.u32 %v2096, 7
    %v2098 = vsub.s32 %v2047, %v2097
    %v2099 = vrot.slane %v1988, %v2098
    %v2100 = vlaneseq
    %v2101 = vshrl.u32 %v2100, 7
    %v2102 = vsub.s32 %v2047, %v2101
    %v2103 = vrot.slane %v1991, %v2102
    %v2104 = vlaneseq
    %v2105 = vshrl.u32 %v2104, 7
    %v2106 = vsub.s32 %v2047, %v2105
    %v2107 = vrot.slane %v1994, %v2106
    %v2108 = vlaneseq
    %v2109 = vshrl.u32 %v2108, 7
    %v2110 = vsub.s32 %v2047, %v2109
    %v2111 = vrot.slane %v1997, %v2110
    %v2112 = vlaneseq
    %v2113 = vshrl.u32 %v2112, 7
    %v2114 = vsub.s32 %v2047, %v2113
    %v2115 = vrot.slane %v2000, %v2114
    %v2116 = vlaneseq
    %v2117 = vshrl.u32 %v2116, 7
    %v2118 = vsub.s32 %v2047, %v2117
    %v2119 = vrot.slane %v2003, %v2118
    %v2120 = vlaneseq
    %v2121 = vshrl.u32 %v2120, 7
    %v2122 = vsub.s32 %v2047, %v2121
    %v2123 = vrot.slane %v2006, %v2122
    %v2124 = vlaneseq
    %v2125 = vshrl.u32 %v2124, 7
    %v2126 = vsub.s32 %v2047, %v2125
    %v2127 = vrot.slane %v2009, %v2126
    %v2128 = vlaneseq
    %v2129 = vshrl.u32 %v2128, 7
    %v2130 = vsub.s32 %v2047, %v2129
    %v2131 = vrot.slane %v2012, %v2130
    %v2132 = vlaneseq
    %v2133 = vshrl.u32 %v2132, 7
    %v2134 = vsub.s32 %v2047, %v2133
    %v2135 = vrot.slane %v2015, %v2134
    %v2136 = vlaneseq
    %v2137 = vshrl.u32 %v2136, 7
    %v2138 = vsub.s32 %v2047, %v2137
    %v2139 = vrot.slane %v2018, %v2138
    %v2140 = vlaneseq
    %v2141 = vshrl.u32 %v2140, 7
    %v2142 = vsub.s32 %v2047, %v2141
    %v2143 = vrot.slane %v2021, %v2142
    %v2144 = vlaneseq
    %v2145 = vshrl.u32 %v2144, 7
    %v2146 = vsub.s32 %v2047, %v2145
    %v2147 = vrot.slane %v2024, %v2146
    %v2148 = vlaneseq
    %v2149 = vshrl.u32 %v2148, 7
    %v2150 = vsub.s32 %v2047, %v2149
    %v2151 = vrot.slane %v2027, %v2150
    %v2152 = vlaneseq
    %v2153 = vshrl.u32 %v2152, 7
    %v2154 = vsub.s32 %v2047, %v2153
    %v2155 = vrot.slane %v2030, %v2154
    %v2156 = vlaneseq
    %v2157 = vshrl.u32 %v2156, 7
    %v2158 = vsub.s32 %v2047, %v2157
    %v2159 = vrot.slane %v2033, %v2158
    %v2160 = vlaneseq
    %v2161 = vshrl.u32 %v2160, 7
    %v2162 = vsub.s32 %v2047, %v2161
    %v2163 = vrot.slane %v2036, %v2162
    %v2164 = vlaneseq
    %v2165 = vshrl.u32 %v2164, 7
    %v2166 = vsub.s32 %v2047, %v2165
    %v2167 = vrot.slane %v2039, %v2166
    %v2168 = vlaneseq
    %v2169 = vshrl.u32 %v2168, 7
    %v2170 = vsub.s32 %v2047, %v2169
    %v2171 = vrot.slane %v2042, %v2170
    %v2172 = vlaneseq
    %v2173 = vshrl.u32 %v2172, 7
    %v2174 = vsub.s32 %v2047, %v2173
    %v2175 = vrot.slane %v2045, %v2174
    %vm2176 = vcmask 1041409
    %v2177 = vsel %vm2176, %v2055, %v2051
    %vm2178 = vcmask 1042434
    %v2179 = vsel %vm2178, %v2059, %v2177
    %vm2180 = vcmask 1043459
    %v2181 = vsel %vm2180, %v2063, %v2179
    %vm2182 = vcmask 1044484
    %v2183 = vsel %vm2182, %v2067, %v2181
    %vm2184 = vcmask 1045509
    %v2185 = vsel %vm2184, %v2071, %v2183
    %vm2186 = vcmask 1046534
    %v2187 = vsel %vm2186, %v2075, %v2185
    %vm2188 = vcmask 1047559
    %v2189 = vsel %vm2188, %v2079, %v2187
    %v2190 = vsel %vm2176, %v2087, %v2083
    %v2191 = vsel %vm2178, %v2091, %v2190
    %v2192 = vsel %vm2180, %v2095, %v2191
    %v2193 = vsel %vm2182, %v2099, %v2192
    %v2194 = vsel %vm2184, %v2103, %v2193
    %v2195 = vsel %vm2186, %v2107, %v2194
    %v2196 = vsel %vm2188, %v2111, %v2195
    %v2197 = vsel %vm2176, %v2119, %v2115
    %v2198 = vsel %vm2178, %v2123, %v2197
    %v2199 = vsel %vm2180, %v2127, %v2198
    %v2200 = vsel %vm2182, %v2131, %v2199
    %v2201 = vsel %vm2184, %v2135, %v2200
    %v2202 = vsel %vm2186, %v2139, %v2201
    %v2203 = vsel %vm2188, %v2143, %v2202
    %v2204 = vsel %vm2176, %v2151, %v2147
    %v2205 = vsel %vm2178, %v2155, %v2204
    %v2206 = vsel %vm2180, %v2159, %v2205
    %v2207 = vsel %vm2182, %v2163, %v2206
    %v2208 = vsel %vm2184, %v2167, %v2207
    %v2209 = vsel %vm2186, %v2171, %v2208
    %v2210 = vsel %vm2188, %v2175, %v2209
    %vm2215 = vcmask 31744
    %v2216 = vsel %vm2215, %v2189, -inf
    %2217 = vmax.xlane.f32.xlu0 %v2216
    %v2218 = vpop.xlane.xlu0 %2217
    %v2219 = vsel %vm2215, %v2196, -inf
    %2220 = vmax.xlane.f32.xlu0 %v2219
    %v2221 = vpop.xlane.xlu0 %2220
    %v2222 = vsel %vm2215, %v2203, -inf
    %2223 = vmax.xlane.f32.xlu0 %v2222
    %v2224 = vpop.xlane.xlu0 %2223
    %v2225 = vsel %vm2215, %v2210, -inf
    %2226 = vmax.xlane.f32.xlu0 %v2225
    %v2227 = vpop.xlane.xlu0 %2226
    %v2232 = vlaneseq
    %v2233 = vshrl.u32 %v2232, 7
    %v2234 = vsub.s32 0, %v2233
    %v2235 = vrot.slane %v2218, %v2234
    %v2236 = vlaneseq
    %v2237 = vshrl.u32 %v2236, 7
    %v2238 = vsub.s32 1, %v2237
    %v2239 = vrot.slane %v2218, %v2238
    %v2240 = vlaneseq
    %v2241 = vshrl.u32 %v2240, 7
    %v2242 = vsub.s32 2, %v2241
    %v2243 = vrot.slane %v2218, %v2242
    %v2244 = vlaneseq
    %v2245 = vshrl.u32 %v2244, 7
    %v2246 = vsub.s32 3, %v2245
    %v2247 = vrot.slane %v2218, %v2246
    %v2248 = vlaneseq
    %v2249 = vshrl.u32 %v2248, 7
    %v2250 = vsub.s32 4, %v2249
    %v2251 = vrot.slane %v2218, %v2250
    %v2252 = vlaneseq
    %v2253 = vshrl.u32 %v2252, 7
    %v2254 = vsub.s32 5, %v2253
    %v2255 = vrot.slane %v2218, %v2254
    %v2256 = vlaneseq
    %v2257 = vshrl.u32 %v2256, 7
    %v2258 = vsub.s32 6, %v2257
    %v2259 = vrot.slane %v2218, %v2258
    %v2260 = vlaneseq
    %v2261 = vshrl.u32 %v2260, 7
    %v2262 = vsub.s32 7, %v2261
    %v2263 = vrot.slane %v2218, %v2262
    %v2264 = vlaneseq
    %v2265 = vshrl.u32 %v2264, 7
    %v2266 = vsub.s32 0, %v2265
    %v2267 = vrot.slane %v2221, %v2266
    %v2268 = vlaneseq
    %v2269 = vshrl.u32 %v2268, 7
    %v2270 = vsub.s32 1, %v2269
    %v2271 = vrot.slane %v2221, %v2270
    %v2272 = vlaneseq
    %v2273 = vshrl.u32 %v2272, 7
    %v2274 = vsub.s32 2, %v2273
    %v2275 = vrot.slane %v2221, %v2274
    %v2276 = vlaneseq
    %v2277 = vshrl.u32 %v2276, 7
    %v2278 = vsub.s32 3, %v2277
    %v2279 = vrot.slane %v2221, %v2278
    %v2280 = vlaneseq
    %v2281 = vshrl.u32 %v2280, 7
    %v2282 = vsub.s32 4, %v2281
    %v2283 = vrot.slane %v2221, %v2282
    %v2284 = vlaneseq
    %v2285 = vshrl.u32 %v2284, 7
    %v2286 = vsub.s32 5, %v2285
    %v2287 = vrot.slane %v2221, %v2286
    %v2288 = vlaneseq
    %v2289 = vshrl.u32 %v2288, 7
    %v2290 = vsub.s32 6, %v2289
    %v2291 = vrot.slane %v2221, %v2290
    %v2292 = vlaneseq
    %v2293 = vshrl.u32 %v2292, 7
    %v2294 = vsub.s32 7, %v2293
    %v2295 = vrot.slane %v2221, %v2294
    %v2296 = vlaneseq
    %v2297 = vshrl.u32 %v2296, 7
    %v2298 = vsub.s32 0, %v2297
    %v2299 = vrot.slane %v2224, %v2298
    %v2300 = vlaneseq
    %v2301 = vshrl.u32 %v2300, 7
    %v2302 = vsub.s32 1, %v2301
    %v2303 = vrot.slane %v2224, %v2302
    %v2304 = vlaneseq
    %v2305 = vshrl.u32 %v2304, 7
    %v2306 = vsub.s32 2, %v2305
    %v2307 = vrot.slane %v2224, %v2306
    %v2308 = vlaneseq
    %v2309 = vshrl.u32 %v2308, 7
    %v2310 = vsub.s32 3, %v2309
    %v2311 = vrot.slane %v2224, %v2310
    %v2312 = vlaneseq
    %v2313 = vshrl.u32 %v2312, 7
    %v2314 = vsub.s32 4, %v2313
    %v2315 = vrot.slane %v2224, %v2314
    %v2316 = vlaneseq
    %v2317 = vshrl.u32 %v2316, 7
    %v2318 = vsub.s32 5, %v2317
    %v2319 = vrot.slane %v2224, %v2318
    %v2320 = vlaneseq
    %v2321 = vshrl.u32 %v2320, 7
    %v2322 = vsub.s32 6, %v2321
    %v2323 = vrot.slane %v2224, %v2322
    %v2324 = vlaneseq
    %v2325 = vshrl.u32 %v2324, 7
    %v2326 = vsub.s32 7, %v2325
    %v2327 = vrot.slane %v2224, %v2326
    %v2328 = vlaneseq
    %v2329 = vshrl.u32 %v2328, 7
    %v2330 = vsub.s32 0, %v2329
    %v2331 = vrot.slane %v2227, %v2330
    %v2332 = vlaneseq
    %v2333 = vshrl.u32 %v2332, 7
    %v2334 = vsub.s32 1, %v2333
    %v2335 = vrot.slane %v2227, %v2334
    %v2336 = vlaneseq
    %v2337 = vshrl.u32 %v2336, 7
    %v2338 = vsub.s32 2, %v2337
    %v2339 = vrot.slane %v2227, %v2338
    %v2340 = vlaneseq
    %v2341 = vshrl.u32 %v2340, 7
    %v2342 = vsub.s32 3, %v2341
    %v2343 = vrot.slane %v2227, %v2342
    %v2344 = vlaneseq
    %v2345 = vshrl.u32 %v2344, 7
    %v2346 = vsub.s32 4, %v2345
    %v2347 = vrot.slane %v2227, %v2346
    %v2348 = vlaneseq
    %v2349 = vshrl.u32 %v2348, 7
    %v2350 = vsub.s32 5, %v2349
    %v2351 = vrot.slane %v2227, %v2350
    %v2352 = vlaneseq
    %v2353 = vshrl.u32 %v2352, 7
    %v2354 = vsub.s32 6, %v2353
    %v2355 = vrot.slane %v2227, %v2354
    %v2356 = vlaneseq
    %v2357 = vshrl.u32 %v2356, 7
    %v2358 = vsub.s32 7, %v2357
    %v2359 = vrot.slane %v2227, %v2358
    %v2392 = vsub.f32 %v1886, %v2235
    %v2393 = vsub.f32 %v1887, %v2239
    %v2394 = vsub.f32 %v1888, %v2243
    %v2395 = vsub.f32 %v1889, %v2247
    %v2396 = vsub.f32 %v1890, %v2251
    %v2397 = vsub.f32 %v1891, %v2255
    %v2398 = vsub.f32 %v1892, %v2259
    %v2399 = vsub.f32 %v1893, %v2263
    %v2400 = vsub.f32 %v1894, %v2267
    %v2401 = vsub.f32 %v1895, %v2271
    %v2402 = vsub.f32 %v1896, %v2275
    %v2403 = vsub.f32 %v1897, %v2279
    %v2404 = vsub.f32 %v1898, %v2283
    %v2405 = vsub.f32 %v1899, %v2287
    %v2406 = vsub.f32 %v1900, %v2291
    %v2407 = vsub.f32 %v1901, %v2295
    %v2408 = vsub.f32 %v1902, %v2299
    %v2409 = vsub.f32 %v1903, %v2303
    %v2410 = vsub.f32 %v1904, %v2307
    %v2411 = vsub.f32 %v1905, %v2311
    %v2412 = vsub.f32 %v1906, %v2315
    %v2413 = vsub.f32 %v1907, %v2319
    %v2414 = vsub.f32 %v1908, %v2323
    %v2415 = vsub.f32 %v1909, %v2327
    %v2416 = vsub.f32 %v1910, %v2331
    %v2417 = vsub.f32 %v1911, %v2335
    %v2418 = vsub.f32 %v1912, %v2339
    %v2419 = vsub.f32 %v1913, %v2343
    %v2420 = vsub.f32 %v1914, %v2347
    %v2421 = vsub.f32 %v1915, %v2351
    %v2422 = vsub.f32 %v1916, %v2355
    %v2423 = vsub.f32 %v1917, %v2359
    %v2424 = vmul.f32 %v2392, 1.442695
    %v2425 = vpow.pop %v2424
    %v2426 = vmul.f32 %v2393, 1.442695
    %v2427 = vpow.pop %v2426
    %v2428 = vmul.f32 %v2394, 1.442695
    %v2429 = vpow.pop %v2428
    %v2430 = vmul.f32 %v2395, 1.442695
    %v2431 = vpow.pop %v2430
    %v2432 = vmul.f32 %v2396, 1.442695
    %v2433 = vpow.pop %v2432
    %v2434 = vmul.f32 %v2397, 1.442695
    %v2435 = vpow.pop %v2434
    %v2436 = vmul.f32 %v2398, 1.442695
    %v2437 = vpow.pop %v2436
    %v2438 = vmul.f32 %v2399, 1.442695
    %v2439 = vpow.pop %v2438
    %v2440 = vmul.f32 %v2400, 1.442695
    %v2441 = vpow.pop %v2440
    %v2442 = vmul.f32 %v2401, 1.442695
    %v2443 = vpow.pop %v2442
    %v2444 = vmul.f32 %v2402, 1.442695
    %v2445 = vpow.pop %v2444
    %v2446 = vmul.f32 %v2403, 1.442695
    %v2447 = vpow.pop %v2446
    %v2448 = vmul.f32 %v2404, 1.442695
    %v2449 = vpow.pop %v2448
    %v2450 = vmul.f32 %v2405, 1.442695
    %v2451 = vpow.pop %v2450
    %v2452 = vmul.f32 %v2406, 1.442695
    %v2453 = vpow.pop %v2452
    %v2454 = vmul.f32 %v2407, 1.442695
    %v2455 = vpow.pop %v2454
    %v2456 = vmul.f32 %v2408, 1.442695
    %v2457 = vpow.pop %v2456
    %v2458 = vmul.f32 %v2409, 1.442695
    %v2459 = vpow.pop %v2458
    %v2460 = vmul.f32 %v2410, 1.442695
    %v2461 = vpow.pop %v2460
    %v2462 = vmul.f32 %v2411, 1.442695
    %v2463 = vpow.pop %v2462
    %v2464 = vmul.f32 %v2412, 1.442695
    %v2465 = vpow.pop %v2464
    %v2466 = vmul.f32 %v2413, 1.442695
    %v2467 = vpow.pop %v2466
    %v2468 = vmul.f32 %v2414, 1.442695
    %v2469 = vpow.pop %v2468
    %v2470 = vmul.f32 %v2415, 1.442695
    %v2471 = vpow.pop %v2470
    %v2472 = vmul.f32 %v2416, 1.442695
    %v2473 = vpow.pop %v2472
    %v2474 = vmul.f32 %v2417, 1.442695
    %v2475 = vpow.pop %v2474
    %v2476 = vmul.f32 %v2418, 1.442695
    %v2477 = vpow.pop %v2476
    %v2478 = vmul.f32 %v2419, 1.442695
    %v2479 = vpow.pop %v2478
    %v2480 = vmul.f32 %v2420, 1.442695
    %v2481 = vpow.pop %v2480
    %v2482 = vmul.f32 %v2421, 1.442695
    %v2483 = vpow.pop %v2482
    %v2484 = vmul.f32 %v2422, 1.442695
    %v2485 = vpow.pop %v2484
    %v2486 = vmul.f32 %v2423, 1.442695
    %v2487 = vpow.pop %v2486
    %2520 = vset.pattern.permute.xlu0 0
    %2521 = vperm.xlu0 %2520, %v2425
    %v2522 = vpop.permute.xlu0 %2521
    %2523 = vset.pattern.permute.xlu0 0
    %2524 = vperm.xlu0 %2523, %v2427
    %v2525 = vpop.permute.xlu0 %2524
    %2526 = vset.pattern.permute.xlu0 0
    %2527 = vperm.xlu0 %2526, %v2429
    %v2528 = vpop.permute.xlu0 %2527
    %2529 = vset.pattern.permute.xlu0 0
    %2530 = vperm.xlu0 %2529, %v2431
    %v2531 = vpop.permute.xlu0 %2530
    %2532 = vset.pattern.permute.xlu0 0
    %2533 = vperm.xlu0 %2532, %v2433
    %v2534 = vpop.permute.xlu0 %2533
    %2535 = vset.pattern.permute.xlu0 0
    %2536 = vperm.xlu0 %2535, %v2435
    %v2537 = vpop.permute.xlu0 %2536
    %2538 = vset.pattern.permute.xlu0 0
    %2539 = vperm.xlu0 %2538, %v2437
    %v2540 = vpop.permute.xlu0 %2539
    %2541 = vset.pattern.permute.xlu0 0
    %2542 = vperm.xlu0 %2541, %v2439
    %v2543 = vpop.permute.xlu0 %2542
    %2544 = vset.pattern.permute.xlu0 0
    %2545 = vperm.xlu0 %2544, %v2441
    %v2546 = vpop.permute.xlu0 %2545
    %2547 = vset.pattern.permute.xlu0 0
    %2548 = vperm.xlu0 %2547, %v2443
    %v2549 = vpop.permute.xlu0 %2548
    %2550 = vset.pattern.permute.xlu0 0
    %2551 = vperm.xlu0 %2550, %v2445
    %v2552 = vpop.permute.xlu0 %2551
    %2553 = vset.pattern.permute.xlu0 0
    %2554 = vperm.xlu0 %2553, %v2447
    %v2555 = vpop.permute.xlu0 %2554
    %2556 = vset.pattern.permute.xlu0 0
    %2557 = vperm.xlu0 %2556, %v2449
    %v2558 = vpop.permute.xlu0 %2557
    %2559 = vset.pattern.permute.xlu0 0
    %2560 = vperm.xlu0 %2559, %v2451
    %v2561 = vpop.permute.xlu0 %2560
    %2562 = vset.pattern.permute.xlu0 0
    %2563 = vperm.xlu0 %2562, %v2453
    %v2564 = vpop.permute.xlu0 %2563
    %2565 = vset.pattern.permute.xlu0 0
    %2566 = vperm.xlu0 %2565, %v2455
    %v2567 = vpop.permute.xlu0 %2566
    %2568 = vset.pattern.permute.xlu0 0
    %2569 = vperm.xlu0 %2568, %v2457
    %v2570 = vpop.permute.xlu0 %2569
    %2571 = vset.pattern.permute.xlu0 0
    %2572 = vperm.xlu0 %2571, %v2459
    %v2573 = vpop.permute.xlu0 %2572
    %2574 = vset.pattern.permute.xlu0 0
    %2575 = vperm.xlu0 %2574, %v2461
    %v2576 = vpop.permute.xlu0 %2575
    %2577 = vset.pattern.permute.xlu0 0
    %2578 = vperm.xlu0 %2577, %v2463
    %v2579 = vpop.permute.xlu0 %2578
    %2580 = vset.pattern.permute.xlu0 0
    %2581 = vperm.xlu0 %2580, %v2465
    %v2582 = vpop.permute.xlu0 %2581
    %2583 = vset.pattern.permute.xlu0 0
    %2584 = vperm.xlu0 %2583, %v2467
    %v2585 = vpop.permute.xlu0 %2584
    %2586 = vset.pattern.permute.xlu0 0
    %2587 = vperm.xlu0 %2586, %v2469
    %v2588 = vpop.permute.xlu0 %2587
    %2589 = vset.pattern.permute.xlu0 0
    %2590 = vperm.xlu0 %2589, %v2471
    %v2591 = vpop.permute.xlu0 %2590
    %2592 = vset.pattern.permute.xlu0 0
    %2593 = vperm.xlu0 %2592, %v2473
    %v2594 = vpop.permute.xlu0 %2593
    %2595 = vset.pattern.permute.xlu0 0
    %2596 = vperm.xlu0 %2595, %v2475
    %v2597 = vpop.permute.xlu0 %2596
    %2598 = vset.pattern.permute.xlu0 0
    %2599 = vperm.xlu0 %2598, %v2477
    %v2600 = vpop.permute.xlu0 %2599
    %2601 = vset.pattern.permute.xlu0 0
    %2602 = vperm.xlu0 %2601, %v2479
    %v2603 = vpop.permute.xlu0 %2602
    %2604 = vset.pattern.permute.xlu0 0
    %2605 = vperm.xlu0 %2604, %v2481
    %v2606 = vpop.permute.xlu0 %2605
    %2607 = vset.pattern.permute.xlu0 0
    %2608 = vperm.xlu0 %2607, %v2483
    %v2609 = vpop.permute.xlu0 %2608
    %2610 = vset.pattern.permute.xlu0 0
    %2611 = vperm.xlu0 %2610, %v2485
    %v2612 = vpop.permute.xlu0 %2611
    %2613 = vset.pattern.permute.xlu0 0
    %2614 = vperm.xlu0 %2613, %v2487
    %v2615 = vpop.permute.xlu0 %2614
    %v2616 = vlaneseq
    %v2617 = vshrl.u32 %v2616, 7
    %v2618 = vsub.s32 %v2047, %v2617
    %v2619 = vrot.slane %v2522, %v2618
    %v2620 = vlaneseq
    %v2621 = vshrl.u32 %v2620, 7
    %v2622 = vsub.s32 %v2047, %v2621
    %v2623 = vrot.slane %v2525, %v2622
    %v2624 = vlaneseq
    %v2625 = vshrl.u32 %v2624, 7
    %v2626 = vsub.s32 %v2047, %v2625
    %v2627 = vrot.slane %v2528, %v2626
    %v2628 = vlaneseq
    %v2629 = vshrl.u32 %v2628, 7
    %v2630 = vsub.s32 %v2047, %v2629
    %v2631 = vrot.slane %v2531, %v2630
    %v2632 = vlaneseq
    %v2633 = vshrl.u32 %v2632, 7
    %v2634 = vsub.s32 %v2047, %v2633
    %v2635 = vrot.slane %v2534, %v2634
    %v2636 = vlaneseq
    %v2637 = vshrl.u32 %v2636, 7
    %v2638 = vsub.s32 %v2047, %v2637
    %v2639 = vrot.slane %v2537, %v2638
    %v2640 = vlaneseq
    %v2641 = vshrl.u32 %v2640, 7
    %v2642 = vsub.s32 %v2047, %v2641
    %v2643 = vrot.slane %v2540, %v2642
    %v2644 = vlaneseq
    %v2645 = vshrl.u32 %v2644, 7
    %v2646 = vsub.s32 %v2047, %v2645
    %v2647 = vrot.slane %v2543, %v2646
    %v2648 = vlaneseq
    %v2649 = vshrl.u32 %v2648, 7
    %v2650 = vsub.s32 %v2047, %v2649
    %v2651 = vrot.slane %v2546, %v2650
    %v2652 = vlaneseq
    %v2653 = vshrl.u32 %v2652, 7
    %v2654 = vsub.s32 %v2047, %v2653
    %v2655 = vrot.slane %v2549, %v2654
    %v2656 = vlaneseq
    %v2657 = vshrl.u32 %v2656, 7
    %v2658 = vsub.s32 %v2047, %v2657
    %v2659 = vrot.slane %v2552, %v2658
    %v2660 = vlaneseq
    %v2661 = vshrl.u32 %v2660, 7
    %v2662 = vsub.s32 %v2047, %v2661
    %v2663 = vrot.slane %v2555, %v2662
    %v2664 = vlaneseq
    %v2665 = vshrl.u32 %v2664, 7
    %v2666 = vsub.s32 %v2047, %v2665
    %v2667 = vrot.slane %v2558, %v2666
    %v2668 = vlaneseq
    %v2669 = vshrl.u32 %v2668, 7
    %v2670 = vsub.s32 %v2047, %v2669
    %v2671 = vrot.slane %v2561, %v2670
    %v2672 = vlaneseq
    %v2673 = vshrl.u32 %v2672, 7
    %v2674 = vsub.s32 %v2047, %v2673
    %v2675 = vrot.slane %v2564, %v2674
    %v2676 = vlaneseq
    %v2677 = vshrl.u32 %v2676, 7
    %v2678 = vsub.s32 %v2047, %v2677
    %v2679 = vrot.slane %v2567, %v2678
    %v2680 = vlaneseq
    %v2681 = vshrl.u32 %v2680, 7
    %v2682 = vsub.s32 %v2047, %v2681
    %v2683 = vrot.slane %v2570, %v2682
    %v2684 = vlaneseq
    %v2685 = vshrl.u32 %v2684, 7
    %v2686 = vsub.s32 %v2047, %v2685
    %v2687 = vrot.slane %v2573, %v2686
    %v2688 = vlaneseq
    %v2689 = vshrl.u32 %v2688, 7
    %v2690 = vsub.s32 %v2047, %v2689
    %v2691 = vrot.slane %v2576, %v2690
    %v2692 = vlaneseq
    %v2693 = vshrl.u32 %v2692, 7
    %v2694 = vsub.s32 %v2047, %v2693
    %v2695 = vrot.slane %v2579, %v2694
    %v2696 = vlaneseq
    %v2697 = vshrl.u32 %v2696, 7
    %v2698 = vsub.s32 %v2047, %v2697
    %v2699 = vrot.slane %v2582, %v2698
    %v2700 = vlaneseq
    %v2701 = vshrl.u32 %v2700, 7
    %v2702 = vsub.s32 %v2047, %v2701
    %v2703 = vrot.slane %v2585, %v2702
    %v2704 = vlaneseq
    %v2705 = vshrl.u32 %v2704, 7
    %v2706 = vsub.s32 %v2047, %v2705
    %v2707 = vrot.slane %v2588, %v2706
    %v2708 = vlaneseq
    %v2709 = vshrl.u32 %v2708, 7
    %v2710 = vsub.s32 %v2047, %v2709
    %v2711 = vrot.slane %v2591, %v2710
    %v2712 = vlaneseq
    %v2713 = vshrl.u32 %v2712, 7
    %v2714 = vsub.s32 %v2047, %v2713
    %v2715 = vrot.slane %v2594, %v2714
    %v2716 = vlaneseq
    %v2717 = vshrl.u32 %v2716, 7
    %v2718 = vsub.s32 %v2047, %v2717
    %v2719 = vrot.slane %v2597, %v2718
    %v2720 = vlaneseq
    %v2721 = vshrl.u32 %v2720, 7
    %v2722 = vsub.s32 %v2047, %v2721
    %v2723 = vrot.slane %v2600, %v2722
    %v2724 = vlaneseq
    %v2725 = vshrl.u32 %v2724, 7
    %v2726 = vsub.s32 %v2047, %v2725
    %v2727 = vrot.slane %v2603, %v2726
    %v2728 = vlaneseq
    %v2729 = vshrl.u32 %v2728, 7
    %v2730 = vsub.s32 %v2047, %v2729
    %v2731 = vrot.slane %v2606, %v2730
    %v2732 = vlaneseq
    %v2733 = vshrl.u32 %v2732, 7
    %v2734 = vsub.s32 %v2047, %v2733
    %v2735 = vrot.slane %v2609, %v2734
    %v2736 = vlaneseq
    %v2737 = vshrl.u32 %v2736, 7
    %v2738 = vsub.s32 %v2047, %v2737
    %v2739 = vrot.slane %v2612, %v2738
    %v2740 = vlaneseq
    %v2741 = vshrl.u32 %v2740, 7
    %v2742 = vsub.s32 %v2047, %v2741
    %v2743 = vrot.slane %v2615, %v2742
    %v2744 = vsel %vm2176, %v2623, %v2619
    %v2745 = vsel %vm2178, %v2627, %v2744
    %v2746 = vsel %vm2180, %v2631, %v2745
    %v2747 = vsel %vm2182, %v2635, %v2746
    %v2748 = vsel %vm2184, %v2639, %v2747
    %v2749 = vsel %vm2186, %v2643, %v2748
    %v2750 = vsel %vm2188, %v2647, %v2749
    %v2751 = vsel %vm2176, %v2655, %v2651
    %v2752 = vsel %vm2178, %v2659, %v2751
    %v2753 = vsel %vm2180, %v2663, %v2752
    %v2754 = vsel %vm2182, %v2667, %v2753
    %v2755 = vsel %vm2184, %v2671, %v2754
    %v2756 = vsel %vm2186, %v2675, %v2755
    %v2757 = vsel %vm2188, %v2679, %v2756
    %v2758 = vsel %vm2176, %v2687, %v2683
    %v2759 = vsel %vm2178, %v2691, %v2758
    %v2760 = vsel %vm2180, %v2695, %v2759
    %v2761 = vsel %vm2182, %v2699, %v2760
    %v2762 = vsel %vm2184, %v2703, %v2761
    %v2763 = vsel %vm2186, %v2707, %v2762
    %v2764 = vsel %vm2188, %v2711, %v2763
    %v2765 = vsel %vm2176, %v2719, %v2715
    %v2766 = vsel %vm2178, %v2723, %v2765
    %v2767 = vsel %vm2180, %v2727, %v2766
    %v2768 = vsel %vm2182, %v2731, %v2767
    %v2769 = vsel %vm2184, %v2735, %v2768
    %v2770 = vsel %vm2186, %v2739, %v2769
    %v2771 = vsel %vm2188, %v2743, %v2770
    %v2776 = vsel %vm2215, %v2750, 0.0
    %2777 = vadd.xlane.f32.xlu0 %v2776
    %v2778 = vpop.xlane.xlu0 %2777
    %v2779 = vsel %vm2215, %v2757, 0.0
    %2780 = vadd.xlane.f32.xlu0 %v2779
    %v2781 = vpop.xlane.xlu0 %2780
    %v2782 = vsel %vm2215, %v2764, 0.0
    %2783 = vadd.xlane.f32.xlu0 %v2782
    %v2784 = vpop.xlane.xlu0 %2783
    %v2785 = vsel %vm2215, %v2771, 0.0
    %2786 = vadd.xlane.f32.xlu0 %v2785
    %v2787 = vpop.xlane.xlu0 %2786
    %v2788 = vrcp.pop %v2778
    %v2789 = vrcp.pop %v2781
    %v2790 = vrcp.pop %v2784
    %v2791 = vrcp.pop %v2787
    %v2796 = vlaneseq
    %v2797 = vshrl.u32 %v2796, 7
    %v2798 = vsub.s32 0, %v2797
    %v2799 = vrot.slane %v2788, %v2798
    %v2800 = vlaneseq
    %v2801 = vshrl.u32 %v2800, 7
    %v2802 = vsub.s32 1, %v2801
    %v2803 = vrot.slane %v2788, %v2802
    %v2804 = vlaneseq
    %v2805 = vshrl.u32 %v2804, 7
    %v2806 = vsub.s32 2, %v2805
    %v2807 = vrot.slane %v2788, %v2806
    %v2808 = vlaneseq
    %v2809 = vshrl.u32 %v2808, 7
    %v2810 = vsub.s32 3, %v2809
    %v2811 = vrot.slane %v2788, %v2810
    %v2812 = vlaneseq
    %v2813 = vshrl.u32 %v2812, 7
    %v2814 = vsub.s32 4, %v2813
    %v2815 = vrot.slane %v2788, %v2814
    %v2816 = vlaneseq
    %v2817 = vshrl.u32 %v2816, 7
    %v2818 = vsub.s32 5, %v2817
    %v2819 = vrot.slane %v2788, %v2818
    %v2820 = vlaneseq
    %v2821 = vshrl.u32 %v2820, 7
    %v2822 = vsub.s32 6, %v2821
    %v2823 = vrot.slane %v2788, %v2822
    %v2824 = vlaneseq
    %v2825 = vshrl.u32 %v2824, 7
    %v2826 = vsub.s32 7, %v2825
    %v2827 = vrot.slane %v2788, %v2826
    %v2828 = vlaneseq
    %v2829 = vshrl.u32 %v2828, 7
    %v2830 = vsub.s32 0, %v2829
    %v2831 = vrot.slane %v2789, %v2830
    %v2832 = vlaneseq
    %v2833 = vshrl.u32 %v2832, 7
    %v2834 = vsub.s32 1, %v2833
    %v2835 = vrot.slane %v2789, %v2834
    %v2836 = vlaneseq
    %v2837 = vshrl.u32 %v2836, 7
    %v2838 = vsub.s32 2, %v2837
    %v2839 = vrot.slane %v2789, %v2838
    %v2840 = vlaneseq
    %v2841 = vshrl.u32 %v2840, 7
    %v2842 = vsub.s32 3, %v2841
    %v2843 = vrot.slane %v2789, %v2842
    %v2844 = vlaneseq
    %v2845 = vshrl.u32 %v2844, 7
    %v2846 = vsub.s32 4, %v2845
    %v2847 = vrot.slane %v2789, %v2846
    %v2848 = vlaneseq
    %v2849 = vshrl.u32 %v2848, 7
    %v2850 = vsub.s32 5, %v2849
    %v2851 = vrot.slane %v2789, %v2850
    %v2852 = vlaneseq
    %v2853 = vshrl.u32 %v2852, 7
    %v2854 = vsub.s32 6, %v2853
    %v2855 = vrot.slane %v2789, %v2854
    %v2856 = vlaneseq
    %v2857 = vshrl.u32 %v2856, 7
    %v2858 = vsub.s32 7, %v2857
    %v2859 = vrot.slane %v2789, %v2858
    %v2860 = vlaneseq
    %v2861 = vshrl.u32 %v2860, 7
    %v2862 = vsub.s32 0, %v2861
    %v2863 = vrot.slane %v2790, %v2862
    %v2864 = vlaneseq
    %v2865 = vshrl.u32 %v2864, 7
    %v2866 = vsub.s32 1, %v2865
    %v2867 = vrot.slane %v2790, %v2866
    %v2868 = vlaneseq
    %v2869 = vshrl.u32 %v2868, 7
    %v2870 = vsub.s32 2, %v2869
    %v2871 = vrot.slane %v2790, %v2870
    %v2872 = vlaneseq
    %v2873 = vshrl.u32 %v2872, 7
    %v2874 = vsub.s32 3, %v2873
    %v2875 = vrot.slane %v2790, %v2874
    %v2876 = vlaneseq
    %v2877 = vshrl.u32 %v2876, 7
    %v2878 = vsub.s32 4, %v2877
    %v2879 = vrot.slane %v2790, %v2878
    %v2880 = vlaneseq
    %v2881 = vshrl.u32 %v2880, 7
    %v2882 = vsub.s32 5, %v2881
    %v2883 = vrot.slane %v2790, %v2882
    %v2884 = vlaneseq
    %v2885 = vshrl.u32 %v2884, 7
    %v2886 = vsub.s32 6, %v2885
    %v2887 = vrot.slane %v2790, %v2886
    %v2888 = vlaneseq
    %v2889 = vshrl.u32 %v2888, 7
    %v2890 = vsub.s32 7, %v2889
    %v2891 = vrot.slane %v2790, %v2890
    %v2892 = vlaneseq
    %v2893 = vshrl.u32 %v2892, 7
    %v2894 = vsub.s32 0, %v2893
    %v2895 = vrot.slane %v2791, %v2894
    %v2896 = vlaneseq
    %v2897 = vshrl.u32 %v2896, 7
    %v2898 = vsub.s32 1, %v2897
    %v2899 = vrot.slane %v2791, %v2898
    %v2900 = vlaneseq
    %v2901 = vshrl.u32 %v2900, 7
    %v2902 = vsub.s32 2, %v2901
    %v2903 = vrot.slane %v2791, %v2902
    %v2904 = vlaneseq
    %v2905 = vshrl.u32 %v2904, 7
    %v2906 = vsub.s32 3, %v2905
    %v2907 = vrot.slane %v2791, %v2906
    %v2908 = vlaneseq
    %v2909 = vshrl.u32 %v2908, 7
    %v2910 = vsub.s32 4, %v2909
    %v2911 = vrot.slane %v2791, %v2910
    %v2912 = vlaneseq
    %v2913 = vshrl.u32 %v2912, 7
    %v2914 = vsub.s32 5, %v2913
    %v2915 = vrot.slane %v2791, %v2914
    %v2916 = vlaneseq
    %v2917 = vshrl.u32 %v2916, 7
    %v2918 = vsub.s32 6, %v2917
    %v2919 = vrot.slane %v2791, %v2918
    %v2920 = vlaneseq
    %v2921 = vshrl.u32 %v2920, 7
    %v2922 = vsub.s32 7, %v2921
    %v2923 = vrot.slane %v2791, %v2922
    %v2956 = vmul.f32 %v2425, %v2799
    %v2957 = vmul.f32 %v2427, %v2803
    %v2958 = vmul.f32 %v2429, %v2807
    %v2959 = vmul.f32 %v2431, %v2811
    %v2960 = vmul.f32 %v2433, %v2815
    %v2961 = vmul.f32 %v2435, %v2819
    %v2962 = vmul.f32 %v2437, %v2823
    %v2963 = vmul.f32 %v2439, %v2827
    %v2964 = vmul.f32 %v2441, %v2831
    %v2965 = vmul.f32 %v2443, %v2835
    %v2966 = vmul.f32 %v2445, %v2839
    %v2967 = vmul.f32 %v2447, %v2843
    %v2968 = vmul.f32 %v2449, %v2847
    %v2969 = vmul.f32 %v2451, %v2851
    %v2970 = vmul.f32 %v2453, %v2855
    %v2971 = vmul.f32 %v2455, %v2859
    %v2972 = vmul.f32 %v2457, %v2863
    %v2973 = vmul.f32 %v2459, %v2867
    %v2974 = vmul.f32 %v2461, %v2871
    %v2975 = vmul.f32 %v2463, %v2875
    %v2976 = vmul.f32 %v2465, %v2879
    %v2977 = vmul.f32 %v2467, %v2883
    %v2978 = vmul.f32 %v2469, %v2887
    %v2979 = vmul.f32 %v2471, %v2891
    %v2980 = vmul.f32 %v2473, %v2895
    %v2981 = vmul.f32 %v2475, %v2899
    %v2982 = vmul.f32 %v2477, %v2903
    %v2983 = vmul.f32 %v2479, %v2907
    %v2984 = vmul.f32 %v2481, %v2911
    %v2985 = vmul.f32 %v2483, %v2915
    %v2986 = vmul.f32 %v2485, %v2919
    %v2987 = vmul.f32 %v2487, %v2923
    %2989 = vset.pattern.permute.xlu0 0
    %2990 = vperm.xlu0 %2989, %v2956
    %v2991 = vpop.permute.xlu0 %2990
    %2994 = vset.pattern.permute.xlu0 0
    %2995 = vperm.xlu0 %2994, %v2957
    %v2996 = vpop.permute.xlu0 %2995
    %2999 = vset.pattern.permute.xlu0 0
    %3000 = vperm.xlu0 %2999, %v2958
    %v3001 = vpop.permute.xlu0 %3000
    %3004 = vset.pattern.permute.xlu0 0
    %3005 = vperm.xlu0 %3004, %v2959
    %v3006 = vpop.permute.xlu0 %3005
    %3009 = vset.pattern.permute.xlu0 0
    %3010 = vperm.xlu0 %3009, %v2960
    %v3011 = vpop.permute.xlu0 %3010
    %3014 = vset.pattern.permute.xlu0 0
    %3015 = vperm.xlu0 %3014, %v2961
    %v3016 = vpop.permute.xlu0 %3015
    %3019 = vset.pattern.permute.xlu0 0
    %3020 = vperm.xlu0 %3019, %v2962
    %v3021 = vpop.permute.xlu0 %3020
    %3024 = vset.pattern.permute.xlu0 0
    %3025 = vperm.xlu0 %3024, %v2963
    %v3026 = vpop.permute.xlu0 %3025
    %3029 = vset.pattern.permute.xlu0 0
    %3030 = vperm.xlu0 %3029, %v2964
    %v3031 = vpop.permute.xlu0 %3030
    %3034 = vset.pattern.permute.xlu0 0
    %3035 = vperm.xlu0 %3034, %v2965
    %v3036 = vpop.permute.xlu0 %3035
    %3039 = vset.pattern.permute.xlu0 0
    %3040 = vperm.xlu0 %3039, %v2966
    %v3041 = vpop.permute.xlu0 %3040
    %3044 = vset.pattern.permute.xlu0 0
    %3045 = vperm.xlu0 %3044, %v2967
    %v3046 = vpop.permute.xlu0 %3045
    %3049 = vset.pattern.permute.xlu0 0
    %3050 = vperm.xlu0 %3049, %v2968
    %v3051 = vpop.permute.xlu0 %3050
    %3054 = vset.pattern.permute.xlu0 0
    %3055 = vperm.xlu0 %3054, %v2969
    %v3056 = vpop.permute.xlu0 %3055
    %3059 = vset.pattern.permute.xlu0 0
    %3060 = vperm.xlu0 %3059, %v2970
    %v3061 = vpop.permute.xlu0 %3060
    %3064 = vset.pattern.permute.xlu0 0
    %3065 = vperm.xlu0 %3064, %v2971
    %v3066 = vpop.permute.xlu0 %3065
    %3069 = vset.pattern.permute.xlu0 0
    %3070 = vperm.xlu0 %3069, %v2972
    %v3071 = vpop.permute.xlu0 %3070
    %3074 = vset.pattern.permute.xlu0 0
    %3075 = vperm.xlu0 %3074, %v2973
    %v3076 = vpop.permute.xlu0 %3075
    %3079 = vset.pattern.permute.xlu0 0
    %3080 = vperm.xlu0 %3079, %v2974
    %v3081 = vpop.permute.xlu0 %3080
    %3084 = vset.pattern.permute.xlu0 0
    %3085 = vperm.xlu0 %3084, %v2975
    %v3086 = vpop.permute.xlu0 %3085
    %3089 = vset.pattern.permute.xlu0 0
    %3090 = vperm.xlu0 %3089, %v2976
    %v3091 = vpop.permute.xlu0 %3090
    %3094 = vset.pattern.permute.xlu0 0
    %3095 = vperm.xlu0 %3094, %v2977
    %v3096 = vpop.permute.xlu0 %3095
    %3099 = vset.pattern.permute.xlu0 0
    %3100 = vperm.xlu0 %3099, %v2978
    %v3101 = vpop.permute.xlu0 %3100
    %3104 = vset.pattern.permute.xlu0 0
    %3105 = vperm.xlu0 %3104, %v2979
    %v3106 = vpop.permute.xlu0 %3105
    %3109 = vset.pattern.permute.xlu0 0
    %3110 = vperm.xlu0 %3109, %v2980
    %v3111 = vpop.permute.xlu0 %3110
    %3114 = vset.pattern.permute.xlu0 0
    %3115 = vperm.xlu0 %3114, %v2981
    %v3116 = vpop.permute.xlu0 %3115
    %3119 = vset.pattern.permute.xlu0 0
    %3120 = vperm.xlu0 %3119, %v2982
    %v3121 = vpop.permute.xlu0 %3120
    %3124 = vset.pattern.permute.xlu0 0
    %3125 = vperm.xlu0 %3124, %v2983
    %v3126 = vpop.permute.xlu0 %3125
    %3129 = vset.pattern.permute.xlu0 0
    %3130 = vperm.xlu0 %3129, %v2984
    %v3131 = vpop.permute.xlu0 %3130
    %3134 = vset.pattern.permute.xlu0 0
    %3135 = vperm.xlu0 %3134, %v2985
    %v3136 = vpop.permute.xlu0 %3135
    %3139 = vset.pattern.permute.xlu0 0
    %3140 = vperm.xlu0 %3139, %v2986
    %v3141 = vpop.permute.xlu0 %3140
    %3144 = vset.pattern.permute.xlu0 0
    %3145 = vperm.xlu0 %3144, %v2987
    %v3146 = vpop.permute.xlu0 %3145
    %3148 = vrot.lane.b32.xlu0 %v1069, 64
    %v3149 = vpop.permute.xlu0 %3148
    %3150 = vrot.lane.b32.xlu0 %v1101, 64
    %v3151 = vpop.permute.xlu0 %3150
    %3152 = vrot.lane.b32.xlu0 %v1070, 64
    %v3153 = vpop.permute.xlu0 %3152
    %3154 = vrot.lane.b32.xlu0 %v1102, 64
    %v3155 = vpop.permute.xlu0 %3154
    %3156 = vrot.lane.b32.xlu0 %v1071, 64
    %v3157 = vpop.permute.xlu0 %3156
    %3158 = vrot.lane.b32.xlu0 %v1103, 64
    %v3159 = vpop.permute.xlu0 %3158
    %3160 = vrot.lane.b32.xlu0 %v1072, 64
    %v3161 = vpop.permute.xlu0 %3160
    %3162 = vrot.lane.b32.xlu0 %v1104, 64
    %v3163 = vpop.permute.xlu0 %3162
    %3164 = vrot.lane.b32.xlu0 %v1073, 64
    %v3165 = vpop.permute.xlu0 %3164
    %3166 = vrot.lane.b32.xlu0 %v1105, 64
    %v3167 = vpop.permute.xlu0 %3166
    %3168 = vrot.lane.b32.xlu0 %v1074, 64
    %v3169 = vpop.permute.xlu0 %3168
    %3170 = vrot.lane.b32.xlu0 %v1106, 64
    %v3171 = vpop.permute.xlu0 %3170
    %3172 = vrot.lane.b32.xlu0 %v1075, 64
    %v3173 = vpop.permute.xlu0 %3172
    %3174 = vrot.lane.b32.xlu0 %v1107, 64
    %v3175 = vpop.permute.xlu0 %3174
    %3176 = vrot.lane.b32.xlu0 %v1076, 64
    %v3177 = vpop.permute.xlu0 %3176
    %3178 = vrot.lane.b32.xlu0 %v1108, 64
    %v3179 = vpop.permute.xlu0 %3178
    %3180 = vrot.lane.b32.xlu0 %v1077, 64
    %v3181 = vpop.permute.xlu0 %3180
    %3182 = vrot.lane.b32.xlu0 %v1109, 64
    %v3183 = vpop.permute.xlu0 %3182
    %3184 = vrot.lane.b32.xlu0 %v1078, 64
    %v3185 = vpop.permute.xlu0 %3184
    %3186 = vrot.lane.b32.xlu0 %v1110, 64
    %v3187 = vpop.permute.xlu0 %3186
    %3188 = vrot.lane.b32.xlu0 %v1079, 64
    %v3189 = vpop.permute.xlu0 %3188
    %3190 = vrot.lane.b32.xlu0 %v1111, 64
    %v3191 = vpop.permute.xlu0 %3190
    %3192 = vrot.lane.b32.xlu0 %v1080, 64
    %v3193 = vpop.permute.xlu0 %3192
    %3194 = vrot.lane.b32.xlu0 %v1112, 64
    %v3195 = vpop.permute.xlu0 %3194
    %3196 = vrot.lane.b32.xlu0 %v1081, 64
    %v3197 = vpop.permute.xlu0 %3196
    %3198 = vrot.lane.b32.xlu0 %v1113, 64
    %v3199 = vpop.permute.xlu0 %3198
    %3200 = vrot.lane.b32.xlu0 %v1082, 64
    %v3201 = vpop.permute.xlu0 %3200
    %3202 = vrot.lane.b32.xlu0 %v1114, 64
    %v3203 = vpop.permute.xlu0 %3202
    %3204 = vrot.lane.b32.xlu0 %v1083, 64
    %v3205 = vpop.permute.xlu0 %3204
    %3206 = vrot.lane.b32.xlu0 %v1115, 64
    %v3207 = vpop.permute.xlu0 %3206
    %3208 = vrot.lane.b32.xlu0 %v1084, 64
    %v3209 = vpop.permute.xlu0 %3208
    %3210 = vrot.lane.b32.xlu0 %v1116, 64
    %v3211 = vpop.permute.xlu0 %3210
    %v3244 = vmul.f32 %v2991, %v3149
    %v3245 = vmul.f32 %v2996, %v3151
    %v3246 = vmul.f32 %v3001, %v3153
    %v3247 = vmul.f32 %v3006, %v3155
    %v3248 = vmul.f32 %v3011, %v3157
    %v3249 = vmul.f32 %v3016, %v3159
    %v3250 = vmul.f32 %v3021, %v3161
    %v3251 = vmul.f32 %v3026, %v3163
    %v3252 = vmul.f32 %v3031, %v3165
    %v3253 = vmul.f32 %v3036, %v3167
    %v3254 = vmul.f32 %v3041, %v3169
    %v3255 = vmul.f32 %v3046, %v3171
    %v3256 = vmul.f32 %v3051, %v3173
    %v3257 = vmul.f32 %v3056, %v3175
    %v3258 = vmul.f32 %v3061, %v3177
    %v3259 = vmul.f32 %v3066, %v3179
    %v3260 = vmul.f32 %v3071, %v3181
    %v3261 = vmul.f32 %v3076, %v3183
    %v3262 = vmul.f32 %v3081, %v3185
    %v3263 = vmul.f32 %v3086, %v3187
    %v3264 = vmul.f32 %v3091, %v3189
    %v3265 = vmul.f32 %v3096, %v3191
    %v3266 = vmul.f32 %v3101, %v3193
    %v3267 = vmul.f32 %v3106, %v3195
    %v3268 = vmul.f32 %v3111, %v3197
    %v3269 = vmul.f32 %v3116, %v3199
    %v3270 = vmul.f32 %v3121, %v3201
    %v3271 = vmul.f32 %v3126, %v3203
    %v3272 = vmul.f32 %v3131, %v3205
    %v3273 = vmul.f32 %v3136, %v3207
    %v3274 = vmul.f32 %v3141, %v3209
    %v3275 = vmul.f32 %v3146, %v3211
    %v3276 = vsel %vm1529, %v3244, 0.0
    %v3277 = vrot.slane %v3276, 4
    %v3278 = vadd.f32 %v3276, %v3277
    %v3279 = vrot.slane %v3278, 2
    %v3280 = vadd.f32 %v3278, %v3279
    %v3281 = vrot.slane %v3280, 1
    %v3282 = vadd.f32 %v3280, %v3281
    %v3283 = vsel %vm1529, %v3245, 0.0
    %v3284 = vrot.slane %v3283, 4
    %v3285 = vadd.f32 %v3283, %v3284
    %v3286 = vrot.slane %v3285, 2
    %v3287 = vadd.f32 %v3285, %v3286
    %v3288 = vrot.slane %v3287, 1
    %v3289 = vadd.f32 %v3287, %v3288
    %v3290 = vsel %vm1529, %v3246, 0.0
    %v3291 = vrot.slane %v3290, 4
    %v3292 = vadd.f32 %v3290, %v3291
    %v3293 = vrot.slane %v3292, 2
    %v3294 = vadd.f32 %v3292, %v3293
    %v3295 = vrot.slane %v3294, 1
    %v3296 = vadd.f32 %v3294, %v3295
    %v3297 = vsel %vm1529, %v3247, 0.0
    %v3298 = vrot.slane %v3297, 4
    %v3299 = vadd.f32 %v3297, %v3298
    %v3300 = vrot.slane %v3299, 2
    %v3301 = vadd.f32 %v3299, %v3300
    %v3302 = vrot.slane %v3301, 1
    %v3303 = vadd.f32 %v3301, %v3302
    %v3304 = vsel %vm1529, %v3248, 0.0
    %v3305 = vrot.slane %v3304, 4
    %v3306 = vadd.f32 %v3304, %v3305
    %v3307 = vrot.slane %v3306, 2
    %v3308 = vadd.f32 %v3306, %v3307
    %v3309 = vrot.slane %v3308, 1
    %v3310 = vadd.f32 %v3308, %v3309
    %v3311 = vsel %vm1529, %v3249, 0.0
    %v3312 = vrot.slane %v3311, 4
    %v3313 = vadd.f32 %v3311, %v3312
    %v3314 = vrot.slane %v3313, 2
    %v3315 = vadd.f32 %v3313, %v3314
    %v3316 = vrot.slane %v3315, 1
    %v3317 = vadd.f32 %v3315, %v3316
    %v3318 = vsel %vm1529, %v3250, 0.0
    %v3319 = vrot.slane %v3318, 4
    %v3320 = vadd.f32 %v3318, %v3319
    %v3321 = vrot.slane %v3320, 2
    %v3322 = vadd.f32 %v3320, %v3321
    %v3323 = vrot.slane %v3322, 1
    %v3324 = vadd.f32 %v3322, %v3323
    %v3325 = vsel %vm1529, %v3251, 0.0
    %v3326 = vrot.slane %v3325, 4
    %v3327 = vadd.f32 %v3325, %v3326
    %v3328 = vrot.slane %v3327, 2
    %v3329 = vadd.f32 %v3327, %v3328
    %v3330 = vrot.slane %v3329, 1
    %v3331 = vadd.f32 %v3329, %v3330
    %v3332 = vsel %vm1529, %v3252, 0.0
    %v3333 = vrot.slane %v3332, 4
    %v3334 = vadd.f32 %v3332, %v3333
    %v3335 = vrot.slane %v3334, 2
    %v3336 = vadd.f32 %v3334, %v3335
    %v3337 = vrot.slane %v3336, 1
    %v3338 = vadd.f32 %v3336, %v3337
    %v3339 = vsel %vm1529, %v3253, 0.0
    %v3340 = vrot.slane %v3339, 4
    %v3341 = vadd.f32 %v3339, %v3340
    %v3342 = vrot.slane %v3341, 2
    %v3343 = vadd.f32 %v3341, %v3342
    %v3344 = vrot.slane %v3343, 1
    %v3345 = vadd.f32 %v3343, %v3344
    %v3346 = vsel %vm1529, %v3254, 0.0
    %v3347 = vrot.slane %v3346, 4
    %v3348 = vadd.f32 %v3346, %v3347
    %v3349 = vrot.slane %v3348, 2
    %v3350 = vadd.f32 %v3348, %v3349
    %v3351 = vrot.slane %v3350, 1
    %v3352 = vadd.f32 %v3350, %v3351
    %v3353 = vsel %vm1529, %v3255, 0.0
    %v3354 = vrot.slane %v3353, 4
    %v3355 = vadd.f32 %v3353, %v3354
    %v3356 = vrot.slane %v3355, 2
    %v3357 = vadd.f32 %v3355, %v3356
    %v3358 = vrot.slane %v3357, 1
    %v3359 = vadd.f32 %v3357, %v3358
    %v3360 = vsel %vm1529, %v3256, 0.0
    %v3361 = vrot.slane %v3360, 4
    %v3362 = vadd.f32 %v3360, %v3361
    %v3363 = vrot.slane %v3362, 2
    %v3364 = vadd.f32 %v3362, %v3363
    %v3365 = vrot.slane %v3364, 1
    %v3366 = vadd.f32 %v3364, %v3365
    %v3367 = vsel %vm1529, %v3257, 0.0
    %v3368 = vrot.slane %v3367, 4
    %v3369 = vadd.f32 %v3367, %v3368
    %v3370 = vrot.slane %v3369, 2
    %v3371 = vadd.f32 %v3369, %v3370
    %v3372 = vrot.slane %v3371, 1
    %v3373 = vadd.f32 %v3371, %v3372
    %v3374 = vsel %vm1529, %v3258, 0.0
    %v3375 = vrot.slane %v3374, 4
    %v3376 = vadd.f32 %v3374, %v3375
    %v3377 = vrot.slane %v3376, 2
    %v3378 = vadd.f32 %v3376, %v3377
    %v3379 = vrot.slane %v3378, 1
    %v3380 = vadd.f32 %v3378, %v3379
    %v3381 = vsel %vm1529, %v3259, 0.0
    %v3382 = vrot.slane %v3381, 4
    %v3383 = vadd.f32 %v3381, %v3382
    %v3384 = vrot.slane %v3383, 2
    %v3385 = vadd.f32 %v3383, %v3384
    %v3386 = vrot.slane %v3385, 1
    %v3387 = vadd.f32 %v3385, %v3386
    %v3388 = vsel %vm1529, %v3260, 0.0
    %v3389 = vrot.slane %v3388, 4
    %v3390 = vadd.f32 %v3388, %v3389
    %v3391 = vrot.slane %v3390, 2
    %v3392 = vadd.f32 %v3390, %v3391
    %v3393 = vrot.slane %v3392, 1
    %v3394 = vadd.f32 %v3392, %v3393
    %v3395 = vsel %vm1529, %v3261, 0.0
    %v3396 = vrot.slane %v3395, 4
    %v3397 = vadd.f32 %v3395, %v3396
    %v3398 = vrot.slane %v3397, 2
    %v3399 = vadd.f32 %v3397, %v3398
    %v3400 = vrot.slane %v3399, 1
    %v3401 = vadd.f32 %v3399, %v3400
    %v3402 = vsel %vm1529, %v3262, 0.0
    %v3403 = vrot.slane %v3402, 4
    %v3404 = vadd.f32 %v3402, %v3403
    %v3405 = vrot.slane %v3404, 2
    %v3406 = vadd.f32 %v3404, %v3405
    %v3407 = vrot.slane %v3406, 1
    %v3408 = vadd.f32 %v3406, %v3407
    %v3409 = vsel %vm1529, %v3263, 0.0
    %v3410 = vrot.slane %v3409, 4
    %v3411 = vadd.f32 %v3409, %v3410
    %v3412 = vrot.slane %v3411, 2
    %v3413 = vadd.f32 %v3411, %v3412
    %v3414 = vrot.slane %v3413, 1
    %v3415 = vadd.f32 %v3413, %v3414
    %v3416 = vsel %vm1529, %v3264, 0.0
    %v3417 = vrot.slane %v3416, 4
    %v3418 = vadd.f32 %v3416, %v3417
    %v3419 = vrot.slane %v3418, 2
    %v3420 = vadd.f32 %v3418, %v3419
    %v3421 = vrot.slane %v3420, 1
    %v3422 = vadd.f32 %v3420, %v3421
    %v3423 = vsel %vm1529, %v3265, 0.0
    %v3424 = vrot.slane %v3423, 4
    %v3425 = vadd.f32 %v3423, %v3424
    %v3426 = vrot.slane %v3425, 2
    %v3427 = vadd.f32 %v3425, %v3426
    %v3428 = vrot.slane %v3427, 1
    %v3429 = vadd.f32 %v3427, %v3428
    %v3430 = vsel %vm1529, %v3266, 0.0
    %v3431 = vrot.slane %v3430, 4
    %v3432 = vadd.f32 %v3430, %v3431
    %v3433 = vrot.slane %v3432, 2
    %v3434 = vadd.f32 %v3432, %v3433
    %v3435 = vrot.slane %v3434, 1
    %v3436 = vadd.f32 %v3434, %v3435
    %v3437 = vsel %vm1529, %v3267, 0.0
    %v3438 = vrot.slane %v3437, 4
    %v3439 = vadd.f32 %v3437, %v3438
    %v3440 = vrot.slane %v3439, 2
    %v3441 = vadd.f32 %v3439, %v3440
    %v3442 = vrot.slane %v3441, 1
    %v3443 = vadd.f32 %v3441, %v3442
    %v3444 = vsel %vm1529, %v3268, 0.0
    %v3445 = vrot.slane %v3444, 4
    %v3446 = vadd.f32 %v3444, %v3445
    %v3447 = vrot.slane %v3446, 2
    %v3448 = vadd.f32 %v3446, %v3447
    %v3449 = vrot.slane %v3448, 1
    %v3450 = vadd.f32 %v3448, %v3449
    %v3451 = vsel %vm1529, %v3269, 0.0
    %v3452 = vrot.slane %v3451, 4
    %v3453 = vadd.f32 %v3451, %v3452
    %v3454 = vrot.slane %v3453, 2
    %v3455 = vadd.f32 %v3453, %v3454
    %v3456 = vrot.slane %v3455, 1
    %v3457 = vadd.f32 %v3455, %v3456
    %v3458 = vsel %vm1529, %v3270, 0.0
    %v3459 = vrot.slane %v3458, 4
    %v3460 = vadd.f32 %v3458, %v3459
    %v3461 = vrot.slane %v3460, 2
    %v3462 = vadd.f32 %v3460, %v3461
    %v3463 = vrot.slane %v3462, 1
    %v3464 = vadd.f32 %v3462, %v3463
    %v3465 = vsel %vm1529, %v3271, 0.0
    %v3466 = vrot.slane %v3465, 4
    %v3467 = vadd.f32 %v3465, %v3466
    %v3468 = vrot.slane %v3467, 2
    %v3469 = vadd.f32 %v3467, %v3468
    %v3470 = vrot.slane %v3469, 1
    %v3471 = vadd.f32 %v3469, %v3470
    %v3472 = vsel %vm1529, %v3272, 0.0
    %v3473 = vrot.slane %v3472, 4
    %v3474 = vadd.f32 %v3472, %v3473
    %v3475 = vrot.slane %v3474, 2
    %v3476 = vadd.f32 %v3474, %v3475
    %v3477 = vrot.slane %v3476, 1
    %v3478 = vadd.f32 %v3476, %v3477
    %v3479 = vsel %vm1529, %v3273, 0.0
    %v3480 = vrot.slane %v3479, 4
    %v3481 = vadd.f32 %v3479, %v3480
    %v3482 = vrot.slane %v3481, 2
    %v3483 = vadd.f32 %v3481, %v3482
    %v3484 = vrot.slane %v3483, 1
    %v3485 = vadd.f32 %v3483, %v3484
    %v3486 = vsel %vm1529, %v3274, 0.0
    %v3487 = vrot.slane %v3486, 4
    %v3488 = vadd.f32 %v3486, %v3487
    %v3489 = vrot.slane %v3488, 2
    %v3490 = vadd.f32 %v3488, %v3489
    %v3491 = vrot.slane %v3490, 1
    %v3492 = vadd.f32 %v3490, %v3491
    %v3493 = vsel %vm1529, %v3275, 0.0
    %v3494 = vrot.slane %v3493, 4
    %v3495 = vadd.f32 %v3493, %v3494
    %v3496 = vrot.slane %v3495, 2
    %v3497 = vadd.f32 %v3495, %v3496
    %v3498 = vrot.slane %v3497, 1
    %v3499 = vadd.f32 %v3497, %v3498
    %v3500 = vpack.c.bf16 %v3282, %v3282
    %v3501 = vpack.c.bf16 %v3289, %v3289
    %v3502 = vpack.c.bf16 %v3296, %v3296
    %v3503 = vpack.c.bf16 %v3303, %v3303
    %v3504 = vpack.c.bf16 %v3310, %v3310
    %v3505 = vpack.c.bf16 %v3317, %v3317
    %v3506 = vpack.c.bf16 %v3324, %v3324
    %v3507 = vpack.c.bf16 %v3331, %v3331
    %v3508 = vpack.c.bf16 %v3338, %v3338
    %v3509 = vpack.c.bf16 %v3345, %v3345
    %v3510 = vpack.c.bf16 %v3352, %v3352
    %v3511 = vpack.c.bf16 %v3359, %v3359
    %v3512 = vpack.c.bf16 %v3366, %v3366
    %v3513 = vpack.c.bf16 %v3373, %v3373
    %v3514 = vpack.c.bf16 %v3380, %v3380
    %v3515 = vpack.c.bf16 %v3387, %v3387
    %v3516 = vpack.c.bf16 %v3394, %v3394
    %v3517 = vpack.c.bf16 %v3401, %v3401
    %v3518 = vpack.c.bf16 %v3408, %v3408
    %v3519 = vpack.c.bf16 %v3415, %v3415
    %v3520 = vpack.c.bf16 %v3422, %v3422
    %v3521 = vpack.c.bf16 %v3429, %v3429
    %v3522 = vpack.c.bf16 %v3436, %v3436
    %v3523 = vpack.c.bf16 %v3443, %v3443
    %v3524 = vpack.c.bf16 %v3450, %v3450
    %v3525 = vpack.c.bf16 %v3457, %v3457
    %v3526 = vpack.c.bf16 %v3464, %v3464
    %v3527 = vpack.c.bf16 %v3471, %v3471
    %v3528 = vpack.c.bf16 %v3478, %v3478
    %v3529 = vpack.c.bf16 %v3485, %v3485
    %v3530 = vpack.c.bf16 %v3492, %v3492
    %v3531 = vpack.c.bf16 %v3499, %v3499
    %v3532 = vld [vmem:[%s11] sm:$0xf]
    %v3533 = vld [vmem:[%s11 + $0x4] sm:$0xf]
    %v3534 = vld [vmem:[%s11 + $0x8] sm:$0xf]
    %v3535 = vld [vmem:[%s11 + $0xc] sm:$0xf]
    %3568 = vrot.lane.b32.xlu0 %v1497, 96
    %v3569 = vpop.permute.xlu0 %3568
    %3570 = vrot.lane.b32.xlu0 %v1498, 96
    %v3571 = vpop.permute.xlu0 %3570
    %3572 = vrot.lane.b32.xlu0 %v1499, 96
    %v3573 = vpop.permute.xlu0 %3572
    %3574 = vrot.lane.b32.xlu0 %v1500, 96
    %v3575 = vpop.permute.xlu0 %3574
    %3576 = vrot.lane.b32.xlu0 %v1501, 96
    %v3577 = vpop.permute.xlu0 %3576
    %3578 = vrot.lane.b32.xlu0 %v1502, 96
    %v3579 = vpop.permute.xlu0 %3578
    %3580 = vrot.lane.b32.xlu0 %v1503, 96
    %v3581 = vpop.permute.xlu0 %3580
    %3582 = vrot.lane.b32.xlu0 %v1504, 96
    %v3583 = vpop.permute.xlu0 %3582
    %3584 = vrot.lane.b32.xlu0 %v1505, 96
    %v3585 = vpop.permute.xlu0 %3584
    %3586 = vrot.lane.b32.xlu0 %v1506, 96
    %v3587 = vpop.permute.xlu0 %3586
    %3588 = vrot.lane.b32.xlu0 %v1507, 96
    %v3589 = vpop.permute.xlu0 %3588
    %3590 = vrot.lane.b32.xlu0 %v1508, 96
    %v3591 = vpop.permute.xlu0 %3590
    %3592 = vrot.lane.b32.xlu0 %v1509, 96
    %v3593 = vpop.permute.xlu0 %3592
    %3594 = vrot.lane.b32.xlu0 %v1510, 96
    %v3595 = vpop.permute.xlu0 %3594
    %3596 = vrot.lane.b32.xlu0 %v1511, 96
    %v3597 = vpop.permute.xlu0 %3596
    %3598 = vrot.lane.b32.xlu0 %v1512, 96
    %v3599 = vpop.permute.xlu0 %3598
    %3600 = vrot.lane.b32.xlu0 %v1513, 96
    %v3601 = vpop.permute.xlu0 %3600
    %3602 = vrot.lane.b32.xlu0 %v1514, 96
    %v3603 = vpop.permute.xlu0 %3602
    %3604 = vrot.lane.b32.xlu0 %v1515, 96
    %v3605 = vpop.permute.xlu0 %3604
    %3606 = vrot.lane.b32.xlu0 %v1516, 96
    %v3607 = vpop.permute.xlu0 %3606
    %3608 = vrot.lane.b32.xlu0 %v1517, 96
    %v3609 = vpop.permute.xlu0 %3608
    %3610 = vrot.lane.b32.xlu0 %v1518, 96
    %v3611 = vpop.permute.xlu0 %3610
    %3612 = vrot.lane.b32.xlu0 %v1519, 96
    %v3613 = vpop.permute.xlu0 %3612
    %3614 = vrot.lane.b32.xlu0 %v1520, 96
    %v3615 = vpop.permute.xlu0 %3614
    %3616 = vrot.lane.b32.xlu0 %v1521, 96
    %v3617 = vpop.permute.xlu0 %3616
    %3618 = vrot.lane.b32.xlu0 %v1522, 96
    %v3619 = vpop.permute.xlu0 %3618
    %3620 = vrot.lane.b32.xlu0 %v1523, 96
    %v3621 = vpop.permute.xlu0 %3620
    %3622 = vrot.lane.b32.xlu0 %v1524, 96
    %v3623 = vpop.permute.xlu0 %3622
    %3624 = vrot.lane.b32.xlu0 %v1525, 96
    %v3625 = vpop.permute.xlu0 %3624
    %3626 = vrot.lane.b32.xlu0 %v1526, 96
    %v3627 = vpop.permute.xlu0 %3626
    %3628 = vrot.lane.b32.xlu0 %v1527, 96
    %v3629 = vpop.permute.xlu0 %3628
    %3630 = vrot.lane.b32.xlu0 %v1528, 96
    %v3631 = vpop.permute.xlu0 %3630
    %v3664 = vsel %vm1529, %v3569, 0.0
    %3665 = vadd.xlane.f32.xlu0 %v3664
    %v3666 = vpop.xlane.xlu0 %3665
    %v3667 = vsel %vm1529, %v3571, 0.0
    %3668 = vadd.xlane.f32.xlu0 %v3667
    %v3669 = vpop.xlane.xlu0 %3668
    %v3670 = vsel %vm1529, %v3573, 0.0
    %3671 = vadd.xlane.f32.xlu0 %v3670
    %v3672 = vpop.xlane.xlu0 %3671
    %v3673 = vsel %vm1529, %v3575, 0.0
    %3674 = vadd.xlane.f32.xlu0 %v3673
    %v3675 = vpop.xlane.xlu0 %3674
    %v3676 = vsel %vm1529, %v3577, 0.0
    %3677 = vadd.xlane.f32.xlu0 %v3676
    %v3678 = vpop.xlane.xlu0 %3677
    %v3679 = vsel %vm1529, %v3579, 0.0
    %3680 = vadd.xlane.f32.xlu0 %v3679
    %v3681 = vpop.xlane.xlu0 %3680
    %v3682 = vsel %vm1529, %v3581, 0.0
    %3683 = vadd.xlane.f32.xlu0 %v3682
    %v3684 = vpop.xlane.xlu0 %3683
    %v3685 = vsel %vm1529, %v3583, 0.0
    %3686 = vadd.xlane.f32.xlu0 %v3685
    %v3687 = vpop.xlane.xlu0 %3686
    %v3688 = vsel %vm1529, %v3585, 0.0
    %3689 = vadd.xlane.f32.xlu0 %v3688
    %v3690 = vpop.xlane.xlu0 %3689
    %v3691 = vsel %vm1529, %v3587, 0.0
    %3692 = vadd.xlane.f32.xlu0 %v3691
    %v3693 = vpop.xlane.xlu0 %3692
    %v3694 = vsel %vm1529, %v3589, 0.0
    %3695 = vadd.xlane.f32.xlu0 %v3694
    %v3696 = vpop.xlane.xlu0 %3695
    %v3697 = vsel %vm1529, %v3591, 0.0
    %3698 = vadd.xlane.f32.xlu0 %v3697
    %v3699 = vpop.xlane.xlu0 %3698
    %v3700 = vsel %vm1529, %v3593, 0.0
    %3701 = vadd.xlane.f32.xlu0 %v3700
    %v3702 = vpop.xlane.xlu0 %3701
    %v3703 = vsel %vm1529, %v3595, 0.0
    %3704 = vadd.xlane.f32.xlu0 %v3703
    %v3705 = vpop.xlane.xlu0 %3704
    %v3706 = vsel %vm1529, %v3597, 0.0
    %3707 = vadd.xlane.f32.xlu0 %v3706
    %v3708 = vpop.xlane.xlu0 %3707
    %v3709 = vsel %vm1529, %v3599, 0.0
    %3710 = vadd.xlane.f32.xlu0 %v3709
    %v3711 = vpop.xlane.xlu0 %3710
    %v3712 = vsel %vm1529, %v3601, 0.0
    %3713 = vadd.xlane.f32.xlu0 %v3712
    %v3714 = vpop.xlane.xlu0 %3713
    %v3715 = vsel %vm1529, %v3603, 0.0
    %3716 = vadd.xlane.f32.xlu0 %v3715
    %v3717 = vpop.xlane.xlu0 %3716
    %v3718 = vsel %vm1529, %v3605, 0.0
    %3719 = vadd.xlane.f32.xlu0 %v3718
    %v3720 = vpop.xlane.xlu0 %3719
    %v3721 = vsel %vm1529, %v3607, 0.0
    %3722 = vadd.xlane.f32.xlu0 %v3721
    %v3723 = vpop.xlane.xlu0 %3722
    %v3724 = vsel %vm1529, %v3609, 0.0
    %3725 = vadd.xlane.f32.xlu0 %v3724
    %v3726 = vpop.xlane.xlu0 %3725
    %v3727 = vsel %vm1529, %v3611, 0.0
    %3728 = vadd.xlane.f32.xlu0 %v3727
    %v3729 = vpop.xlane.xlu0 %3728
    %v3730 = vsel %vm1529, %v3613, 0.0
    %3731 = vadd.xlane.f32.xlu0 %v3730
    %v3732 = vpop.xlane.xlu0 %3731
    %v3733 = vsel %vm1529, %v3615, 0.0
    %3734 = vadd.xlane.f32.xlu0 %v3733
    %v3735 = vpop.xlane.xlu0 %3734
    %v3736 = vsel %vm1529, %v3617, 0.0
    %3737 = vadd.xlane.f32.xlu0 %v3736
    %v3738 = vpop.xlane.xlu0 %3737
    %v3739 = vsel %vm1529, %v3619, 0.0
    %3740 = vadd.xlane.f32.xlu0 %v3739
    %v3741 = vpop.xlane.xlu0 %3740
    %v3742 = vsel %vm1529, %v3621, 0.0
    %3743 = vadd.xlane.f32.xlu0 %v3742
    %v3744 = vpop.xlane.xlu0 %3743
    %v3745 = vsel %vm1529, %v3623, 0.0
    %3746 = vadd.xlane.f32.xlu0 %v3745
    %v3747 = vpop.xlane.xlu0 %3746
    %v3748 = vsel %vm1529, %v3625, 0.0
    %3749 = vadd.xlane.f32.xlu0 %v3748
    %v3750 = vpop.xlane.xlu0 %3749
    %v3751 = vsel %vm1529, %v3627, 0.0
    %3752 = vadd.xlane.f32.xlu0 %v3751
    %v3753 = vpop.xlane.xlu0 %3752
    %v3754 = vsel %vm1529, %v3629, 0.0
    %3755 = vadd.xlane.f32.xlu0 %v3754
    %v3756 = vpop.xlane.xlu0 %3755
    %v3757 = vsel %vm1529, %v3631, 0.0
    %3758 = vadd.xlane.f32.xlu0 %v3757
    %v3759 = vpop.xlane.xlu0 %3758
    %v3760 = vadd.f32 %v3666, %v1636
    %v3761 = vadd.f32 %v3669, %v1643
    %v3762 = vadd.f32 %v3672, %v1650
    %v3763 = vadd.f32 %v3675, %v1657
    %v3764 = vadd.f32 %v3678, %v1664
    %v3765 = vadd.f32 %v3681, %v1671
    %v3766 = vadd.f32 %v3684, %v1678
    %v3767 = vadd.f32 %v3687, %v1685
    %v3768 = vadd.f32 %v3690, %v1692
    %v3769 = vadd.f32 %v3693, %v1699
    %v3770 = vadd.f32 %v3696, %v1706
    %v3771 = vadd.f32 %v3699, %v1713
    %v3772 = vadd.f32 %v3702, %v1720
    %v3773 = vadd.f32 %v3705, %v1727
    %v3774 = vadd.f32 %v3708, %v1734
    %v3775 = vadd.f32 %v3711, %v1741
    %v3776 = vadd.f32 %v3714, %v1748
    %v3777 = vadd.f32 %v3717, %v1755
    %v3778 = vadd.f32 %v3720, %v1762
    %v3779 = vadd.f32 %v3723, %v1769
    %v3780 = vadd.f32 %v3726, %v1776
    %v3781 = vadd.f32 %v3729, %v1783
    %v3782 = vadd.f32 %v3732, %v1790
    %v3783 = vadd.f32 %v3735, %v1797
    %v3784 = vadd.f32 %v3738, %v1804
    %v3785 = vadd.f32 %v3741, %v1811
    %v3786 = vadd.f32 %v3744, %v1818
    %v3787 = vadd.f32 %v3747, %v1825
    %v3788 = vadd.f32 %v3750, %v1832
    %v3789 = vadd.f32 %v3753, %v1839
    %v3790 = vadd.f32 %v3756, %v1846
    %v3791 = vadd.f32 %v3759, %v1853
    %3824 = vset.pattern.permute.xlu0 0
    %3825 = vperm.xlu0 %3824, %v3760
    %v3826 = vpop.permute.xlu0 %3825
    %3827 = vset.pattern.permute.xlu0 0
    %3828 = vperm.xlu0 %3827, %v3761
    %v3829 = vpop.permute.xlu0 %3828
    %3830 = vset.pattern.permute.xlu0 0
    %3831 = vperm.xlu0 %3830, %v3762
    %v3832 = vpop.permute.xlu0 %3831
    %3833 = vset.pattern.permute.xlu0 0
    %3834 = vperm.xlu0 %3833, %v3763
    %v3835 = vpop.permute.xlu0 %3834
    %3836 = vset.pattern.permute.xlu0 0
    %3837 = vperm.xlu0 %3836, %v3764
    %v3838 = vpop.permute.xlu0 %3837
    %3839 = vset.pattern.permute.xlu0 0
    %3840 = vperm.xlu0 %3839, %v3765
    %v3841 = vpop.permute.xlu0 %3840
    %3842 = vset.pattern.permute.xlu0 0
    %3843 = vperm.xlu0 %3842, %v3766
    %v3844 = vpop.permute.xlu0 %3843
    %3845 = vset.pattern.permute.xlu0 0
    %3846 = vperm.xlu0 %3845, %v3767
    %v3847 = vpop.permute.xlu0 %3846
    %3848 = vset.pattern.permute.xlu0 0
    %3849 = vperm.xlu0 %3848, %v3768
    %v3850 = vpop.permute.xlu0 %3849
    %3851 = vset.pattern.permute.xlu0 0
    %3852 = vperm.xlu0 %3851, %v3769
    %v3853 = vpop.permute.xlu0 %3852
    %3854 = vset.pattern.permute.xlu0 0
    %3855 = vperm.xlu0 %3854, %v3770
    %v3856 = vpop.permute.xlu0 %3855
    %3857 = vset.pattern.permute.xlu0 0
    %3858 = vperm.xlu0 %3857, %v3771
    %v3859 = vpop.permute.xlu0 %3858
    %3860 = vset.pattern.permute.xlu0 0
    %3861 = vperm.xlu0 %3860, %v3772
    %v3862 = vpop.permute.xlu0 %3861
    %3863 = vset.pattern.permute.xlu0 0
    %3864 = vperm.xlu0 %3863, %v3773
    %v3865 = vpop.permute.xlu0 %3864
    %3866 = vset.pattern.permute.xlu0 0
    %3867 = vperm.xlu0 %3866, %v3774
    %v3868 = vpop.permute.xlu0 %3867
    %3869 = vset.pattern.permute.xlu0 0
    %3870 = vperm.xlu0 %3869, %v3775
    %v3871 = vpop.permute.xlu0 %3870
    %3872 = vset.pattern.permute.xlu0 0
    %3873 = vperm.xlu0 %3872, %v3776
    %v3874 = vpop.permute.xlu0 %3873
    %3875 = vset.pattern.permute.xlu0 0
    %3876 = vperm.xlu0 %3875, %v3777
    %v3877 = vpop.permute.xlu0 %3876
    %3878 = vset.pattern.permute.xlu0 0
    %3879 = vperm.xlu0 %3878, %v3778
    %v3880 = vpop.permute.xlu0 %3879
    %3881 = vset.pattern.permute.xlu0 0
    %3882 = vperm.xlu0 %3881, %v3779
    %v3883 = vpop.permute.xlu0 %3882
    %3884 = vset.pattern.permute.xlu0 0
    %3885 = vperm.xlu0 %3884, %v3780
    %v3886 = vpop.permute.xlu0 %3885
    %3887 = vset.pattern.permute.xlu0 0
    %3888 = vperm.xlu0 %3887, %v3781
    %v3889 = vpop.permute.xlu0 %3888
    %3890 = vset.pattern.permute.xlu0 0
    %3891 = vperm.xlu0 %3890, %v3782
    %v3892 = vpop.permute.xlu0 %3891
    %3893 = vset.pattern.permute.xlu0 0
    %3894 = vperm.xlu0 %3893, %v3783
    %v3895 = vpop.permute.xlu0 %3894
    %3896 = vset.pattern.permute.xlu0 0
    %3897 = vperm.xlu0 %3896, %v3784
    %v3898 = vpop.permute.xlu0 %3897
    %3899 = vset.pattern.permute.xlu0 0
    %3900 = vperm.xlu0 %3899, %v3785
    %v3901 = vpop.permute.xlu0 %3900
    %3902 = vset.pattern.permute.xlu0 0
    %3903 = vperm.xlu0 %3902, %v3786
    %v3904 = vpop.permute.xlu0 %3903
    %3905 = vset.pattern.permute.xlu0 0
    %3906 = vperm.xlu0 %3905, %v3787
    %v3907 = vpop.permute.xlu0 %3906
    %3908 = vset.pattern.permute.xlu0 0
    %3909 = vperm.xlu0 %3908, %v3788
    %v3910 = vpop.permute.xlu0 %3909
    %3911 = vset.pattern.permute.xlu0 0
    %3912 = vperm.xlu0 %3911, %v3789
    %v3913 = vpop.permute.xlu0 %3912
    %3914 = vset.pattern.permute.xlu0 0
    %3915 = vperm.xlu0 %3914, %v3790
    %v3916 = vpop.permute.xlu0 %3915
    %3917 = vset.pattern.permute.xlu0 0
    %3918 = vperm.xlu0 %3917, %v3791
    %v3919 = vpop.permute.xlu0 %3918
    %v3920 = vlaneseq
    %v3921 = vshrl.u32 %v3920, 7
    %v3922 = vsub.s32 %v2047, %v3921
    %v3923 = vrot.slane %v3826, %v3922
    %v3924 = vlaneseq
    %v3925 = vshrl.u32 %v3924, 7
    %v3926 = vsub.s32 %v2047, %v3925
    %v3927 = vrot.slane %v3829, %v3926
    %v3928 = vlaneseq
    %v3929 = vshrl.u32 %v3928, 7
    %v3930 = vsub.s32 %v2047, %v3929
    %v3931 = vrot.slane %v3832, %v3930
    %v3932 = vlaneseq
    %v3933 = vshrl.u32 %v3932, 7
    %v3934 = vsub.s32 %v2047, %v3933
    %v3935 = vrot.slane %v3835, %v3934
    %v3936 = vlaneseq
    %v3937 = vshrl.u32 %v3936, 7
    %v3938 = vsub.s32 %v2047, %v3937
    %v3939 = vrot.slane %v3838, %v3938
    %v3940 = vlaneseq
    %v3941 = vshrl.u32 %v3940, 7
    %v3942 = vsub.s32 %v2047, %v3941
    %v3943 = vrot.slane %v3841, %v3942
    %v3944 = vlaneseq
    %v3945 = vshrl.u32 %v3944, 7
    %v3946 = vsub.s32 %v2047, %v3945
    %v3947 = vrot.slane %v3844, %v3946
    %v3948 = vlaneseq
    %v3949 = vshrl.u32 %v3948, 7
    %v3950 = vsub.s32 %v2047, %v3949
    %v3951 = vrot.slane %v3847, %v3950
    %v3952 = vlaneseq
    %v3953 = vshrl.u32 %v3952, 7
    %v3954 = vsub.s32 %v2047, %v3953
    %v3955 = vrot.slane %v3850, %v3954
    %v3956 = vlaneseq
    %v3957 = vshrl.u32 %v3956, 7
    %v3958 = vsub.s32 %v2047, %v3957
    %v3959 = vrot.slane %v3853, %v3958
    %v3960 = vlaneseq
    %v3961 = vshrl.u32 %v3960, 7
    %v3962 = vsub.s32 %v2047, %v3961
    %v3963 = vrot.slane %v3856, %v3962
    %v3964 = vlaneseq
    %v3965 = vshrl.u32 %v3964, 7
    %v3966 = vsub.s32 %v2047, %v3965
    %v3967 = vrot.slane %v3859, %v3966
    %v3968 = vlaneseq
    %v3969 = vshrl.u32 %v3968, 7
    %v3970 = vsub.s32 %v2047, %v3969
    %v3971 = vrot.slane %v3862, %v3970
    %v3972 = vlaneseq
    %v3973 = vshrl.u32 %v3972, 7
    %v3974 = vsub.s32 %v2047, %v3973
    %v3975 = vrot.slane %v3865, %v3974
    %v3976 = vlaneseq
    %v3977 = vshrl.u32 %v3976, 7
    %v3978 = vsub.s32 %v2047, %v3977
    %v3979 = vrot.slane %v3868, %v3978
    %v3980 = vlaneseq
    %v3981 = vshrl.u32 %v3980, 7
    %v3982 = vsub.s32 %v2047, %v3981
    %v3983 = vrot.slane %v3871, %v3982
    %v3984 = vlaneseq
    %v3985 = vshrl.u32 %v3984, 7
    %v3986 = vsub.s32 %v2047, %v3985
    %v3987 = vrot.slane %v3874, %v3986
    %v3988 = vlaneseq
    %v3989 = vshrl.u32 %v3988, 7
    %v3990 = vsub.s32 %v2047, %v3989
    %v3991 = vrot.slane %v3877, %v3990
    %v3992 = vlaneseq
    %v3993 = vshrl.u32 %v3992, 7
    %v3994 = vsub.s32 %v2047, %v3993
    %v3995 = vrot.slane %v3880, %v3994
    %v3996 = vlaneseq
    %v3997 = vshrl.u32 %v3996, 7
    %v3998 = vsub.s32 %v2047, %v3997
    %v3999 = vrot.slane %v3883, %v3998
    %v4000 = vlaneseq
    %v4001 = vshrl.u32 %v4000, 7
    %v4002 = vsub.s32 %v2047, %v4001
    %v4003 = vrot.slane %v3886, %v4002
    %v4004 = vlaneseq
    %v4005 = vshrl.u32 %v4004, 7
    %v4006 = vsub.s32 %v2047, %v4005
    %v4007 = vrot.slane %v3889, %v4006
    %v4008 = vlaneseq
    %v4009 = vshrl.u32 %v4008, 7
    %v4010 = vsub.s32 %v2047, %v4009
    %v4011 = vrot.slane %v3892, %v4010
    %v4012 = vlaneseq
    %v4013 = vshrl.u32 %v4012, 7
    %v4014 = vsub.s32 %v2047, %v4013
    %v4015 = vrot.slane %v3895, %v4014
    %v4016 = vlaneseq
    %v4017 = vshrl.u32 %v4016, 7
    %v4018 = vsub.s32 %v2047, %v4017
    %v4019 = vrot.slane %v3898, %v4018
    %v4020 = vlaneseq
    %v4021 = vshrl.u32 %v4020, 7
    %v4022 = vsub.s32 %v2047, %v4021
    %v4023 = vrot.slane %v3901, %v4022
    %v4024 = vlaneseq
    %v4025 = vshrl.u32 %v4024, 7
    %v4026 = vsub.s32 %v2047, %v4025
    %v4027 = vrot.slane %v3904, %v4026
    %v4028 = vlaneseq
    %v4029 = vshrl.u32 %v4028, 7
    %v4030 = vsub.s32 %v2047, %v4029
    %v4031 = vrot.slane %v3907, %v4030
    %v4032 = vlaneseq
    %v4033 = vshrl.u32 %v4032, 7
    %v4034 = vsub.s32 %v2047, %v4033
    %v4035 = vrot.slane %v3910, %v4034
    %v4036 = vlaneseq
    %v4037 = vshrl.u32 %v4036, 7
    %v4038 = vsub.s32 %v2047, %v4037
    %v4039 = vrot.slane %v3913, %v4038
    %v4040 = vlaneseq
    %v4041 = vshrl.u32 %v4040, 7
    %v4042 = vsub.s32 %v2047, %v4041
    %v4043 = vrot.slane %v3916, %v4042
    %v4044 = vlaneseq
    %v4045 = vshrl.u32 %v4044, 7
    %v4046 = vsub.s32 %v2047, %v4045
    %v4047 = vrot.slane %v3919, %v4046
    %v4048 = vsel %vm2176, %v3927, %v3923
    %v4049 = vsel %vm2178, %v3931, %v4048
    %v4050 = vsel %vm2180, %v3935, %v4049
    %v4051 = vsel %vm2182, %v3939, %v4050
    %v4052 = vsel %vm2184, %v3943, %v4051
    %v4053 = vsel %vm2186, %v3947, %v4052
    %v4054 = vsel %vm2188, %v3951, %v4053
    %v4055 = vsel %vm2176, %v3959, %v3955
    %v4056 = vsel %vm2178, %v3963, %v4055
    %v4057 = vsel %vm2180, %v3967, %v4056
    %v4058 = vsel %vm2182, %v3971, %v4057
    %v4059 = vsel %vm2184, %v3975, %v4058
    %v4060 = vsel %vm2186, %v3979, %v4059
    %v4061 = vsel %vm2188, %v3983, %v4060
    %v4062 = vsel %vm2176, %v3991, %v3987
    %v4063 = vsel %vm2178, %v3995, %v4062
    %v4064 = vsel %vm2180, %v3999, %v4063
    %v4065 = vsel %vm2182, %v4003, %v4064
    %v4066 = vsel %vm2184, %v4007, %v4065
    %v4067 = vsel %vm2186, %v4011, %v4066
    %v4068 = vsel %vm2188, %v4015, %v4067
    %v4069 = vsel %vm2176, %v4023, %v4019
    %v4070 = vsel %vm2178, %v4027, %v4069
    %v4071 = vsel %vm2180, %v4031, %v4070
    %v4072 = vsel %vm2182, %v4035, %v4071
    %v4073 = vsel %vm2184, %v4039, %v4072
    %v4074 = vsel %vm2186, %v4043, %v4073
    %v4075 = vsel %vm2188, %v4047, %v4074
    %v4080 = vsel %vm2215, %v4054, -inf
    %4081 = vmax.xlane.f32.xlu0 %v4080
    %v4082 = vpop.xlane.xlu0 %4081
    %v4083 = vsel %vm2215, %v4061, -inf
    %4084 = vmax.xlane.f32.xlu0 %v4083
    %v4085 = vpop.xlane.xlu0 %4084
    %v4086 = vsel %vm2215, %v4068, -inf
    %4087 = vmax.xlane.f32.xlu0 %v4086
    %v4088 = vpop.xlane.xlu0 %4087
    %v4089 = vsel %vm2215, %v4075, -inf
    %4090 = vmax.xlane.f32.xlu0 %v4089
    %v4091 = vpop.xlane.xlu0 %4090
    %v4096 = vlaneseq
    %v4097 = vshrl.u32 %v4096, 7
    %v4098 = vsub.s32 0, %v4097
    %v4099 = vrot.slane %v4082, %v4098
    %v4100 = vlaneseq
    %v4101 = vshrl.u32 %v4100, 7
    %v4102 = vsub.s32 1, %v4101
    %v4103 = vrot.slane %v4082, %v4102
    %v4104 = vlaneseq
    %v4105 = vshrl.u32 %v4104, 7
    %v4106 = vsub.s32 2, %v4105
    %v4107 = vrot.slane %v4082, %v4106
    %v4108 = vlaneseq
    %v4109 = vshrl.u32 %v4108, 7
    %v4110 = vsub.s32 3, %v4109
    %v4111 = vrot.slane %v4082, %v4110
    %v4112 = vlaneseq
    %v4113 = vshrl.u32 %v4112, 7
    %v4114 = vsub.s32 4, %v4113
    %v4115 = vrot.slane %v4082, %v4114
    %v4116 = vlaneseq
    %v4117 = vshrl.u32 %v4116, 7
    %v4118 = vsub.s32 5, %v4117
    %v4119 = vrot.slane %v4082, %v4118
    %v4120 = vlaneseq
    %v4121 = vshrl.u32 %v4120, 7
    %v4122 = vsub.s32 6, %v4121
    %v4123 = vrot.slane %v4082, %v4122
    %v4124 = vlaneseq
    %v4125 = vshrl.u32 %v4124, 7
    %v4126 = vsub.s32 7, %v4125
    %v4127 = vrot.slane %v4082, %v4126
    %v4128 = vlaneseq
    %v4129 = vshrl.u32 %v4128, 7
    %v4130 = vsub.s32 0, %v4129
    %v4131 = vrot.slane %v4085, %v4130
    %v4132 = vlaneseq
    %v4133 = vshrl.u32 %v4132, 7
    %v4134 = vsub.s32 1, %v4133
    %v4135 = vrot.slane %v4085, %v4134
    %v4136 = vlaneseq
    %v4137 = vshrl.u32 %v4136, 7
    %v4138 = vsub.s32 2, %v4137
    %v4139 = vrot.slane %v4085, %v4138
    %v4140 = vlaneseq
    %v4141 = vshrl.u32 %v4140, 7
    %v4142 = vsub.s32 3, %v4141
    %v4143 = vrot.slane %v4085, %v4142
    %v4144 = vlaneseq
    %v4145 = vshrl.u32 %v4144, 7
    %v4146 = vsub.s32 4, %v4145
    %v4147 = vrot.slane %v4085, %v4146
    %v4148 = vlaneseq
    %v4149 = vshrl.u32 %v4148, 7
    %v4150 = vsub.s32 5, %v4149
    %v4151 = vrot.slane %v4085, %v4150
    %v4152 = vlaneseq
    %v4153 = vshrl.u32 %v4152, 7
    %v4154 = vsub.s32 6, %v4153
    %v4155 = vrot.slane %v4085, %v4154
    %v4156 = vlaneseq
    %v4157 = vshrl.u32 %v4156, 7
    %v4158 = vsub.s32 7, %v4157
    %v4159 = vrot.slane %v4085, %v4158
    %v4160 = vlaneseq
    %v4161 = vshrl.u32 %v4160, 7
    %v4162 = vsub.s32 0, %v4161
    %v4163 = vrot.slane %v4088, %v4162
    %v4164 = vlaneseq
    %v4165 = vshrl.u32 %v4164, 7
    %v4166 = vsub.s32 1, %v4165
    %v4167 = vrot.slane %v4088, %v4166
    %v4168 = vlaneseq
    %v4169 = vshrl.u32 %v4168, 7
    %v4170 = vsub.s32 2, %v4169
    %v4171 = vrot.slane %v4088, %v4170
    %v4172 = vlaneseq
    %v4173 = vshrl.u32 %v4172, 7
    %v4174 = vsub.s32 3, %v4173
    %v4175 = vrot.slane %v4088, %v4174
    %v4176 = vlaneseq
    %v4177 = vshrl.u32 %v4176, 7
    %v4178 = vsub.s32 4, %v4177
    %v4179 = vrot.slane %v4088, %v4178
    %v4180 = vlaneseq
    %v4181 = vshrl.u32 %v4180, 7
    %v4182 = vsub.s32 5, %v4181
    %v4183 = vrot.slane %v4088, %v4182
    %v4184 = vlaneseq
    %v4185 = vshrl.u32 %v4184, 7
    %v4186 = vsub.s32 6, %v4185
    %v4187 = vrot.slane %v4088, %v4186
    %v4188 = vlaneseq
    %v4189 = vshrl.u32 %v4188, 7
    %v4190 = vsub.s32 7, %v4189
    %v4191 = vrot.slane %v4088, %v4190
    %v4192 = vlaneseq
    %v4193 = vshrl.u32 %v4192, 7
    %v4194 = vsub.s32 0, %v4193
    %v4195 = vrot.slane %v4091, %v4194
    %v4196 = vlaneseq
    %v4197 = vshrl.u32 %v4196, 7
    %v4198 = vsub.s32 1, %v4197
    %v4199 = vrot.slane %v4091, %v4198
    %v4200 = vlaneseq
    %v4201 = vshrl.u32 %v4200, 7
    %v4202 = vsub.s32 2, %v4201
    %v4203 = vrot.slane %v4091, %v4202
    %v4204 = vlaneseq
    %v4205 = vshrl.u32 %v4204, 7
    %v4206 = vsub.s32 3, %v4205
    %v4207 = vrot.slane %v4091, %v4206
    %v4208 = vlaneseq
    %v4209 = vshrl.u32 %v4208, 7
    %v4210 = vsub.s32 4, %v4209
    %v4211 = vrot.slane %v4091, %v4210
    %v4212 = vlaneseq
    %v4213 = vshrl.u32 %v4212, 7
    %v4214 = vsub.s32 5, %v4213
    %v4215 = vrot.slane %v4091, %v4214
    %v4216 = vlaneseq
    %v4217 = vshrl.u32 %v4216, 7
    %v4218 = vsub.s32 6, %v4217
    %v4219 = vrot.slane %v4091, %v4218
    %v4220 = vlaneseq
    %v4221 = vshrl.u32 %v4220, 7
    %v4222 = vsub.s32 7, %v4221
    %v4223 = vrot.slane %v4091, %v4222
    %v4256 = vsub.f32 %v3760, %v4099
    %v4257 = vsub.f32 %v3761, %v4103
    %v4258 = vsub.f32 %v3762, %v4107
    %v4259 = vsub.f32 %v3763, %v4111
    %v4260 = vsub.f32 %v3764, %v4115
    %v4261 = vsub.f32 %v3765, %v4119
    %v4262 = vsub.f32 %v3766, %v4123
    %v4263 = vsub.f32 %v3767, %v4127
    %v4264 = vsub.f32 %v3768, %v4131
    %v4265 = vsub.f32 %v3769, %v4135
    %v4266 = vsub.f32 %v3770, %v4139
    %v4267 = vsub.f32 %v3771, %v4143
    %v4268 = vsub.f32 %v3772, %v4147
    %v4269 = vsub.f32 %v3773, %v4151
    %v4270 = vsub.f32 %v3774, %v4155
    %v4271 = vsub.f32 %v3775, %v4159
    %v4272 = vsub.f32 %v3776, %v4163
    %v4273 = vsub.f32 %v3777, %v4167
    %v4274 = vsub.f32 %v3778, %v4171
    %v4275 = vsub.f32 %v3779, %v4175
    %v4276 = vsub.f32 %v3780, %v4179
    %v4277 = vsub.f32 %v3781, %v4183
    %v4278 = vsub.f32 %v3782, %v4187
    %v4279 = vsub.f32 %v3783, %v4191
    %v4280 = vsub.f32 %v3784, %v4195
    %v4281 = vsub.f32 %v3785, %v4199
    %v4282 = vsub.f32 %v3786, %v4203
    %v4283 = vsub.f32 %v3787, %v4207
    %v4284 = vsub.f32 %v3788, %v4211
    %v4285 = vsub.f32 %v3789, %v4215
    %v4286 = vsub.f32 %v3790, %v4219
    %v4287 = vsub.f32 %v3791, %v4223
    %v4288 = vmul.f32 %v4256, 1.442695
    %v4289 = vpow.pop %v4288
    %v4290 = vmul.f32 %v4257, 1.442695
    %v4291 = vpow.pop %v4290
    %v4292 = vmul.f32 %v4258, 1.442695
    %v4293 = vpow.pop %v4292
    %v4294 = vmul.f32 %v4259, 1.442695
    %v4295 = vpow.pop %v4294
    %v4296 = vmul.f32 %v4260, 1.442695
    %v4297 = vpow.pop %v4296
    %v4298 = vmul.f32 %v4261, 1.442695
    %v4299 = vpow.pop %v4298
    %v4300 = vmul.f32 %v4262, 1.442695
    %v4301 = vpow.pop %v4300
    %v4302 = vmul.f32 %v4263, 1.442695
    %v4303 = vpow.pop %v4302
    %v4304 = vmul.f32 %v4264, 1.442695
    %v4305 = vpow.pop %v4304
    %v4306 = vmul.f32 %v4265, 1.442695
    %v4307 = vpow.pop %v4306
    %v4308 = vmul.f32 %v4266, 1.442695
    %v4309 = vpow.pop %v4308
    %v4310 = vmul.f32 %v4267, 1.442695
    %v4311 = vpow.pop %v4310
    %v4312 = vmul.f32 %v4268, 1.442695
    %v4313 = vpow.pop %v4312
    %v4314 = vmul.f32 %v4269, 1.442695
    %v4315 = vpow.pop %v4314
    %v4316 = vmul.f32 %v4270, 1.442695
    %v4317 = vpow.pop %v4316
    %v4318 = vmul.f32 %v4271, 1.442695
    %v4319 = vpow.pop %v4318
    %v4320 = vmul.f32 %v4272, 1.442695
    %v4321 = vpow.pop %v4320
    %v4322 = vmul.f32 %v4273, 1.442695
    %v4323 = vpow.pop %v4322
    %v4324 = vmul.f32 %v4274, 1.442695
    %v4325 = vpow.pop %v4324
    %v4326 = vmul.f32 %v4275, 1.442695
    %v4327 = vpow.pop %v4326
    %v4328 = vmul.f32 %v4276, 1.442695
    %v4329 = vpow.pop %v4328
    %v4330 = vmul.f32 %v4277, 1.442695
    %v4331 = vpow.pop %v4330
    %v4332 = vmul.f32 %v4278, 1.442695
    %v4333 = vpow.pop %v4332
    %v4334 = vmul.f32 %v4279, 1.442695
    %v4335 = vpow.pop %v4334
    %v4336 = vmul.f32 %v4280, 1.442695
    %v4337 = vpow.pop %v4336
    %v4338 = vmul.f32 %v4281, 1.442695
    %v4339 = vpow.pop %v4338
    %v4340 = vmul.f32 %v4282, 1.442695
    %v4341 = vpow.pop %v4340
    %v4342 = vmul.f32 %v4283, 1.442695
    %v4343 = vpow.pop %v4342
    %v4344 = vmul.f32 %v4284, 1.442695
    %v4345 = vpow.pop %v4344
    %v4346 = vmul.f32 %v4285, 1.442695
    %v4347 = vpow.pop %v4346
    %v4348 = vmul.f32 %v4286, 1.442695
    %v4349 = vpow.pop %v4348
    %v4350 = vmul.f32 %v4287, 1.442695
    %v4351 = vpow.pop %v4350
    %4384 = vset.pattern.permute.xlu0 0
    %4385 = vperm.xlu0 %4384, %v4289
    %v4386 = vpop.permute.xlu0 %4385
    %4387 = vset.pattern.permute.xlu0 0
    %4388 = vperm.xlu0 %4387, %v4291
    %v4389 = vpop.permute.xlu0 %4388
    %4390 = vset.pattern.permute.xlu0 0
    %4391 = vperm.xlu0 %4390, %v4293
    %v4392 = vpop.permute.xlu0 %4391
    %4393 = vset.pattern.permute.xlu0 0
    %4394 = vperm.xlu0 %4393, %v4295
    %v4395 = vpop.permute.xlu0 %4394
    %4396 = vset.pattern.permute.xlu0 0
    %4397 = vperm.xlu0 %4396, %v4297
    %v4398 = vpop.permute.xlu0 %4397
    %4399 = vset.pattern.permute.xlu0 0
    %4400 = vperm.xlu0 %4399, %v4299
    %v4401 = vpop.permute.xlu0 %4400
    %4402 = vset.pattern.permute.xlu0 0
    %4403 = vperm.xlu0 %4402, %v4301
    %v4404 = vpop.permute.xlu0 %4403
    %4405 = vset.pattern.permute.xlu0 0
    %4406 = vperm.xlu0 %4405, %v4303
    %v4407 = vpop.permute.xlu0 %4406
    %4408 = vset.pattern.permute.xlu0 0
    %4409 = vperm.xlu0 %4408, %v4305
    %v4410 = vpop.permute.xlu0 %4409
    %4411 = vset.pattern.permute.xlu0 0
    %4412 = vperm.xlu0 %4411, %v4307
    %v4413 = vpop.permute.xlu0 %4412
    %4414 = vset.pattern.permute.xlu0 0
    %4415 = vperm.xlu0 %4414, %v4309
    %v4416 = vpop.permute.xlu0 %4415
    %4417 = vset.pattern.permute.xlu0 0
    %4418 = vperm.xlu0 %4417, %v4311
    %v4419 = vpop.permute.xlu0 %4418
    %4420 = vset.pattern.permute.xlu0 0
    %4421 = vperm.xlu0 %4420, %v4313
    %v4422 = vpop.permute.xlu0 %4421
    %4423 = vset.pattern.permute.xlu0 0
    %4424 = vperm.xlu0 %4423, %v4315
    %v4425 = vpop.permute.xlu0 %4424
    %4426 = vset.pattern.permute.xlu0 0
    %4427 = vperm.xlu0 %4426, %v4317
    %v4428 = vpop.permute.xlu0 %4427
    %4429 = vset.pattern.permute.xlu0 0
    %4430 = vperm.xlu0 %4429, %v4319
    %v4431 = vpop.permute.xlu0 %4430
    %4432 = vset.pattern.permute.xlu0 0
    %4433 = vperm.xlu0 %4432, %v4321
    %v4434 = vpop.permute.xlu0 %4433
    %4435 = vset.pattern.permute.xlu0 0
    %4436 = vperm.xlu0 %4435, %v4323
    %v4437 = vpop.permute.xlu0 %4436
    %4438 = vset.pattern.permute.xlu0 0
    %4439 = vperm.xlu0 %4438, %v4325
    %v4440 = vpop.permute.xlu0 %4439
    %4441 = vset.pattern.permute.xlu0 0
    %4442 = vperm.xlu0 %4441, %v4327
    %v4443 = vpop.permute.xlu0 %4442
    %4444 = vset.pattern.permute.xlu0 0
    %4445 = vperm.xlu0 %4444, %v4329
    %v4446 = vpop.permute.xlu0 %4445
    %4447 = vset.pattern.permute.xlu0 0
    %4448 = vperm.xlu0 %4447, %v4331
    %v4449 = vpop.permute.xlu0 %4448
    %4450 = vset.pattern.permute.xlu0 0
    %4451 = vperm.xlu0 %4450, %v4333
    %v4452 = vpop.permute.xlu0 %4451
    %4453 = vset.pattern.permute.xlu0 0
    %4454 = vperm.xlu0 %4453, %v4335
    %v4455 = vpop.permute.xlu0 %4454
    %4456 = vset.pattern.permute.xlu0 0
    %4457 = vperm.xlu0 %4456, %v4337
    %v4458 = vpop.permute.xlu0 %4457
    %4459 = vset.pattern.permute.xlu0 0
    %4460 = vperm.xlu0 %4459, %v4339
    %v4461 = vpop.permute.xlu0 %4460
    %4462 = vset.pattern.permute.xlu0 0
    %4463 = vperm.xlu0 %4462, %v4341
    %v4464 = vpop.permute.xlu0 %4463
    %4465 = vset.pattern.permute.xlu0 0
    %4466 = vperm.xlu0 %4465, %v4343
    %v4467 = vpop.permute.xlu0 %4466
    %4468 = vset.pattern.permute.xlu0 0
    %4469 = vperm.xlu0 %4468, %v4345
    %v4470 = vpop.permute.xlu0 %4469
    %4471 = vset.pattern.permute.xlu0 0
    %4472 = vperm.xlu0 %4471, %v4347
    %v4473 = vpop.permute.xlu0 %4472
    %4474 = vset.pattern.permute.xlu0 0
    %4475 = vperm.xlu0 %4474, %v4349
    %v4476 = vpop.permute.xlu0 %4475
    %4477 = vset.pattern.permute.xlu0 0
    %4478 = vperm.xlu0 %4477, %v4351
    %v4479 = vpop.permute.xlu0 %4478
    %v4480 = vlaneseq
    %v4481 = vshrl.u32 %v4480, 7
    %v4482 = vsub.s32 %v2047, %v4481
    %v4483 = vrot.slane %v4386, %v4482
    %v4484 = vlaneseq
    %v4485 = vshrl.u32 %v4484, 7
    %v4486 = vsub.s32 %v2047, %v4485
    %v4487 = vrot.slane %v4389, %v4486
    %v4488 = vlaneseq
    %v4489 = vshrl.u32 %v4488, 7
    %v4490 = vsub.s32 %v2047, %v4489
    %v4491 = vrot.slane %v4392, %v4490
    %v4492 = vlaneseq
    %v4493 = vshrl.u32 %v4492, 7
    %v4494 = vsub.s32 %v2047, %v4493
    %v4495 = vrot.slane %v4395, %v4494
    %v4496 = vlaneseq
    %v4497 = vshrl.u32 %v4496, 7
    %v4498 = vsub.s32 %v2047, %v4497
    %v4499 = vrot.slane %v4398, %v4498
    %v4500 = vlaneseq
    %v4501 = vshrl.u32 %v4500, 7
    %v4502 = vsub.s32 %v2047, %v4501
    %v4503 = vrot.slane %v4401, %v4502
    %v4504 = vlaneseq
    %v4505 = vshrl.u32 %v4504, 7
    %v4506 = vsub.s32 %v2047, %v4505
    %v4507 = vrot.slane %v4404, %v4506
    %v4508 = vlaneseq
    %v4509 = vshrl.u32 %v4508, 7
    %v4510 = vsub.s32 %v2047, %v4509
    %v4511 = vrot.slane %v4407, %v4510
    %v4512 = vlaneseq
    %v4513 = vshrl.u32 %v4512, 7
    %v4514 = vsub.s32 %v2047, %v4513
    %v4515 = vrot.slane %v4410, %v4514
    %v4516 = vlaneseq
    %v4517 = vshrl.u32 %v4516, 7
    %v4518 = vsub.s32 %v2047, %v4517
    %v4519 = vrot.slane %v4413, %v4518
    %v4520 = vlaneseq
    %v4521 = vshrl.u32 %v4520, 7
    %v4522 = vsub.s32 %v2047, %v4521
    %v4523 = vrot.slane %v4416, %v4522
    %v4524 = vlaneseq
    %v4525 = vshrl.u32 %v4524, 7
    %v4526 = vsub.s32 %v2047, %v4525
    %v4527 = vrot.slane %v4419, %v4526
    %v4528 = vlaneseq
    %v4529 = vshrl.u32 %v4528, 7
    %v4530 = vsub.s32 %v2047, %v4529
    %v4531 = vrot.slane %v4422, %v4530
    %v4532 = vlaneseq
    %v4533 = vshrl.u32 %v4532, 7
    %v4534 = vsub.s32 %v2047, %v4533
    %v4535 = vrot.slane %v4425, %v4534
    %v4536 = vlaneseq
    %v4537 = vshrl.u32 %v4536, 7
    %v4538 = vsub.s32 %v2047, %v4537
    %v4539 = vrot.slane %v4428, %v4538
    %v4540 = vlaneseq
    %v4541 = vshrl.u32 %v4540, 7
    %v4542 = vsub.s32 %v2047, %v4541
    %v4543 = vrot.slane %v4431, %v4542
    %v4544 = vlaneseq
    %v4545 = vshrl.u32 %v4544, 7
    %v4546 = vsub.s32 %v2047, %v4545
    %v4547 = vrot.slane %v4434, %v4546
    %v4548 = vlaneseq
    %v4549 = vshrl.u32 %v4548, 7
    %v4550 = vsub.s32 %v2047, %v4549
    %v4551 = vrot.slane %v4437, %v4550
    %v4552 = vlaneseq
    %v4553 = vshrl.u32 %v4552, 7
    %v4554 = vsub.s32 %v2047, %v4553
    %v4555 = vrot.slane %v4440, %v4554
    %v4556 = vlaneseq
    %v4557 = vshrl.u32 %v4556, 7
    %v4558 = vsub.s32 %v2047, %v4557
    %v4559 = vrot.slane %v4443, %v4558
    %v4560 = vlaneseq
    %v4561 = vshrl.u32 %v4560, 7
    %v4562 = vsub.s32 %v2047, %v4561
    %v4563 = vrot.slane %v4446, %v4562
    %v4564 = vlaneseq
    %v4565 = vshrl.u32 %v4564, 7
    %v4566 = vsub.s32 %v2047, %v4565
    %v4567 = vrot.slane %v4449, %v4566
    %v4568 = vlaneseq
    %v4569 = vshrl.u32 %v4568, 7
    %v4570 = vsub.s32 %v2047, %v4569
    %v4571 = vrot.slane %v4452, %v4570
    %v4572 = vlaneseq
    %v4573 = vshrl.u32 %v4572, 7
    %v4574 = vsub.s32 %v2047, %v4573
    %v4575 = vrot.slane %v4455, %v4574
    %v4576 = vlaneseq
    %v4577 = vshrl.u32 %v4576, 7
    %v4578 = vsub.s32 %v2047, %v4577
    %v4579 = vrot.slane %v4458, %v4578
    %v4580 = vlaneseq
    %v4581 = vshrl.u32 %v4580, 7
    %v4582 = vsub.s32 %v2047, %v4581
    %v4583 = vrot.slane %v4461, %v4582
    %v4584 = vlaneseq
    %v4585 = vshrl.u32 %v4584, 7
    %v4586 = vsub.s32 %v2047, %v4585
    %v4587 = vrot.slane %v4464, %v4586
    %v4588 = vlaneseq
    %v4589 = vshrl.u32 %v4588, 7
    %v4590 = vsub.s32 %v2047, %v4589
    %v4591 = vrot.slane %v4467, %v4590
    %v4592 = vlaneseq
    %v4593 = vshrl.u32 %v4592, 7
    %v4594 = vsub.s32 %v2047, %v4593
    %v4595 = vrot.slane %v4470, %v4594
    %v4596 = vlaneseq
    %v4597 = vshrl.u32 %v4596, 7
    %v4598 = vsub.s32 %v2047, %v4597
    %v4599 = vrot.slane %v4473, %v4598
    %v4600 = vlaneseq
    %v4601 = vshrl.u32 %v4600, 7
    %v4602 = vsub.s32 %v2047, %v4601
    %v4603 = vrot.slane %v4476, %v4602
    %v4604 = vlaneseq
    %v4605 = vshrl.u32 %v4604, 7
    %v4606 = vsub.s32 %v2047, %v4605
    %v4607 = vrot.slane %v4479, %v4606
    %v4608 = vsel %vm2176, %v4487, %v4483
    %v4609 = vsel %vm2178, %v4491, %v4608
    %v4610 = vsel %vm2180, %v4495, %v4609
    %v4611 = vsel %vm2182, %v4499, %v4610
    %v4612 = vsel %vm2184, %v4503, %v4611
    %v4613 = vsel %vm2186, %v4507, %v4612
    %v4614 = vsel %vm2188, %v4511, %v4613
    %v4615 = vsel %vm2176, %v4519, %v4515
    %v4616 = vsel %vm2178, %v4523, %v4615
    %v4617 = vsel %vm2180, %v4527, %v4616
    %v4618 = vsel %vm2182, %v4531, %v4617
    %v4619 = vsel %vm2184, %v4535, %v4618
    %v4620 = vsel %vm2186, %v4539, %v4619
    %v4621 = vsel %vm2188, %v4543, %v4620
    %v4622 = vsel %vm2176, %v4551, %v4547
    %v4623 = vsel %vm2178, %v4555, %v4622
    %v4624 = vsel %vm2180, %v4559, %v4623
    %v4625 = vsel %vm2182, %v4563, %v4624
    %v4626 = vsel %vm2184, %v4567, %v4625
    %v4627 = vsel %vm2186, %v4571, %v4626
    %v4628 = vsel %vm2188, %v4575, %v4627
    %v4629 = vsel %vm2176, %v4583, %v4579
    %v4630 = vsel %vm2178, %v4587, %v4629
    %v4631 = vsel %vm2180, %v4591, %v4630
    %v4632 = vsel %vm2182, %v4595, %v4631
    %v4633 = vsel %vm2184, %v4599, %v4632
    %v4634 = vsel %vm2186, %v4603, %v4633
    %v4635 = vsel %vm2188, %v4607, %v4634
    %v4640 = vsel %vm2215, %v4614, 0.0
    %4641 = vadd.xlane.f32.xlu0 %v4640
    %v4642 = vpop.xlane.xlu0 %4641
    %v4643 = vsel %vm2215, %v4621, 0.0
    %4644 = vadd.xlane.f32.xlu0 %v4643
    %v4645 = vpop.xlane.xlu0 %4644
    %v4646 = vsel %vm2215, %v4628, 0.0
    %4647 = vadd.xlane.f32.xlu0 %v4646
    %v4648 = vpop.xlane.xlu0 %4647
    %v4649 = vsel %vm2215, %v4635, 0.0
    %4650 = vadd.xlane.f32.xlu0 %v4649
    %v4651 = vpop.xlane.xlu0 %4650
    %v4652 = vrcp.pop %v4642
    %v4653 = vrcp.pop %v4645
    %v4654 = vrcp.pop %v4648
    %v4655 = vrcp.pop %v4651
    %v4660 = vlaneseq
    %v4661 = vshrl.u32 %v4660, 7
    %v4662 = vsub.s32 0, %v4661
    %v4663 = vrot.slane %v4652, %v4662
    %v4664 = vlaneseq
    %v4665 = vshrl.u32 %v4664, 7
    %v4666 = vsub.s32 1, %v4665
    %v4667 = vrot.slane %v4652, %v4666
    %v4668 = vlaneseq
    %v4669 = vshrl.u32 %v4668, 7
    %v4670 = vsub.s32 2, %v4669
    %v4671 = vrot.slane %v4652, %v4670
    %v4672 = vlaneseq
    %v4673 = vshrl.u32 %v4672, 7
    %v4674 = vsub.s32 3, %v4673
    %v4675 = vrot.slane %v4652, %v4674
    %v4676 = vlaneseq
    %v4677 = vshrl.u32 %v4676, 7
    %v4678 = vsub.s32 4, %v4677
    %v4679 = vrot.slane %v4652, %v4678
    %v4680 = vlaneseq
    %v4681 = vshrl.u32 %v4680, 7
    %v4682 = vsub.s32 5, %v4681
    %v4683 = vrot.slane %v4652, %v4682
    %v4684 = vlaneseq
    %v4685 = vshrl.u32 %v4684, 7
    %v4686 = vsub.s32 6, %v4685
    %v4687 = vrot.slane %v4652, %v4686
    %v4688 = vlaneseq
    %v4689 = vshrl.u32 %v4688, 7
    %v4690 = vsub.s32 7, %v4689
    %v4691 = vrot.slane %v4652, %v4690
    %v4692 = vlaneseq
    %v4693 = vshrl.u32 %v4692, 7
    %v4694 = vsub.s32 0, %v4693
    %v4695 = vrot.slane %v4653, %v4694
    %v4696 = vlaneseq
    %v4697 = vshrl.u32 %v4696, 7
    %v4698 = vsub.s32 1, %v4697
    %v4699 = vrot.slane %v4653, %v4698
    %v4700 = vlaneseq
    %v4701 = vshrl.u32 %v4700, 7
    %v4702 = vsub.s32 2, %v4701
    %v4703 = vrot.slane %v4653, %v4702
    %v4704 = vlaneseq
    %v4705 = vshrl.u32 %v4704, 7
    %v4706 = vsub.s32 3, %v4705
    %v4707 = vrot.slane %v4653, %v4706
    %v4708 = vlaneseq
    %v4709 = vshrl.u32 %v4708, 7
    %v4710 = vsub.s32 4, %v4709
    %v4711 = vrot.slane %v4653, %v4710
    %v4712 = vlaneseq
    %v4713 = vshrl.u32 %v4712, 7
    %v4714 = vsub.s32 5, %v4713
    %v4715 = vrot.slane %v4653, %v4714
    %v4716 = vlaneseq
    %v4717 = vshrl.u32 %v4716, 7
    %v4718 = vsub.s32 6, %v4717
    %v4719 = vrot.slane %v4653, %v4718
    %v4720 = vlaneseq
    %v4721 = vshrl.u32 %v4720, 7
    %v4722 = vsub.s32 7, %v4721
    %v4723 = vrot.slane %v4653, %v4722
    %v4724 = vlaneseq
    %v4725 = vshrl.u32 %v4724, 7
    %v4726 = vsub.s32 0, %v4725
    %v4727 = vrot.slane %v4654, %v4726
    %v4728 = vlaneseq
    %v4729 = vshrl.u32 %v4728, 7
    %v4730 = vsub.s32 1, %v4729
    %v4731 = vrot.slane %v4654, %v4730
    %v4732 = vlaneseq
    %v4733 = vshrl.u32 %v4732, 7
    %v4734 = vsub.s32 2, %v4733
    %v4735 = vrot.slane %v4654, %v4734
    %v4736 = vlaneseq
    %v4737 = vshrl.u32 %v4736, 7
    %v4738 = vsub.s32 3, %v4737
    %v4739 = vrot.slane %v4654, %v4738
    %v4740 = vlaneseq
    %v4741 = vshrl.u32 %v4740, 7
    %v4742 = vsub.s32 4, %v4741
    %v4743 = vrot.slane %v4654, %v4742
    %v4744 = vlaneseq
    %v4745 = vshrl.u32 %v4744, 7
    %v4746 = vsub.s32 5, %v4745
    %v4747 = vrot.slane %v4654, %v4746
    %v4748 = vlaneseq
    %v4749 = vshrl.u32 %v4748, 7
    %v4750 = vsub.s32 6, %v4749
    %v4751 = vrot.slane %v4654, %v4750
    %v4752 = vlaneseq
    %v4753 = vshrl.u32 %v4752, 7
    %v4754 = vsub.s32 7, %v4753
    %v4755 = vrot.slane %v4654, %v4754
    %v4756 = vlaneseq
    %v4757 = vshrl.u32 %v4756, 7
    %v4758 = vsub.s32 0, %v4757
    %v4759 = vrot.slane %v4655, %v4758
    %v4760 = vlaneseq
    %v4761 = vshrl.u32 %v4760, 7
    %v4762 = vsub.s32 1, %v4761
    %v4763 = vrot.slane %v4655, %v4762
    %v4764 = vlaneseq
    %v4765 = vshrl.u32 %v4764, 7
    %v4766 = vsub.s32 2, %v4765
    %v4767 = vrot.slane %v4655, %v4766
    %v4768 = vlaneseq
    %v4769 = vshrl.u32 %v4768, 7
    %v4770 = vsub.s32 3, %v4769
    %v4771 = vrot.slane %v4655, %v4770
    %v4772 = vlaneseq
    %v4773 = vshrl.u32 %v4772, 7
    %v4774 = vsub.s32 4, %v4773
    %v4775 = vrot.slane %v4655, %v4774
    %v4776 = vlaneseq
    %v4777 = vshrl.u32 %v4776, 7
    %v4778 = vsub.s32 5, %v4777
    %v4779 = vrot.slane %v4655, %v4778
    %v4780 = vlaneseq
    %v4781 = vshrl.u32 %v4780, 7
    %v4782 = vsub.s32 6, %v4781
    %v4783 = vrot.slane %v4655, %v4782
    %v4784 = vlaneseq
    %v4785 = vshrl.u32 %v4784, 7
    %v4786 = vsub.s32 7, %v4785
    %v4787 = vrot.slane %v4655, %v4786
    %v4820 = vmul.f32 %v4289, %v4663
    %v4821 = vmul.f32 %v4291, %v4667
    %v4822 = vmul.f32 %v4293, %v4671
    %v4823 = vmul.f32 %v4295, %v4675
    %v4824 = vmul.f32 %v4297, %v4679
    %v4825 = vmul.f32 %v4299, %v4683
    %v4826 = vmul.f32 %v4301, %v4687
    %v4827 = vmul.f32 %v4303, %v4691
    %v4828 = vmul.f32 %v4305, %v4695
    %v4829 = vmul.f32 %v4307, %v4699
    %v4830 = vmul.f32 %v4309, %v4703
    %v4831 = vmul.f32 %v4311, %v4707
    %v4832 = vmul.f32 %v4313, %v4711
    %v4833 = vmul.f32 %v4315, %v4715
    %v4834 = vmul.f32 %v4317, %v4719
    %v4835 = vmul.f32 %v4319, %v4723
    %v4836 = vmul.f32 %v4321, %v4727
    %v4837 = vmul.f32 %v4323, %v4731
    %v4838 = vmul.f32 %v4325, %v4735
    %v4839 = vmul.f32 %v4327, %v4739
    %v4840 = vmul.f32 %v4329, %v4743
    %v4841 = vmul.f32 %v4331, %v4747
    %v4842 = vmul.f32 %v4333, %v4751
    %v4843 = vmul.f32 %v4335, %v4755
    %v4844 = vmul.f32 %v4337, %v4759
    %v4845 = vmul.f32 %v4339, %v4763
    %v4846 = vmul.f32 %v4341, %v4767
    %v4847 = vmul.f32 %v4343, %v4771
    %v4848 = vmul.f32 %v4345, %v4775
    %v4849 = vmul.f32 %v4347, %v4779
    %v4850 = vmul.f32 %v4349, %v4783
    %v4851 = vmul.f32 %v4351, %v4787
    %4853 = vset.pattern.permute.xlu0 0
    %4854 = vperm.xlu0 %4853, %v4820
    %v4855 = vpop.permute.xlu0 %4854
    %4858 = vset.pattern.permute.xlu0 0
    %4859 = vperm.xlu0 %4858, %v4821
    %v4860 = vpop.permute.xlu0 %4859
    %4863 = vset.pattern.permute.xlu0 0
    %4864 = vperm.xlu0 %4863, %v4822
    %v4865 = vpop.permute.xlu0 %4864
    %4868 = vset.pattern.permute.xlu0 0
    %4869 = vperm.xlu0 %4868, %v4823
    %v4870 = vpop.permute.xlu0 %4869
    %4873 = vset.pattern.permute.xlu0 0
    %4874 = vperm.xlu0 %4873, %v4824
    %v4875 = vpop.permute.xlu0 %4874
    %4878 = vset.pattern.permute.xlu0 0
    %4879 = vperm.xlu0 %4878, %v4825
    %v4880 = vpop.permute.xlu0 %4879
    %4883 = vset.pattern.permute.xlu0 0
    %4884 = vperm.xlu0 %4883, %v4826
    %v4885 = vpop.permute.xlu0 %4884
    %4888 = vset.pattern.permute.xlu0 0
    %4889 = vperm.xlu0 %4888, %v4827
    %v4890 = vpop.permute.xlu0 %4889
    %4893 = vset.pattern.permute.xlu0 0
    %4894 = vperm.xlu0 %4893, %v4828
    %v4895 = vpop.permute.xlu0 %4894
    %4898 = vset.pattern.permute.xlu0 0
    %4899 = vperm.xlu0 %4898, %v4829
    %v4900 = vpop.permute.xlu0 %4899
    %4903 = vset.pattern.permute.xlu0 0
    %4904 = vperm.xlu0 %4903, %v4830
    %v4905 = vpop.permute.xlu0 %4904
    %4908 = vset.pattern.permute.xlu0 0
    %4909 = vperm.xlu0 %4908, %v4831
    %v4910 = vpop.permute.xlu0 %4909
    %4913 = vset.pattern.permute.xlu0 0
    %4914 = vperm.xlu0 %4913, %v4832
    %v4915 = vpop.permute.xlu0 %4914
    %4918 = vset.pattern.permute.xlu0 0
    %4919 = vperm.xlu0 %4918, %v4833
    %v4920 = vpop.permute.xlu0 %4919
    %4923 = vset.pattern.permute.xlu0 0
    %4924 = vperm.xlu0 %4923, %v4834
    %v4925 = vpop.permute.xlu0 %4924
    %4928 = vset.pattern.permute.xlu0 0
    %4929 = vperm.xlu0 %4928, %v4835
    %v4930 = vpop.permute.xlu0 %4929
    %4933 = vset.pattern.permute.xlu0 0
    %4934 = vperm.xlu0 %4933, %v4836
    %v4935 = vpop.permute.xlu0 %4934
    %4938 = vset.pattern.permute.xlu0 0
    %4939 = vperm.xlu0 %4938, %v4837
    %v4940 = vpop.permute.xlu0 %4939
    %4943 = vset.pattern.permute.xlu0 0
    %4944 = vperm.xlu0 %4943, %v4838
    %v4945 = vpop.permute.xlu0 %4944
    %4948 = vset.pattern.permute.xlu0 0
    %4949 = vperm.xlu0 %4948, %v4839
    %v4950 = vpop.permute.xlu0 %4949
    %4953 = vset.pattern.permute.xlu0 0
    %4954 = vperm.xlu0 %4953, %v4840
    %v4955 = vpop.permute.xlu0 %4954
    %4958 = vset.pattern.permute.xlu0 0
    %4959 = vperm.xlu0 %4958, %v4841
    %v4960 = vpop.permute.xlu0 %4959
    %4963 = vset.pattern.permute.xlu0 0
    %4964 = vperm.xlu0 %4963, %v4842
    %v4965 = vpop.permute.xlu0 %4964
    %4968 = vset.pattern.permute.xlu0 0
    %4969 = vperm.xlu0 %4968, %v4843
    %v4970 = vpop.permute.xlu0 %4969
    %4973 = vset.pattern.permute.xlu0 0
    %4974 = vperm.xlu0 %4973, %v4844
    %v4975 = vpop.permute.xlu0 %4974
    %4978 = vset.pattern.permute.xlu0 0
    %4979 = vperm.xlu0 %4978, %v4845
    %v4980 = vpop.permute.xlu0 %4979
    %4983 = vset.pattern.permute.xlu0 0
    %4984 = vperm.xlu0 %4983, %v4846
    %v4985 = vpop.permute.xlu0 %4984
    %4988 = vset.pattern.permute.xlu0 0
    %4989 = vperm.xlu0 %4988, %v4847
    %v4990 = vpop.permute.xlu0 %4989
    %4993 = vset.pattern.permute.xlu0 0
    %4994 = vperm.xlu0 %4993, %v4848
    %v4995 = vpop.permute.xlu0 %4994
    %4998 = vset.pattern.permute.xlu0 0
    %4999 = vperm.xlu0 %4998, %v4849
    %v5000 = vpop.permute.xlu0 %4999
    %5003 = vset.pattern.permute.xlu0 0
    %5004 = vperm.xlu0 %5003, %v4850
    %v5005 = vpop.permute.xlu0 %5004
    %5008 = vset.pattern.permute.xlu0 0
    %5009 = vperm.xlu0 %5008, %v4851
    %v5010 = vpop.permute.xlu0 %5009
    %5012 = vrot.lane.b32.xlu0 %v1069, 32
    %v5013 = vpop.permute.xlu0 %5012
    %5014 = vrot.lane.b32.xlu0 %v1101, 32
    %v5015 = vpop.permute.xlu0 %5014
    %5016 = vrot.lane.b32.xlu0 %v1070, 32
    %v5017 = vpop.permute.xlu0 %5016
    %5018 = vrot.lane.b32.xlu0 %v1102, 32
    %v5019 = vpop.permute.xlu0 %5018
    %5020 = vrot.lane.b32.xlu0 %v1071, 32
    %v5021 = vpop.permute.xlu0 %5020
    %5022 = vrot.lane.b32.xlu0 %v1103, 32
    %v5023 = vpop.permute.xlu0 %5022
    %5024 = vrot.lane.b32.xlu0 %v1072, 32
    %v5025 = vpop.permute.xlu0 %5024
    %5026 = vrot.lane.b32.xlu0 %v1104, 32
    %v5027 = vpop.permute.xlu0 %5026
    %5028 = vrot.lane.b32.xlu0 %v1073, 32
    %v5029 = vpop.permute.xlu0 %5028
    %5030 = vrot.lane.b32.xlu0 %v1105, 32
    %v5031 = vpop.permute.xlu0 %5030
    %5032 = vrot.lane.b32.xlu0 %v1074, 32
    %v5033 = vpop.permute.xlu0 %5032
    %5034 = vrot.lane.b32.xlu0 %v1106, 32
    %v5035 = vpop.permute.xlu0 %5034
    %5036 = vrot.lane.b32.xlu0 %v1075, 32
    %v5037 = vpop.permute.xlu0 %5036
    %5038 = vrot.lane.b32.xlu0 %v1107, 32
    %v5039 = vpop.permute.xlu0 %5038
    %5040 = vrot.lane.b32.xlu0 %v1076, 32
    %v5041 = vpop.permute.xlu0 %5040
    %5042 = vrot.lane.b32.xlu0 %v1108, 32
    %v5043 = vpop.permute.xlu0 %5042
    %5044 = vrot.lane.b32.xlu0 %v1077, 32
    %v5045 = vpop.permute.xlu0 %5044
    %5046 = vrot.lane.b32.xlu0 %v1109, 32
    %v5047 = vpop.permute.xlu0 %5046
    %5048 = vrot.lane.b32.xlu0 %v1078, 32
    %v5049 = vpop.permute.xlu0 %5048
    %5050 = vrot.lane.b32.xlu0 %v1110, 32
    %v5051 = vpop.permute.xlu0 %5050
    %5052 = vrot.lane.b32.xlu0 %v1079, 32
    %v5053 = vpop.permute.xlu0 %5052
    %5054 = vrot.lane.b32.xlu0 %v1111, 32
    %v5055 = vpop.permute.xlu0 %5054
    %5056 = vrot.lane.b32.xlu0 %v1080, 32
    %v5057 = vpop.permute.xlu0 %5056
    %5058 = vrot.lane.b32.xlu0 %v1112, 32
    %v5059 = vpop.permute.xlu0 %5058
    %5060 = vrot.lane.b32.xlu0 %v1081, 32
    %v5061 = vpop.permute.xlu0 %5060
    %5062 = vrot.lane.b32.xlu0 %v1113, 32
    %v5063 = vpop.permute.xlu0 %5062
    %5064 = vrot.lane.b32.xlu0 %v1082, 32
    %v5065 = vpop.permute.xlu0 %5064
    %5066 = vrot.lane.b32.xlu0 %v1114, 32
    %v5067 = vpop.permute.xlu0 %5066
    %5068 = vrot.lane.b32.xlu0 %v1083, 32
    %v5069 = vpop.permute.xlu0 %5068
    %5070 = vrot.lane.b32.xlu0 %v1115, 32
    %v5071 = vpop.permute.xlu0 %5070
    %5072 = vrot.lane.b32.xlu0 %v1084, 32
    %v5073 = vpop.permute.xlu0 %5072
    %5074 = vrot.lane.b32.xlu0 %v1116, 32
    %v5075 = vpop.permute.xlu0 %5074
    %v5108 = vmul.f32 %v4855, %v5013
    %v5109 = vmul.f32 %v4860, %v5015
    %v5110 = vmul.f32 %v4865, %v5017
    %v5111 = vmul.f32 %v4870, %v5019
    %v5112 = vmul.f32 %v4875, %v5021
    %v5113 = vmul.f32 %v4880, %v5023
    %v5114 = vmul.f32 %v4885, %v5025
    %v5115 = vmul.f32 %v4890, %v5027
    %v5116 = vmul.f32 %v4895, %v5029
    %v5117 = vmul.f32 %v4900, %v5031
    %v5118 = vmul.f32 %v4905, %v5033
    %v5119 = vmul.f32 %v4910, %v5035
    %v5120 = vmul.f32 %v4915, %v5037
    %v5121 = vmul.f32 %v4920, %v5039
    %v5122 = vmul.f32 %v4925, %v5041
    %v5123 = vmul.f32 %v4930, %v5043
    %v5124 = vmul.f32 %v4935, %v5045
    %v5125 = vmul.f32 %v4940, %v5047
    %v5126 = vmul.f32 %v4945, %v5049
    %v5127 = vmul.f32 %v4950, %v5051
    %v5128 = vmul.f32 %v4955, %v5053
    %v5129 = vmul.f32 %v4960, %v5055
    %v5130 = vmul.f32 %v4965, %v5057
    %v5131 = vmul.f32 %v4970, %v5059
    %v5132 = vmul.f32 %v4975, %v5061
    %v5133 = vmul.f32 %v4980, %v5063
    %v5134 = vmul.f32 %v4985, %v5065
    %v5135 = vmul.f32 %v4990, %v5067
    %v5136 = vmul.f32 %v4995, %v5069
    %v5137 = vmul.f32 %v5000, %v5071
    %v5138 = vmul.f32 %v5005, %v5073
    %v5139 = vmul.f32 %v5010, %v5075
    %v5140 = vsel %vm1529, %v5108, 0.0
    %v5141 = vrot.slane %v5140, 4
    %v5142 = vadd.f32 %v5140, %v5141
    %v5143 = vrot.slane %v5142, 2
    %v5144 = vadd.f32 %v5142, %v5143
    %v5145 = vrot.slane %v5144, 1
    %v5146 = vadd.f32 %v5144, %v5145
    %v5147 = vsel %vm1529, %v5109, 0.0
    %v5148 = vrot.slane %v5147, 4
    %v5149 = vadd.f32 %v5147, %v5148
    %v5150 = vrot.slane %v5149, 2
    %v5151 = vadd.f32 %v5149, %v5150
    %v5152 = vrot.slane %v5151, 1
    %v5153 = vadd.f32 %v5151, %v5152
    %v5154 = vsel %vm1529, %v5110, 0.0
    %v5155 = vrot.slane %v5154, 4
    %v5156 = vadd.f32 %v5154, %v5155
    %v5157 = vrot.slane %v5156, 2
    %v5158 = vadd.f32 %v5156, %v5157
    %v5159 = vrot.slane %v5158, 1
    %v5160 = vadd.f32 %v5158, %v5159
    %v5161 = vsel %vm1529, %v5111, 0.0
    %v5162 = vrot.slane %v5161, 4
    %v5163 = vadd.f32 %v5161, %v5162
    %v5164 = vrot.slane %v5163, 2
    %v5165 = vadd.f32 %v5163, %v5164
    %v5166 = vrot.slane %v5165, 1
    %v5167 = vadd.f32 %v5165, %v5166
    %v5168 = vsel %vm1529, %v5112, 0.0
    %v5169 = vrot.slane %v5168, 4
    %v5170 = vadd.f32 %v5168, %v5169
    %v5171 = vrot.slane %v5170, 2
    %v5172 = vadd.f32 %v5170, %v5171
    %v5173 = vrot.slane %v5172, 1
    %v5174 = vadd.f32 %v5172, %v5173
    %v5175 = vsel %vm1529, %v5113, 0.0
    %v5176 = vrot.slane %v5175, 4
    %v5177 = vadd.f32 %v5175, %v5176
    %v5178 = vrot.slane %v5177, 2
    %v5179 = vadd.f32 %v5177, %v5178
    %v5180 = vrot.slane %v5179, 1
    %v5181 = vadd.f32 %v5179, %v5180
    %v5182 = vsel %vm1529, %v5114, 0.0
    %v5183 = vrot.slane %v5182, 4
    %v5184 = vadd.f32 %v5182, %v5183
    %v5185 = vrot.slane %v5184, 2
    %v5186 = vadd.f32 %v5184, %v5185
    %v5187 = vrot.slane %v5186, 1
    %v5188 = vadd.f32 %v5186, %v5187
    %v5189 = vsel %vm1529, %v5115, 0.0
    %v5190 = vrot.slane %v5189, 4
    %v5191 = vadd.f32 %v5189, %v5190
    %v5192 = vrot.slane %v5191, 2
    %v5193 = vadd.f32 %v5191, %v5192
    %v5194 = vrot.slane %v5193, 1
    %v5195 = vadd.f32 %v5193, %v5194
    %v5196 = vsel %vm1529, %v5116, 0.0
    %v5197 = vrot.slane %v5196, 4
    %v5198 = vadd.f32 %v5196, %v5197
    %v5199 = vrot.slane %v5198, 2
    %v5200 = vadd.f32 %v5198, %v5199
    %v5201 = vrot.slane %v5200, 1
    %v5202 = vadd.f32 %v5200, %v5201
    %v5203 = vsel %vm1529, %v5117, 0.0
    %v5204 = vrot.slane %v5203, 4
    %v5205 = vadd.f32 %v5203, %v5204
    %v5206 = vrot.slane %v5205, 2
    %v5207 = vadd.f32 %v5205, %v5206
    %v5208 = vrot.slane %v5207, 1
    %v5209 = vadd.f32 %v5207, %v5208
    %v5210 = vsel %vm1529, %v5118, 0.0
    %v5211 = vrot.slane %v5210, 4
    %v5212 = vadd.f32 %v5210, %v5211
    %v5213 = vrot.slane %v5212, 2
    %v5214 = vadd.f32 %v5212, %v5213
    %v5215 = vrot.slane %v5214, 1
    %v5216 = vadd.f32 %v5214, %v5215
    %v5217 = vsel %vm1529, %v5119, 0.0
    %v5218 = vrot.slane %v5217, 4
    %v5219 = vadd.f32 %v5217, %v5218
    %v5220 = vrot.slane %v5219, 2
    %v5221 = vadd.f32 %v5219, %v5220
    %v5222 = vrot.slane %v5221, 1
    %v5223 = vadd.f32 %v5221, %v5222
    %v5224 = vsel %vm1529, %v5120, 0.0
    %v5225 = vrot.slane %v5224, 4
    %v5226 = vadd.f32 %v5224, %v5225
    %v5227 = vrot.slane %v5226, 2
    %v5228 = vadd.f32 %v5226, %v5227
    %v5229 = vrot.slane %v5228, 1
    %v5230 = vadd.f32 %v5228, %v5229
    %v5231 = vsel %vm1529, %v5121, 0.0
    %v5232 = vrot.slane %v5231, 4
    %v5233 = vadd.f32 %v5231, %v5232
    %v5234 = vrot.slane %v5233, 2
    %v5235 = vadd.f32 %v5233, %v5234
    %v5236 = vrot.slane %v5235, 1
    %v5237 = vadd.f32 %v5235, %v5236
    %v5238 = vsel %vm1529, %v5122, 0.0
    %v5239 = vrot.slane %v5238, 4
    %v5240 = vadd.f32 %v5238, %v5239
    %v5241 = vrot.slane %v5240, 2
    %v5242 = vadd.f32 %v5240, %v5241
    %v5243 = vrot.slane %v5242, 1
    %v5244 = vadd.f32 %v5242, %v5243
    %v5245 = vsel %vm1529, %v5123, 0.0
    %v5246 = vrot.slane %v5245, 4
    %v5247 = vadd.f32 %v5245, %v5246
    %v5248 = vrot.slane %v5247, 2
    %v5249 = vadd.f32 %v5247, %v5248
    %v5250 = vrot.slane %v5249, 1
    %v5251 = vadd.f32 %v5249, %v5250
    %v5252 = vsel %vm1529, %v5124, 0.0
    %v5253 = vrot.slane %v5252, 4
    %v5254 = vadd.f32 %v5252, %v5253
    %v5255 = vrot.slane %v5254, 2
    %v5256 = vadd.f32 %v5254, %v5255
    %v5257 = vrot.slane %v5256, 1
    %v5258 = vadd.f32 %v5256, %v5257
    %v5259 = vsel %vm1529, %v5125, 0.0
    %v5260 = vrot.slane %v5259, 4
    %v5261 = vadd.f32 %v5259, %v5260
    %v5262 = vrot.slane %v5261, 2
    %v5263 = vadd.f32 %v5261, %v5262
    %v5264 = vrot.slane %v5263, 1
    %v5265 = vadd.f32 %v5263, %v5264
    %v5266 = vsel %vm1529, %v5126, 0.0
    %v5267 = vrot.slane %v5266, 4
    %v5268 = vadd.f32 %v5266, %v5267
    %v5269 = vrot.slane %v5268, 2
    %v5270 = vadd.f32 %v5268, %v5269
    %v5271 = vrot.slane %v5270, 1
    %v5272 = vadd.f32 %v5270, %v5271
    %v5273 = vsel %vm1529, %v5127, 0.0
    %v5274 = vrot.slane %v5273, 4
    %v5275 = vadd.f32 %v5273, %v5274
    %v5276 = vrot.slane %v5275, 2
    %v5277 = vadd.f32 %v5275, %v5276
    %v5278 = vrot.slane %v5277, 1
    %v5279 = vadd.f32 %v5277, %v5278
    %v5280 = vsel %vm1529, %v5128, 0.0
    %v5281 = vrot.slane %v5280, 4
    %v5282 = vadd.f32 %v5280, %v5281
    %v5283 = vrot.slane %v5282, 2
    %v5284 = vadd.f32 %v5282, %v5283
    %v5285 = vrot.slane %v5284, 1
    %v5286 = vadd.f32 %v5284, %v5285
    %v5287 = vsel %vm1529, %v5129, 0.0
    %v5288 = vrot.slane %v5287, 4
    %v5289 = vadd.f32 %v5287, %v5288
    %v5290 = vrot.slane %v5289, 2
    %v5291 = vadd.f32 %v5289, %v5290
    %v5292 = vrot.slane %v5291, 1
    %v5293 = vadd.f32 %v5291, %v5292
    %v5294 = vsel %vm1529, %v5130, 0.0
    %v5295 = vrot.slane %v5294, 4
    %v5296 = vadd.f32 %v5294, %v5295
    %v5297 = vrot.slane %v5296, 2
    %v5298 = vadd.f32 %v5296, %v5297
    %v5299 = vrot.slane %v5298, 1
    %v5300 = vadd.f32 %v5298, %v5299
    %v5301 = vsel %vm1529, %v5131, 0.0
    %v5302 = vrot.slane %v5301, 4
    %v5303 = vadd.f32 %v5301, %v5302
    %v5304 = vrot.slane %v5303, 2
    %v5305 = vadd.f32 %v5303, %v5304
    %v5306 = vrot.slane %v5305, 1
    %v5307 = vadd.f32 %v5305, %v5306
    %v5308 = vsel %vm1529, %v5132, 0.0
    %v5309 = vrot.slane %v5308, 4
    %v5310 = vadd.f32 %v5308, %v5309
    %v5311 = vrot.slane %v5310, 2
    %v5312 = vadd.f32 %v5310, %v5311
    %v5313 = vrot.slane %v5312, 1
    %v5314 = vadd.f32 %v5312, %v5313
    %v5315 = vsel %vm1529, %v5133, 0.0
    %v5316 = vrot.slane %v5315, 4
    %v5317 = vadd.f32 %v5315, %v5316
    %v5318 = vrot.slane %v5317, 2
    %v5319 = vadd.f32 %v5317, %v5318
    %v5320 = vrot.slane %v5319, 1
    %v5321 = vadd.f32 %v5319, %v5320
    %v5322 = vsel %vm1529, %v5134, 0.0
    %v5323 = vrot.slane %v5322, 4
    %v5324 = vadd.f32 %v5322, %v5323
    %v5325 = vrot.slane %v5324, 2
    %v5326 = vadd.f32 %v5324, %v5325
    %v5327 = vrot.slane %v5326, 1
    %v5328 = vadd.f32 %v5326, %v5327
    %v5329 = vsel %vm1529, %v5135, 0.0
    %v5330 = vrot.slane %v5329, 4
    %v5331 = vadd.f32 %v5329, %v5330
    %v5332 = vrot.slane %v5331, 2
    %v5333 = vadd.f32 %v5331, %v5332
    %v5334 = vrot.slane %v5333, 1
    %v5335 = vadd.f32 %v5333, %v5334
    %v5336 = vsel %vm1529, %v5136, 0.0
    %v5337 = vrot.slane %v5336, 4
    %v5338 = vadd.f32 %v5336, %v5337
    %v5339 = vrot.slane %v5338, 2
    %v5340 = vadd.f32 %v5338, %v5339
    %v5341 = vrot.slane %v5340, 1
    %v5342 = vadd.f32 %v5340, %v5341
    %v5343 = vsel %vm1529, %v5137, 0.0
    %v5344 = vrot.slane %v5343, 4
    %v5345 = vadd.f32 %v5343, %v5344
    %v5346 = vrot.slane %v5345, 2
    %v5347 = vadd.f32 %v5345, %v5346
    %v5348 = vrot.slane %v5347, 1
    %v5349 = vadd.f32 %v5347, %v5348
    %v5350 = vsel %vm1529, %v5138, 0.0
    %v5351 = vrot.slane %v5350, 4
    %v5352 = vadd.f32 %v5350, %v5351
    %v5353 = vrot.slane %v5352, 2
    %v5354 = vadd.f32 %v5352, %v5353
    %v5355 = vrot.slane %v5354, 1
    %v5356 = vadd.f32 %v5354, %v5355
    %v5357 = vsel %vm1529, %v5139, 0.0
    %v5358 = vrot.slane %v5357, 4
    %v5359 = vadd.f32 %v5357, %v5358
    %v5360 = vrot.slane %v5359, 2
    %v5361 = vadd.f32 %v5359, %v5360
    %v5362 = vrot.slane %v5361, 1
    %v5363 = vadd.f32 %v5361, %v5362
    %v5364 = vpack.c.bf16 %v5146, %v5146
    %v5365 = vpack.c.bf16 %v5153, %v5153
    %v5366 = vpack.c.bf16 %v5160, %v5160
    %v5367 = vpack.c.bf16 %v5167, %v5167
    %v5368 = vpack.c.bf16 %v5174, %v5174
    %v5369 = vpack.c.bf16 %v5181, %v5181
    %v5370 = vpack.c.bf16 %v5188, %v5188
    %v5371 = vpack.c.bf16 %v5195, %v5195
    %v5372 = vpack.c.bf16 %v5202, %v5202
    %v5373 = vpack.c.bf16 %v5209, %v5209
    %v5374 = vpack.c.bf16 %v5216, %v5216
    %v5375 = vpack.c.bf16 %v5223, %v5223
    %v5376 = vpack.c.bf16 %v5230, %v5230
    %v5377 = vpack.c.bf16 %v5237, %v5237
    %v5378 = vpack.c.bf16 %v5244, %v5244
    %v5379 = vpack.c.bf16 %v5251, %v5251
    %v5380 = vpack.c.bf16 %v5258, %v5258
    %v5381 = vpack.c.bf16 %v5265, %v5265
    %v5382 = vpack.c.bf16 %v5272, %v5272
    %v5383 = vpack.c.bf16 %v5279, %v5279
    %v5384 = vpack.c.bf16 %v5286, %v5286
    %v5385 = vpack.c.bf16 %v5293, %v5293
    %v5386 = vpack.c.bf16 %v5300, %v5300
    %v5387 = vpack.c.bf16 %v5307, %v5307
    %v5388 = vpack.c.bf16 %v5314, %v5314
    %v5389 = vpack.c.bf16 %v5321, %v5321
    %v5390 = vpack.c.bf16 %v5328, %v5328
    %v5391 = vpack.c.bf16 %v5335, %v5335
    %v5392 = vpack.c.bf16 %v5342, %v5342
    %v5393 = vpack.c.bf16 %v5349, %v5349
    %v5394 = vpack.c.bf16 %v5356, %v5356
    %v5395 = vpack.c.bf16 %v5363, %v5363
    %v5396 = vld [vmem:[%s11 + $0x10] sm:$0xf]
    %v5397 = vld [vmem:[%s11 + $0x14] sm:$0xf]
    %v5398 = vld [vmem:[%s11 + $0x18] sm:$0xf]
    %v5399 = vld [vmem:[%s11 + $0x1c] sm:$0xf]
    %v5432 = vunpack.c.l.b16 %v5364
    %v5433 = vunpack.c.l.b16 %v5365
    %v5434 = vunpack.c.l.b16 %v5366
    %v5435 = vunpack.c.l.b16 %v5367
    %v5436 = vunpack.c.l.b16 %v5368
    %v5437 = vunpack.c.l.b16 %v5369
    %v5438 = vunpack.c.l.b16 %v5370
    %v5439 = vunpack.c.l.b16 %v5371
    %v5440 = vunpack.c.l.b16 %v5372
    %v5441 = vunpack.c.l.b16 %v5373
    %v5442 = vunpack.c.l.b16 %v5374
    %v5443 = vunpack.c.l.b16 %v5375
    %v5444 = vunpack.c.l.b16 %v5376
    %v5445 = vunpack.c.l.b16 %v5377
    %v5446 = vunpack.c.l.b16 %v5378
    %v5447 = vunpack.c.l.b16 %v5379
    %v5448 = vunpack.c.l.b16 %v5380
    %v5449 = vunpack.c.l.b16 %v5381
    %v5450 = vunpack.c.l.b16 %v5382
    %v5451 = vunpack.c.l.b16 %v5383
    %v5452 = vunpack.c.l.b16 %v5384
    %v5453 = vunpack.c.l.b16 %v5385
    %v5454 = vunpack.c.l.b16 %v5386
    %v5455 = vunpack.c.l.b16 %v5387
    %v5456 = vunpack.c.l.b16 %v5388
    %v5457 = vunpack.c.l.b16 %v5389
    %v5458 = vunpack.c.l.b16 %v5390
    %v5459 = vunpack.c.l.b16 %v5391
    %v5460 = vunpack.c.l.b16 %v5392
    %v5461 = vunpack.c.l.b16 %v5393
    %v5462 = vunpack.c.l.b16 %v5394
    %v5463 = vunpack.c.l.b16 %v5395
    %v5464 = vsel %vm2176, %v5433, %v5432
    %v5465 = vsel %vm2178, %v5434, %v5464
    %v5466 = vsel %vm2180, %v5435, %v5465
    %v5467 = vsel %vm2182, %v5436, %v5466
    %v5468 = vsel %vm2184, %v5437, %v5467
    %v5469 = vsel %vm2186, %v5438, %v5468
    %v5470 = vsel %vm2188, %v5439, %v5469
    %v5471 = vsel %vm2176, %v5441, %v5440
    %v5472 = vsel %vm2178, %v5442, %v5471
    %v5473 = vsel %vm2180, %v5443, %v5472
    %v5474 = vsel %vm2182, %v5444, %v5473
    %v5475 = vsel %vm2184, %v5445, %v5474
    %v5476 = vsel %vm2186, %v5446, %v5475
    %v5477 = vsel %vm2188, %v5447, %v5476
    %v5478 = vsel %vm2176, %v5449, %v5448
    %v5479 = vsel %vm2178, %v5450, %v5478
    %v5480 = vsel %vm2180, %v5451, %v5479
    %v5481 = vsel %vm2182, %v5452, %v5480
    %v5482 = vsel %vm2184, %v5453, %v5481
    %v5483 = vsel %vm2186, %v5454, %v5482
    %v5484 = vsel %vm2188, %v5455, %v5483
    %v5485 = vsel %vm2176, %v5457, %v5456
    %v5486 = vsel %vm2178, %v5458, %v5485
    %v5487 = vsel %vm2180, %v5459, %v5486
    %v5488 = vsel %vm2182, %v5460, %v5487
    %v5489 = vsel %vm2184, %v5461, %v5488
    %v5490 = vsel %vm2186, %v5462, %v5489
    %v5491 = vsel %vm2188, %v5463, %v5490
    %v5492 = vpack.c.b16 %v5477, %v5470
    %v5493 = vpack.c.b16 %v5491, %v5484
    %v5498 = vunpack.c.l.b16 %v5396
    %v5499 = vunpack.c.l.b16 %v5397
    %v5500 = vunpack.c.l.b16 %v5398
    %v5501 = vunpack.c.l.b16 %v5399
    %v5502 = vpack.c.b16 %v5499, %v5498
    %v5503 = vpack.c.b16 %v5501, %v5500
    %v5507 = vsel %vm308, %v5492, 0
    %v5510 = vsel %vm308, %v5493, 0
    %5512 = vmatprep.subr.bf16.mxu0 0
    %5513 = vmatpush1.bf16.msra.mxu0 %v5502
    %5514 = vmatprep.subr.bf16.mxu0 0
    %5515 = vmatpush1.bf16.msra.mxu0 %v5503
    %5516 = vmatprep.subr.bf16.mxu0 0
    %5517 = vmatpush1.bf16.msra.mxu0 0
    %5518 = vmatprep.subr.bf16.mxu0 0
    %5519 = vmatpush1.bf16.msra.mxu0 0
    %5520 = vmatprep.subr.bf16.mxu0 0
    %5521 = vmatpush1.bf16.msra.mxu0 0
    %5522 = vmatprep.subr.bf16.mxu0 0
    %5523 = vmatpush1.bf16.msra.mxu0 0
    %5524 = vmatprep.subr.bf16.mxu0 0
    %5525 = vmatpush1.bf16.msra.mxu0 0
    %5526 = vmatprep.subr.bf16.mxu0 0
    %5527 = vmatpush1.bf16.msra.mxu0 0
    %5528 = vmatprep.subr.bf16.mxu0 0
    %5529 = vmatpush1.bf16.msra.mxu0 0
    %5530 = vmatprep.subr.bf16.mxu0 0
    %5531 = vmatpush1.bf16.msra.mxu0 0
    %5532 = vmatprep.subr.bf16.mxu0 0
    %5533 = vmatpush1.bf16.msra.mxu0 0
    %5534 = vmatprep.subr.bf16.mxu0 0
    %5535 = vmatpush1.bf16.msra.mxu0 0
    %5536 = vmatprep.subr.bf16.mxu0 0
    %5537 = vmatpush1.bf16.msra.mxu0 0
    %5538 = vmatprep.subr.bf16.mxu0 0
    %5539 = vmatpush1.bf16.msra.mxu0 0
    %5540 = vmatprep.subr.bf16.mxu0 0
    %5541 = vmatpush1.bf16.msra.mxu0 0
    %5542 = vmatprep.subr.bf16.mxu0 0
    %5543 = vmatpush1.bf16.msra.mxu0 0
    %5544 = vmatprep.mubr.bf16.mxu0 0
    %5545 = vmatmul.mubr.bf16.gmra.mrb[0].mxu0 %v5507
    %v5546 = vpop.f32.mrb[0].mxu0
    %v5547 = vadd.f32 0.0, %v5546
    %v5548 = vpop.f32.mrb[0].mxu0
    %v5549 = vpop.f32.mrb[0].mxu0
    %v5550 = vadd.f32 0.0, %v5549
    %v5551 = vpop.f32.mrb[0].mxu0
    %5552 = vmatprep.mubr.bf16.mxu0 0
    %5553 = vmatmul.mubr.bf16.gmra.mrb[0].mxu0 %v5510
    %v5554 = vpop.f32.mrb[0].mxu0
    %v5555 = vadd.f32 0.0, %v5554
    %v5556 = vpop.f32.mrb[0].mxu0
    %v5557 = vpop.f32.mrb[0].mxu0
    %v5558 = vadd.f32 0.0, %v5557
    %v5559 = vpop.f32.mrb[0].mxu0
    %5560 = vdwg.mxu0
    %v5593 = vunpack.c.l.b16 %v3500
    %v5594 = vunpack.c.l.b16 %v3501
    %v5595 = vunpack.c.l.b16 %v3502
    %v5596 = vunpack.c.l.b16 %v3503
    %v5597 = vunpack.c.l.b16 %v3504
    %v5598 = vunpack.c.l.b16 %v3505
    %v5599 = vunpack.c.l.b16 %v3506
    %v5600 = vunpack.c.l.b16 %v3507
    %v5601 = vunpack.c.l.b16 %v3508
    %v5602 = vunpack.c.l.b16 %v3509
    %v5603 = vunpack.c.l.b16 %v3510
    %v5604 = vunpack.c.l.b16 %v3511
    %v5605 = vunpack.c.l.b16 %v3512
    %v5606 = vunpack.c.l.b16 %v3513
    %v5607 = vunpack.c.l.b16 %v3514
    %v5608 = vunpack.c.l.b16 %v3515
    %v5609 = vunpack.c.l.b16 %v3516
    %v5610 = vunpack.c.l.b16 %v3517
    %v5611 = vunpack.c.l.b16 %v3518
    %v5612 = vunpack.c.l.b16 %v3519
    %v5613 = vunpack.c.l.b16 %v3520
    %v5614 = vunpack.c.l.b16 %v3521
    %v5615 = vunpack.c.l.b16 %v3522
    %v5616 = vunpack.c.l.b16 %v3523
    %v5617 = vunpack.c.l.b16 %v3524
    %v5618 = vunpack.c.l.b16 %v3525
    %v5619 = vunpack.c.l.b16 %v3526
    %v5620 = vunpack.c.l.b16 %v3527
    %v5621 = vunpack.c.l.b16 %v3528
    %v5622 = vunpack.c.l.b16 %v3529
    %v5623 = vunpack.c.l.b16 %v3530
    %v5624 = vunpack.c.l.b16 %v3531
    %v5625 = vsel %vm2176, %v5594, %v5593
    %v5626 = vsel %vm2178, %v5595, %v5625
    %v5627 = vsel %vm2180, %v5596, %v5626
    %v5628 = vsel %vm2182, %v5597, %v5627
    %v5629 = vsel %vm2184, %v5598, %v5628
    %v5630 = vsel %vm2186, %v5599, %v5629
    %v5631 = vsel %vm2188, %v5600, %v5630
    %v5632 = vsel %vm2176, %v5602, %v5601
    %v5633 = vsel %vm2178, %v5603, %v5632
    %v5634 = vsel %vm2180, %v5604, %v5633
    %v5635 = vsel %vm2182, %v5605, %v5634
    %v5636 = vsel %vm2184, %v5606, %v5635
    %v5637 = vsel %vm2186, %v5607, %v5636
    %v5638 = vsel %vm2188, %v5608, %v5637
    %v5639 = vsel %vm2176, %v5610, %v5609
    %v5640 = vsel %vm2178, %v5611, %v5639
    %v5641 = vsel %vm2180, %v5612, %v5640
    %v5642 = vsel %vm2182, %v5613, %v5641
    %v5643 = vsel %vm2184, %v5614, %v5642
    %v5644 = vsel %vm2186, %v5615, %v5643
    %v5645 = vsel %vm2188, %v5616, %v5644
    %v5646 = vsel %vm2176, %v5618, %v5617
    %v5647 = vsel %vm2178, %v5619, %v5646
    %v5648 = vsel %vm2180, %v5620, %v5647
    %v5649 = vsel %vm2182, %v5621, %v5648
    %v5650 = vsel %vm2184, %v5622, %v5649
    %v5651 = vsel %vm2186, %v5623, %v5650
    %v5652 = vsel %vm2188, %v5624, %v5651
    %v5653 = vpack.c.b16 %v5638, %v5631
    %v5654 = vpack.c.b16 %v5652, %v5645
    %v5659 = vunpack.c.l.b16 %v3532
    %v5660 = vunpack.c.l.b16 %v3533
    %v5661 = vunpack.c.l.b16 %v3534
    %v5662 = vunpack.c.l.b16 %v3535
    %v5663 = vpack.c.b16 %v5660, %v5659
    %v5664 = vpack.c.b16 %v5662, %v5661
    %v5668 = vsel %vm308, %v5653, 0
    %v5671 = vsel %vm308, %v5654, 0
    %5673 = vmatprep.subr.bf16.mxu0 0
    %5674 = vmatpush1.bf16.msra.mxu0 %v5663
    %5675 = vmatprep.subr.bf16.mxu0 0
    %5676 = vmatpush1.bf16.msra.mxu0 %v5664
    %5677 = vmatprep.subr.bf16.mxu0 0
    %5678 = vmatpush1.bf16.msra.mxu0 0
    %5679 = vmatprep.subr.bf16.mxu0 0
    %5680 = vmatpush1.bf16.msra.mxu0 0
    %5681 = vmatprep.subr.bf16.mxu0 0
    %5682 = vmatpush1.bf16.msra.mxu0 0
    %5683 = vmatprep.subr.bf16.mxu0 0
    %5684 = vmatpush1.bf16.msra.mxu0 0
    %5685 = vmatprep.subr.bf16.mxu0 0
    %5686 = vmatpush1.bf16.msra.mxu0 0
    %5687 = vmatprep.subr.bf16.mxu0 0
    %5688 = vmatpush1.bf16.msra.mxu0 0
    %5689 = vmatprep.subr.bf16.mxu0 0
    %5690 = vmatpush1.bf16.msra.mxu0 0
    %5691 = vmatprep.subr.bf16.mxu0 0
    %5692 = vmatpush1.bf16.msra.mxu0 0
    %5693 = vmatprep.subr.bf16.mxu0 0
    %5694 = vmatpush1.bf16.msra.mxu0 0
    %5695 = vmatprep.subr.bf16.mxu0 0
    %5696 = vmatpush1.bf16.msra.mxu0 0
    %5697 = vmatprep.subr.bf16.mxu0 0
    %5698 = vmatpush1.bf16.msra.mxu0 0
    %5699 = vmatprep.subr.bf16.mxu0 0
    %5700 = vmatpush1.bf16.msra.mxu0 0
    %5701 = vmatprep.subr.bf16.mxu0 0
    %5702 = vmatpush1.bf16.msra.mxu0 0
    %5703 = vmatprep.subr.bf16.mxu0 0
    %5704 = vmatpush1.bf16.msra.mxu0 0
    %5705 = vmatprep.mubr.bf16.mxu0 0
    %5706 = vmatmul.mubr.bf16.gmra.mrb[0].mxu0 %v5668
    %v5707 = vpop.f32.mrb[0].mxu0
    %v5708 = vadd.f32 %v5547, %v5707
    %v5709 = vpop.f32.mrb[0].mxu0
    %v5710 = vpop.f32.mrb[0].mxu0
    %v5711 = vadd.f32 %v5550, %v5710
    %v5712 = vpop.f32.mrb[0].mxu0
    %5713 = vmatprep.mubr.bf16.mxu0 0
    %5714 = vmatmul.mubr.bf16.gmra.mrb[0].mxu0 %v5671
    %v5715 = vpop.f32.mrb[0].mxu0
    %v5716 = vadd.f32 %v5555, %v5715
    %v5717 = vpop.f32.mrb[0].mxu0
    %v5718 = vpop.f32.mrb[0].mxu0
    %v5719 = vadd.f32 %v5558, %v5718
    %v5720 = vpop.f32.mrb[0].mxu0
    %5721 = vdwg.mxu0
    %v5722 = vld [vmem:[#allocation17] sm:$0x1]
    %v5724 = vlaneseq
    %v5725 = vshrl.u32 %v5724, 7
    %v5726 = vsub.s32 0, %v5725
    %v5727 = vrot.slane %v5722, %v5726
    %v5729 = vadd.f32 %v5708, %v5727
    %v5730 = vadd.f32 %v5711, %v5727
    %v5731 = vadd.f32 %v5716, %v5727
    %v5732 = vadd.f32 %v5719, %v5727
    %v5733 = vsub.f32 1.0, %v274
    %v5734 = vsub.f32 1.0, %v275
    %v5735 = vsub.f32 1.0, %v276
    %v5736 = vsub.f32 1.0, %v277
    %v5737 = vsel %vm2215, %v5733, 0.0
    %5738 = vadd.xlane.f32.xlu0 %v5737
    %v5739 = vpop.xlane.xlu0 %5738
    %v5740 = vsel %vm2215, %v5734, 0.0
    %5741 = vadd.xlane.f32.xlu0 %v5740
    %v5742 = vpop.xlane.xlu0 %5741
    %v5743 = vsel %vm2215, %v5735, 0.0
    %5744 = vadd.xlane.f32.xlu0 %v5743
    %v5745 = vpop.xlane.xlu0 %5744
    %v5746 = vsel %vm2215, %v5736, 0.0
    %5747 = vadd.xlane.f32.xlu0 %v5746
    %v5748 = vpop.xlane.xlu0 %5747
    %vm5749 = vcmp.eq.f32.partialorder %v5739, 0.0
    %vm5750 = vcmp.eq.f32.partialorder %v5742, 0.0
    %vm5751 = vcmp.eq.f32.partialorder %v5745, 0.0
    %vm5752 = vcmp.eq.f32.partialorder %v5748, 0.0
    %v5753 = vsel %vm5749, 1, 0
    %v5754 = vsel %vm5750, 1, 0
    %v5755 = vsel %vm5751, 1, 0
    %v5756 = vsel %vm5752, 1, 0
    %vm5757 = vcmp.eq.s32.totalorder %v5753, 1
    %vm5758 = vcmp.eq.s32.totalorder %v5754, 1
    %vm5759 = vcmp.eq.s32.totalorder %v5755, 1
    %vm5760 = vcmp.eq.s32.totalorder %v5756, 1
    %v5761 = vsel %vm5757, 0.0, %v5729
    %v5762 = vsel %vm5758, 0.0, %v5730
    %v5763 = vsel %vm5759, 0.0, %v5731
    %v5764 = vsel %vm5760, 0.0, %v5732
    %v5765 = vpack.c.bf16 %v5762, %v5761
    %v5766 = vpack.c.bf16 %v5764, %v5763
    %v5767 = vld [vmem:[%s13] sm:$0xf]
    %v5768 = vld [vmem:[%s13 + $0x4] sm:$0xf]
    %v5769 = vld [vmem:[%s13 + $0x8] sm:$0xf]
    %v5770 = vld [vmem:[%s13 + $0xc] sm:$0xf]
    %v5771 = vld [vmem:[%s13 + $0x10] sm:$0xf]
    %v5772 = vld [vmem:[%s13 + $0x14] sm:$0xf]
    %v5773 = vld [vmem:[%s13 + $0x18] sm:$0xf]
    %v5774 = vld [vmem:[%s13 + $0x1c] sm:$0xf]
    %v5775 = vld [vmem:[%s14] sm:$0xf]
    %v5776 = vld [vmem:[%s14 + $0x4] sm:$0xf]
    %v5777 = vld [vmem:[%s14 + $0x8] sm:$0xf]
    %v5778 = vld [vmem:[%s14 + $0xc] sm:$0xf]
    %v5783 = vunpack.c.l.b16 %v5775
    %v5784 = vunpack.c.l.b16 %v5776
    %v5785 = vunpack.c.l.b16 %v5777
    %v5786 = vunpack.c.l.b16 %v5778
    %v5787 = vpack.c.b16 %v5784, %v5783
    %v5788 = vpack.c.b16 %v5786, %v5785
    %5791 = vmatprep.subr.bf16.mxu0 0
    %5792 = vmatpush1.bf16.msra.mxu0 %v5787
    %5793 = vmatprep.subr.bf16.mxu0 0
    %5794 = vmatpush1.bf16.msra.mxu0 %v5788
    %5795 = vmatprep.subr.bf16.mxu0 0
    %5796 = vmatpush1.bf16.msra.mxu0 0
    %5797 = vmatprep.subr.bf16.mxu0 0
    %5798 = vmatpush1.bf16.msra.mxu0 0
    %5799 = vmatprep.subr.bf16.mxu0 0
    %5800 = vmatpush1.bf16.msra.mxu0 0
    %5801 = vmatprep.subr.bf16.mxu0 0
    %5802 = vmatpush1.bf16.msra.mxu0 0
    %5803 = vmatprep.subr.bf16.mxu0 0
    %5804 = vmatpush1.bf16.msra.mxu0 0
    %5805 = vmatprep.subr.bf16.mxu0 0
    %5806 = vmatpush1.bf16.msra.mxu0 0
    %5807 = vmatprep.subr.bf16.mxu0 0
    %5808 = vmatpush1.bf16.msra.mxu0 0
    %5809 = vmatprep.subr.bf16.mxu0 0
    %5810 = vmatpush1.bf16.msra.mxu0 0
    %5811 = vmatprep.subr.bf16.mxu0 0
    %5812 = vmatpush1.bf16.msra.mxu0 0
    %5813 = vmatprep.subr.bf16.mxu0 0
    %5814 = vmatpush1.bf16.msra.mxu0 0
    %5815 = vmatprep.subr.bf16.mxu0 0
    %5816 = vmatpush1.bf16.msra.mxu0 0
    %5817 = vmatprep.subr.bf16.mxu0 0
    %5818 = vmatpush1.bf16.msra.mxu0 0
    %5819 = vmatprep.subr.bf16.mxu0 0
    %5820 = vmatpush1.bf16.msra.mxu0 0
    %5821 = vmatprep.subr.bf16.mxu0 0
    %5822 = vmatpush1.bf16.msra.mxu0 0
    %5823 = vmatprep.mubr.bf16.mxu0 0
    %5824 = vmatmul.mubr.bf16.gmra.mrb[0].mxu0 %v387
    %v5825 = vpop.f32.mrb[0].mxu0
    %v5826 = vadd.f32 0.0, %v5825
    %v5827 = vpop.f32.mrb[0].mxu0
    %v5828 = vpop.f32.mrb[0].mxu0
    %v5829 = vadd.f32 0.0, %v5828
    %v5830 = vpop.f32.mrb[0].mxu0
    %5831 = vmatprep.mubr.bf16.mxu0 0
    %5832 = vmatmul.mubr.bf16.gmra.mrb[0].mxu0 %v390
    %v5833 = vpop.f32.mrb[0].mxu0
    %v5834 = vadd.f32 0.0, %v5833
    %v5835 = vpop.f32.mrb[0].mxu0
    %v5836 = vpop.f32.mrb[0].mxu0
    %v5837 = vadd.f32 0.0, %v5836
    %v5838 = vpop.f32.mrb[0].mxu0
    %5839 = vdwg.mxu0
    %v5848 = vunpack.c.l.b16 %v5767
    %v5849 = vunpack.c.l.b16 %v5768
    %v5850 = vunpack.c.l.b16 %v5769
    %v5851 = vunpack.c.l.b16 %v5770
    %v5852 = vunpack.c.l.b16 %v5771
    %v5853 = vunpack.c.l.b16 %v5772
    %v5854 = vunpack.c.l.b16 %v5773
    %v5855 = vunpack.c.l.b16 %v5774
    %v5856 = vpack.c.b16 %v5849, %v5848
    %v5857 = vpack.c.b16 %v5851, %v5850
    %v5858 = vpack.c.b16 %v5853, %v5852
    %v5859 = vpack.c.b16 %v5855, %v5854
    %vm5864 = vcmask 523264
    %v5866 = vsel %vm5864, %v5765, 0
    %v5869 = vsel %vm5864, %v5766, 0
    %5871 = vmatprep.subr.bf16.mxu0 0
    %5872 = vmatpush1.bf16.msra.mxu0 %v5856
    %5873 = vmatprep.subr.bf16.mxu0 0
    %5874 = vmatpush1.bf16.msra.mxu0 %v5857
    %5875 = vmatprep.subr.bf16.mxu0 0
    %5876 = vmatpush1.bf16.msra.mxu0 %v5858
    %5877 = vmatprep.subr.bf16.mxu0 0
    %5878 = vmatpush1.bf16.msra.mxu0 %v5859
    %5879 = vmatprep.subr.bf16.mxu0 0
    %5880 = vmatpush1.bf16.msra.mxu0 0
    %5881 = vmatprep.subr.bf16.mxu0 0
    %5882 = vmatpush1.bf16.msra.mxu0 0
    %5883 = vmatprep.subr.bf16.mxu0 0
    %5884 = vmatpush1.bf16.msra.mxu0 0
    %5885 = vmatprep.subr.bf16.mxu0 0
    %5886 = vmatpush1.bf16.msra.mxu0 0
    %5887 = vmatprep.subr.bf16.mxu0 0
    %5888 = vmatpush1.bf16.msra.mxu0 0
    %5889 = vmatprep.subr.bf16.mxu0 0
    %5890 = vmatpush1.bf16.msra.mxu0 0
    %5891 = vmatprep.subr.bf16.mxu0 0
    %5892 = vmatpush1.bf16.msra.mxu0 0
    %5893 = vmatprep.subr.bf16.mxu0 0
    %5894 = vmatpush1.bf16.msra.mxu0 0
    %5895 = vmatprep.subr.bf16.mxu0 0
    %5896 = vmatpush1.bf16.msra.mxu0 0
    %5897 = vmatprep.subr.bf16.mxu0 0
    %5898 = vmatpush1.bf16.msra.mxu0 0
    %5899 = vmatprep.subr.bf16.mxu0 0
    %5900 = vmatpush1.bf16.msra.mxu0 0
    %5901 = vmatprep.subr.bf16.mxu0 0
    %5902 = vmatpush1.bf16.msra.mxu0 0
    %5903 = vmatprep.mubr.bf16.mxu0 0
    %5904 = vmatmul.mubr.bf16.gmra.mrb[0].mxu0 %v5866
    %v5905 = vpop.f32.mrb[0].mxu0
    %v5906 = vadd.f32 %v5826, %v5905
    %v5907 = vpop.f32.mrb[0].mxu0
    %v5908 = vpop.f32.mrb[0].mxu0
    %v5909 = vadd.f32 %v5829, %v5908
    %v5910 = vpop.f32.mrb[0].mxu0
    %5911 = vmatprep.mubr.bf16.mxu0 0
    %5912 = vmatmul.mubr.bf16.gmra.mrb[0].mxu0 %v5869
    %v5913 = vpop.f32.mrb[0].mxu0
    %v5914 = vadd.f32 %v5834, %v5913
    %v5915 = vpop.f32.mrb[0].mxu0
    %v5916 = vpop.f32.mrb[0].mxu0
    %v5917 = vadd.f32 %v5837, %v5916
    %v5918 = vpop.f32.mrb[0].mxu0
    %5919 = vdwg.mxu0
    %v5920 = vld [vmem:[#allocation19] sm:$0x1]
    %v5922 = vlaneseq
    %v5923 = vshrl.u32 %v5922, 7
    %v5924 = vsub.s32 0, %v5923
    %v5925 = vrot.slane %v5920, %v5924
    %v5927 = vadd.f32 %v5906, %v5925
    %v5928 = vadd.f32 %v5909, %v5925
    %v5929 = vadd.f32 %v5914, %v5925
    %v5930 = vadd.f32 %v5917, %v5925
    %v5931 = vmax.f32 %v5927, 0.0
    %v5932 = vmax.f32 %v5928, 0.0
    %v5933 = vmax.f32 %v5929, 0.0
    %v5934 = vmax.f32 %v5930, 0.0
    %v5935 = vpack.c.bf16 %v5932, %v5931
    %v5936 = vpack.c.bf16 %v5934, %v5933
    %v5937 = vld [vmem:[%s16] sm:$0xf]
    %v5938 = vld [vmem:[%s16 + $0x4] sm:$0xf]
    %v5939 = vld [vmem:[%s16 + $0x8] sm:$0xf]
    %v5940 = vld [vmem:[%s16 + $0xc] sm:$0xf]
    %v5941 = vld [vmem:[%s17] sm:$0x1]
    %v5943 = vlaneseq
    %v5944 = vshrl.u32 %v5943, 7
    %v5945 = vsub.s32 0, %v5944
    %v5946 = vrot.slane %v5941, %v5945
    %v5952 = vunpack.c.l.b16 %v5937
    %v5953 = vunpack.c.l.b16 %v5938
    %v5954 = vunpack.c.l.b16 %v5939
    %v5955 = vunpack.c.l.b16 %v5940
    %v5956 = vpack.c.b16 %v5953, %v5952
    %v5957 = vpack.c.b16 %v5955, %v5954
    %v5961 = vsel %vm308, %v5935, 0
    %v5964 = vsel %vm308, %v5936, 0
    %5966 = vmatprep.subr.bf16.mxu0 0
    %5967 = vmatpush1.bf16.msra.mxu0 %v5956
    %5968 = vmatprep.subr.bf16.mxu0 0
    %5969 = vmatpush1.bf16.msra.mxu0 %v5957
    %5970 = vmatprep.subr.bf16.mxu0 0
    %5971 = vmatpush1.bf16.msra.mxu0 0
    %5972 = vmatprep.subr.bf16.mxu0 0
    %5973 = vmatpush1.bf16.msra.mxu0 0
    %5974 = vmatprep.subr.bf16.mxu0 0
    %5975 = vmatpush1.bf16.msra.mxu0 0
    %5976 = vmatprep.subr.bf16.mxu0 0
    %5977 = vmatpush1.bf16.msra.mxu0 0
    %5978 = vmatprep.subr.bf16.mxu0 0
    %5979 = vmatpush1.bf16.msra.mxu0 0
    %5980 = vmatprep.subr.bf16.mxu0 0
    %5981 = vmatpush1.bf16.msra.mxu0 0
    %5982 = vmatprep.subr.bf16.mxu0 0
    %5983 = vmatpush1.bf16.msra.mxu0 0
    %5984 = vmatprep.subr.bf16.mxu0 0
    %5985 = vmatpush1.bf16.msra.mxu0 0
    %5986 = vmatprep.subr.bf16.mxu0 0
    %5987 = vmatpush1.bf16.msra.mxu0 0
    %5988 = vmatprep.subr.bf16.mxu0 0
    %5989 = vmatpush1.bf16.msra.mxu0 0
    %5990 = vmatprep.subr.bf16.mxu0 0
    %5991 = vmatpush1.bf16.msra.mxu0 0
    %5992 = vmatprep.subr.bf16.mxu0 0
    %5993 = vmatpush1.bf16.msra.mxu0 0
    %5994 = vmatprep.subr.bf16.mxu0 0
    %5995 = vmatpush1.bf16.msra.mxu0 0
    %5996 = vmatprep.subr.bf16.mxu0 0
    %5997 = vmatpush1.bf16.msra.mxu0 0
    %5998 = vmatprep.mubr.bf16.mxu0 0
    %5999 = vmatmul.mubr.bf16.gmra.mrb[0].mxu0 %v5961
    %v6000 = vpop.f32.mrb[0].mxu0
    %v6001 = vadd.f32 %v5946, %v6000
    %v6002 = vpop.f32.mrb[0].mxu0
    %v6003 = vpop.f32.mrb[0].mxu0
    %v6004 = vadd.f32 %v5946, %v6003
    %v6005 = vpop.f32.mrb[0].mxu0
    %6006 = vmatprep.mubr.bf16.mxu0 0
    %6007 = vmatmul.mubr.bf16.gmra.mrb[0].mxu0 %v5964
    %v6008 = vpop.f32.mrb[0].mxu0
    %v6009 = vadd.f32 %v5946, %v6008
    %v6010 = vpop.f32.mrb[0].mxu0
    %v6011 = vpop.f32.mrb[0].mxu0
    %v6012 = vadd.f32 %v5946, %v6011
    %v6013 = vpop.f32.mrb[0].mxu0
    %6014 = vdwg.mxu0
    %6015 = vst.msk [vmem:[#allocation20] sm:$0xff] %vm308, %v6001
    %6016 = vst.msk [vmem:[#allocation20 + $0x8] sm:$0xff] %vm308, %v6004
    %6017 = vst.msk [vmem:[#allocation20 + $0x10] sm:$0xff] %vm308, %v6009
    %6018 = vst.msk [vmem:[#allocation20 + $0x18] sm:$0xff] %vm308, %v6012
    // Predicated region
    $region118: #{tpu_custom_call.1} parent=1 // pred_check
      _
    $region119: #{tpu_custom_call.1} parent=1 // pred_check_branch
      %6020 = sbr.rel (0) target = $region121
    $region120: #{tpu_custom_call.1} parent=1 // pred_region
      %s6022 = ssub.s32 512, 512
      %6023 = vsyncadd [#allocation4], %s6022
      %s6024 = sshll.u32 [#allocation20], 4
      %s6025 = int_to_ptr.vmem [resolvable:$true] %s6024
      %6030 = dma.vmem_to_hbm [thread:$0]  %s6025, 512, %s18, [#allocation4], 128, 128, 8
    $region121: #{tpu_custom_call.1} parent=1 // pred_fallthru
      _
    // Predicated region
    $region122: #{tpu_custom_call.1} parent=1 // pred_check
      _
    $region123: #{tpu_custom_call.1} parent=1 // pred_check_branch
      %6032 = sbr.rel (0) target = $region125
    $region124: #{tpu_custom_call.1} parent=1 // pred_region
      %6033 = dma.done [#allocation4], 512
    $region125: #{tpu_custom_call.1} parent=1 // pred_fallthru
      _
    %6034 = vsyncpa [#allocation3], 1
    %6035 = vsyncpa [#allocation6], 1
    %6036 = vsyncpa [#allocation9], 1
    %6037 = vsyncpa [#allocation12], 1
    %6038 = vsyncpa [#allocation15], 1
    %6039 = vsyncpa [#allocation18], 1
    %6040 = vsyncpa [#allocation4], 1

</llo_original>
